<compile_context>
chip_gen: v7x
topology: tpu7x:2x2x1
jax: 0.10.0
libtpu: 0.0.40
codegen_flags: <defaults>
</compile_context>

<pallas_src>
import functools

import jax
import jax.numpy as jnp
from jax import lax
from jax.experimental import pallas as pl
from jax.experimental.pallas import tpu as pltpu


def _mlp_block_kernel(x_ref, wf_ref, scale_ref, bias_ref, w2_ref, out_ref,
                      xpad_ref, lhs_ref, *, H, W, C, Cc):
    """One batch element per grid step.

    Blocks:
      x_ref   : (1, H, W, C)         f32   NHWC input (also the residual)
      wf_ref  : (9*Cc + C-Cc, Hid)   bf16  fused (3x3 partial conv o 1x1 conv) weight
      scale_ref, bias_ref : (1, Hid) f32   folded BatchNorm
      w2_ref  : (Hid, C)             bf16  second 1x1 conv
      out_ref : (1, H, W, C)         f32
    Scratch:
      xpad_ref: (H+2, W+2, Cc)       bf16  zero-padded conv input
      lhs_ref : (H, W, 9*Cc + C-Cc)  bf16  im2col buffer
    """
    x = x_ref[0]                                            # (H, W, C) f32

    # ---- zero-padded first Cc channels (scratch, not concat) -------------------
    # Re-zero every step (tiny buffer) so correctness holds when the batch axis is
    # split across TensorCores ("parallel" semantics -> per-core scratch instance).
    xpad_ref[...] = jnp.zeros_like(xpad_ref)
    xpad_ref[pl.ds(1, H), pl.ds(1, W), :] = x[:, :, :Cc].astype(xpad_ref.dtype)

    # ---- im2col: 9 shifted taps + untouched channels ----------------------------
    for t in range(9):                                      # static 3x3 unroll
        dy, dx = divmod(t, 3)
        lhs_ref[:, :, pl.ds(t * Cc, Cc)] = xpad_ref[pl.ds(dy, H), pl.ds(dx, W), :]
    lhs_ref[:, :, pl.ds(9 * Cc, C - Cc)] = x[:, :, Cc:].astype(lhs_ref.dtype)

    lhs = lhs_ref[...].reshape(H * W, 9 * Cc + (C - Cc))    # (H*W, Ktot) bf16

    # ---- fused (partial conv + 1x1 conv) -> BN -> ReLU -> 1x1 conv --------------
    h = jnp.dot(lhs, wf_ref[...], preferred_element_type=jnp.float32)   # (H*W, Hid)
    h = jnp.maximum(h * scale_ref[...] + bias_ref[...], 0.0)
    y = jnp.dot(h.astype(w2_ref.dtype), w2_ref[...],
                preferred_element_type=jnp.float32)                     # (H*W, C)

    out = x.reshape(H * W, C) + y                           # residual add (f32)
    out_ref[0] = out.reshape(H, W, C).astype(out_ref.dtype)


def mlp_block_pallas(x_nchw, w3_oihw, w1_oi, bn_gamma, bn_beta, bn_mean, bn_var,
                     w2_oi, eps=1e-5):
    """Pallas implementation. Takes / returns NCHW to match PyTorch."""
    N, C, H, W = x_nchw.shape
    Cc = w3_oihw.shape[0]
    Hid = w1_oi.shape[0]
    Ktot = 9 * Cc + (C - Cc)

    # ---- layout conversion + weight folding (plain JAX glue, done once) ---------
    x = jnp.transpose(x_nchw, (0, 2, 3, 1))                  # NCHW -> NHWC
    w3 = jnp.transpose(w3_oihw, (2, 3, 1, 0))                # OIHW -> HWIO (3,3,Cc,Cc)
    w1_t = jnp.transpose(w1_oi, (1, 0))                      # (C, Hid)
    w2_t = jnp.transpose(w2_oi, (1, 0))                      # (Hid, C)

    # Fold the 3x3 partial conv into the first 1x1 conv (exact in f32):
    #   fused[dy,dx] = w3[dy,dx] @ w1[:Cc]  ;  tail rows = w1[Cc:]
    w3w1 = jnp.einsum('hwic,co->hwio', w3, w1_t[:Cc, :])     # (3, 3, Cc, Hid)
    w_fused = jnp.concatenate(
        [w3w1.reshape(9 * Cc, Hid), w1_t[Cc:, :]], axis=0)   # (Ktot, Hid)
    w_fused = w_fused.astype(jnp.bfloat16)
    w2_t = w2_t.astype(jnp.bfloat16)

    # Fold BatchNorm (eval) into scale / bias.
    inv_std = 1.0 / jnp.sqrt(bn_var + eps)
    scale = (bn_gamma * inv_std).reshape(1, Hid).astype(jnp.float32)
    bias = (bn_beta - bn_mean * bn_gamma * inv_std).reshape(1, Hid).astype(jnp.float32)

    kernel = functools.partial(_mlp_block_kernel, H=H, W=W, C=C, Cc=Cc)

    out = pl.pallas_call(
        kernel,
        out_shape=jax.ShapeDtypeStruct((N, H, W, C), x.dtype),
        grid_spec=pltpu.PrefetchScalarGridSpec(
            num_scalar_prefetch=0,
            grid=(N,),
            in_specs=[
                pl.BlockSpec((1, H, W, C), lambda n: (n, 0, 0, 0)),
                pl.BlockSpec((Ktot, Hid), lambda n: (0, 0)),
                pl.BlockSpec((1, Hid), lambda n: (0, 0)),
                pl.BlockSpec((1, Hid), lambda n: (0, 0)),
                pl.BlockSpec((Hid, C), lambda n: (0, 0)),
            ],
            out_specs=pl.BlockSpec((1, H, W, C), lambda n: (n, 0, 0, 0)),
            scratch_shapes=[
                pltpu.VMEM((H + 2, W + 2, Cc), jnp.bfloat16),   # padded conv input
                pltpu.VMEM((H, W, Ktot), jnp.bfloat16),         # im2col buffer
            ],
        ),
        compiler_params=pltpu.CompilerParams(
            dimension_semantics=("parallel",)),
    )(x, w_fused, scale, bias, w2_t)

    return jnp.transpose(out, (0, 3, 1, 2))                  # NHWC -> NCHW


def mlp_block_ref(x_nchw, w3_oihw, w1_oi, bn_gamma, bn_beta, bn_mean, bn_var,
                  w2_oi, eps=1e-5):
    """Pure-JAX f32 reference matching the PyTorch forward."""
    Cc = w3_oihw.shape[0]
    x1 = x_nchw[:, :Cc]
    y1 = lax.conv_general_dilated(
        x1, w3_oihw, window_strides=(1, 1), padding=((1, 1), (1, 1)),
        dimension_numbers=('NCHW', 'OIHW', 'NCHW'))
    mixed = jnp.concatenate([y1, x_nchw[:, Cc:]], axis=1)
    h = jnp.einsum('nchw,oc->nohw', mixed, w1_oi)
    inv_std = 1.0 / jnp.sqrt(bn_var + eps)
    scale = bn_gamma * inv_std
    bias = bn_beta - bn_mean * scale
    h = h * scale[None, :, None, None] + bias[None, :, None, None]
    h = jnp.maximum(h, 0.0)
    y = jnp.einsum('nohw,co->nchw', h, w2_oi)
    return x_nchw + y


if __name__ == "__main__":
    # Small shapes consistent with the module: dim=32, n_div=4, mlp_ratio=2.0
    N, dim, H, W = 2, 32, 16, 16
    n_div = 4
    mlp_ratio = 2.0
    Cc = dim // n_div                    # 8
    Hid = int(dim * mlp_ratio)           # 64

    key = jax.random.PRNGKey(0)
    k = jax.random.split(key, 8)
    x = jax.random.normal(k[0], (N, dim, H, W), dtype=jnp.float32)
    w3 = jax.random.normal(k[1], (Cc, Cc, 3, 3), dtype=jnp.float32) * 0.1   # OIHW
    w1 = jax.random.normal(k[2], (Hid, dim), dtype=jnp.float32) * 0.1       # (out, in)
    w2 = jax.random.normal(k[3], (dim, Hid), dtype=jnp.float32) * 0.1       # (out, in)
    bn_gamma = 1.0 + 0.1 * jax.random.normal(k[4], (Hid,), dtype=jnp.float32)
    bn_beta = 0.1 * jax.random.normal(k[5], (Hid,), dtype=jnp.float32)
    bn_mean = 0.1 * jax.random.normal(k[6], (Hid,), dtype=jnp.float32)
    bn_var = jax.random.uniform(k[7], (Hid,), dtype=jnp.float32,
                                minval=0.5, maxval=1.5)

    out = mlp_block_pallas(x, w3, w1, bn_gamma, bn_beta, bn_mean, bn_var, w2)
    out = jax.block_until_ready(out)

    ref = mlp_block_ref(x, w3, w1, bn_gamma, bn_beta, bn_mean, bn_var, w2)
    ref = jax.block_until_ready(ref)

    assert out.shape == (N, dim, H, W)
    # bf16 matmul operands (f32 accumulation) -> relaxed tolerance vs f32 reference.
    max_err = jnp.max(jnp.abs(out - ref))
    assert jnp.allclose(out, ref, rtol=5e-2, atol=5e-2), f"max abs err {max_err}"
    print("KERNEL_OK")
</pallas_src>

<mosaic_0001>
module attributes {stable_mosaic.version = 11 : i64} {
  func.func @_mlp_block_kernel(%arg0: i32, %arg1: memref<1x16x16x32xf32, #tpu.memory_space<vmem>>, %arg2: memref<96x64xbf16, #tpu.memory_space<vmem>>, %arg3: memref<1x64xf32, #tpu.memory_space<vmem>>, %arg4: memref<1x64xf32, #tpu.memory_space<vmem>>, %arg5: memref<64x32xbf16, #tpu.memory_space<vmem>>, %arg6: memref<1x16x16x32xf32, #tpu.memory_space<vmem>>, %arg7: memref<18x18x8xbf16, #tpu.memory_space<vmem>>, %arg8: memref<16x16x96xbf16, #tpu.memory_space<vmem>>) attributes {dimension_semantics = [#tpu.dimension_semantics<parallel>], iteration_bounds = array<i64: 2>, scalar_prefetch = 0 : i64, scratch_operands = 2 : i64, tpu.core_type = #tpu.core_type<tc>, window_params = [{transform_indices = @transform_0, window_bounds = array<i64: 1, 16, 16, 32>}, {pipeline_mode = #tpu.pipeline_mode<synchronous>, transform_indices = @transform_1, window_bounds = array<i64: 96, 64>}, {pipeline_mode = #tpu.pipeline_mode<synchronous>, transform_indices = @transform_2, window_bounds = array<i64: 1, 64>}, {pipeline_mode = #tpu.pipeline_mode<synchronous>, transform_indices = @transform_3, window_bounds = array<i64: 1, 64>}, {pipeline_mode = #tpu.pipeline_mode<synchronous>, transform_indices = @transform_4, window_bounds = array<i64: 64, 32>}, {transform_indices = @transform_5, window_bounds = array<i64: 1, 16, 16, 32>}]} {
    %c0 = arith.constant 0 : index
    %c0_0 = arith.constant 0 : index
    %c0_1 = arith.constant 0 : index
    %c0_2 = arith.constant 0 : index
    %0 = vector.load %arg1[%c0, %c0_0, %c0_1, %c0_2] : memref<1x16x16x32xf32, #tpu.memory_space<vmem>>, vector<1x16x16x32xf32>
    %1 = vector.shape_cast %0 : vector<1x16x16x32xf32> to vector<16x16x32xf32>
    %cst = arith.constant 0.000000e+00 : bf16
    %2 = vector.broadcast %cst : bf16 to vector<18x18x8xbf16>
    %c0_3 = arith.constant 0 : index
    %c0_4 = arith.constant 0 : index
    %c0_5 = arith.constant 0 : index
    %3 = vector.load %arg7[%c0_3, %c0_4, %c0_5] : memref<18x18x8xbf16, #tpu.memory_space<vmem>>, vector<18x18x8xbf16>
    tpu.vector_store %arg7[%c0_3, %c0_4, %c0_5], %2 {strides = array<i32>} : memref<18x18x8xbf16, #tpu.memory_space<vmem>>, vector<18x18x8xbf16>,
    %4 = vector.extract_strided_slice %1 {offsets = [0, 0, 0], sizes = [16, 16, 8], strides = [1, 1, 1]} : vector<16x16x32xf32> to vector<16x16x8xf32>
    %5 = arith.truncf %4 : vector<16x16x8xf32> to vector<16x16x8xbf16>
    %c1 = arith.constant 1 : index
    %c1_6 = arith.constant 1 : index
    %c0_7 = arith.constant 0 : index
    %6 = vector.load %arg7[%c1, %c1_6, %c0_7] : memref<18x18x8xbf16, #tpu.memory_space<vmem>>, vector<16x16x8xbf16>
    tpu.vector_store %arg7[%c1, %c1_6, %c0_7], %5 {strides = array<i32>} : memref<18x18x8xbf16, #tpu.memory_space<vmem>>, vector<16x16x8xbf16>,
    %c0_8 = arith.constant 0 : index
    %c0_9 = arith.constant 0 : index
    %c0_10 = arith.constant 0 : index
    %7 = vector.load %arg7[%c0_8, %c0_9, %c0_10] : memref<18x18x8xbf16, #tpu.memory_space<vmem>>, vector<16x16x8xbf16>
    %c0_11 = arith.constant 0 : index
    %c0_12 = arith.constant 0 : index
    %c0_13 = arith.constant 0 : index
    %8 = vector.load %arg8[%c0_11, %c0_12, %c0_13] : memref<16x16x96xbf16, #tpu.memory_space<vmem>>, vector<16x16x8xbf16>
    tpu.vector_store %arg8[%c0_11, %c0_12, %c0_13], %7 {strides = array<i32>} : memref<16x16x96xbf16, #tpu.memory_space<vmem>>, vector<16x16x8xbf16>,
    %c0_14 = arith.constant 0 : index
    %c1_15 = arith.constant 1 : index
    %c0_16 = arith.constant 0 : index
    %9 = vector.load %arg7[%c0_14, %c1_15, %c0_16] : memref<18x18x8xbf16, #tpu.memory_space<vmem>>, vector<16x16x8xbf16>
    %c0_17 = arith.constant 0 : index
    %c0_18 = arith.constant 0 : index
    %c8 = arith.constant 8 : index
    %10 = vector.load %arg8[%c0_17, %c0_18, %c8] : memref<16x16x96xbf16, #tpu.memory_space<vmem>>, vector<16x16x8xbf16>
    tpu.vector_store %arg8[%c0_17, %c0_18, %c8], %9 {strides = array<i32>} : memref<16x16x96xbf16, #tpu.memory_space<vmem>>, vector<16x16x8xbf16>,
    %c0_19 = arith.constant 0 : index
    %c2 = arith.constant 2 : index
    %c0_20 = arith.constant 0 : index
    %11 = vector.load %arg7[%c0_19, %c2, %c0_20] : memref<18x18x8xbf16, #tpu.memory_space<vmem>>, vector<16x16x8xbf16>
    %c0_21 = arith.constant 0 : index
    %c0_22 = arith.constant 0 : index
    %c16 = arith.constant 16 : index
    %12 = vector.load %arg8[%c0_21, %c0_22, %c16] : memref<16x16x96xbf16, #tpu.memory_space<vmem>>, vector<16x16x8xbf16>
    tpu.vector_store %arg8[%c0_21, %c0_22, %c16], %11 {strides = array<i32>} : memref<16x16x96xbf16, #tpu.memory_space<vmem>>, vector<16x16x8xbf16>,
    %c1_23 = arith.constant 1 : index
    %c0_24 = arith.constant 0 : index
    %c0_25 = arith.constant 0 : index
    %13 = vector.load %arg7[%c1_23, %c0_24, %c0_25] : memref<18x18x8xbf16, #tpu.memory_space<vmem>>, vector<16x16x8xbf16>
    %c0_26 = arith.constant 0 : index
    %c0_27 = arith.constant 0 : index
    %c24 = arith.constant 24 : index
    %14 = vector.load %arg8[%c0_26, %c0_27, %c24] : memref<16x16x96xbf16, #tpu.memory_space<vmem>>, vector<16x16x8xbf16>
    tpu.vector_store %arg8[%c0_26, %c0_27, %c24], %13 {strides = array<i32>} : memref<16x16x96xbf16, #tpu.memory_space<vmem>>, vector<16x16x8xbf16>,
    %c1_28 = arith.constant 1 : index
    %c1_29 = arith.constant 1 : index
    %c0_30 = arith.constant 0 : index
    %15 = vector.load %arg7[%c1_28, %c1_29, %c0_30] : memref<18x18x8xbf16, #tpu.memory_space<vmem>>, vector<16x16x8xbf16>
    %c0_31 = arith.constant 0 : index
    %c0_32 = arith.constant 0 : index
    %c32 = arith.constant 32 : index
    %16 = vector.load %arg8[%c0_31, %c0_32, %c32] : memref<16x16x96xbf16, #tpu.memory_space<vmem>>, vector<16x16x8xbf16>
    tpu.vector_store %arg8[%c0_31, %c0_32, %c32], %15 {strides = array<i32>} : memref<16x16x96xbf16, #tpu.memory_space<vmem>>, vector<16x16x8xbf16>,
    %c1_33 = arith.constant 1 : index
    %c2_34 = arith.constant 2 : index
    %c0_35 = arith.constant 0 : index
    %17 = vector.load %arg7[%c1_33, %c2_34, %c0_35] : memref<18x18x8xbf16, #tpu.memory_space<vmem>>, vector<16x16x8xbf16>
    %c0_36 = arith.constant 0 : index
    %c0_37 = arith.constant 0 : index
    %c40 = arith.constant 40 : index
    %18 = vector.load %arg8[%c0_36, %c0_37, %c40] : memref<16x16x96xbf16, #tpu.memory_space<vmem>>, vector<16x16x8xbf16>
    tpu.vector_store %arg8[%c0_36, %c0_37, %c40], %17 {strides = array<i32>} : memref<16x16x96xbf16, #tpu.memory_space<vmem>>, vector<16x16x8xbf16>,
    %c2_38 = arith.constant 2 : index
    %c0_39 = arith.constant 0 : index
    %c0_40 = arith.constant 0 : index
    %19 = vector.load %arg7[%c2_38, %c0_39, %c0_40] : memref<18x18x8xbf16, #tpu.memory_space<vmem>>, vector<16x16x8xbf16>
    %c0_41 = arith.constant 0 : index
    %c0_42 = arith.constant 0 : index
    %c48 = arith.constant 48 : index
    %20 = vector.load %arg8[%c0_41, %c0_42, %c48] : memref<16x16x96xbf16, #tpu.memory_space<vmem>>, vector<16x16x8xbf16>
    tpu.vector_store %arg8[%c0_41, %c0_42, %c48], %19 {strides = array<i32>} : memref<16x16x96xbf16, #tpu.memory_space<vmem>>, vector<16x16x8xbf16>,
    %c2_43 = arith.constant 2 : index
    %c1_44 = arith.constant 1 : index
    %c0_45 = arith.constant 0 : index
    %21 = vector.load %arg7[%c2_43, %c1_44, %c0_45] : memref<18x18x8xbf16, #tpu.memory_space<vmem>>, vector<16x16x8xbf16>
    %c0_46 = arith.constant 0 : index
    %c0_47 = arith.constant 0 : index
    %c56 = arith.constant 56 : index
    %22 = vector.load %arg8[%c0_46, %c0_47, %c56] : memref<16x16x96xbf16, #tpu.memory_space<vmem>>, vector<16x16x8xbf16>
    tpu.vector_store %arg8[%c0_46, %c0_47, %c56], %21 {strides = array<i32>} : memref<16x16x96xbf16, #tpu.memory_space<vmem>>, vector<16x16x8xbf16>,
    %c2_48 = arith.constant 2 : index
    %c2_49 = arith.constant 2 : index
    %c0_50 = arith.constant 0 : index
    %23 = vector.load %arg7[%c2_48, %c2_49, %c0_50] : memref<18x18x8xbf16, #tpu.memory_space<vmem>>, vector<16x16x8xbf16>
    %c0_51 = arith.constant 0 : index
    %c0_52 = arith.constant 0 : index
    %c64 = arith.constant 64 : index
    %24 = vector.load %arg8[%c0_51, %c0_52, %c64] : memref<16x16x96xbf16, #tpu.memory_space<vmem>>, vector<16x16x8xbf16>
    tpu.vector_store %arg8[%c0_51, %c0_52, %c64], %23 {strides = array<i32>} : memref<16x16x96xbf16, #tpu.memory_space<vmem>>, vector<16x16x8xbf16>,
    %25 = vector.extract_strided_slice %1 {offsets = [0, 0, 8], sizes = [16, 16, 24], strides = [1, 1, 1]} : vector<16x16x32xf32> to vector<16x16x24xf32>
    %26 = arith.truncf %25 : vector<16x16x24xf32> to vector<16x16x24xbf16>
    %c0_53 = arith.constant 0 : index
    %c0_54 = arith.constant 0 : index
    %c72 = arith.constant 72 : index
    %27 = vector.load %arg8[%c0_53, %c0_54, %c72] : memref<16x16x96xbf16, #tpu.memory_space<vmem>>, vector<16x16x24xbf16>
    tpu.vector_store %arg8[%c0_53, %c0_54, %c72], %26 {strides = array<i32>} : memref<16x16x96xbf16, #tpu.memory_space<vmem>>, vector<16x16x24xbf16>,
    %c0_55 = arith.constant 0 : index
    %c0_56 = arith.constant 0 : index
    %c0_57 = arith.constant 0 : index
    %28 = vector.load %arg8[%c0_55, %c0_56, %c0_57] : memref<16x16x96xbf16, #tpu.memory_space<vmem>>, vector<16x16x96xbf16>
    %29 = vector.shape_cast %28 : vector<16x16x96xbf16> to vector<256x96xbf16>
    %c0_58 = arith.constant 0 : index
    %c0_59 = arith.constant 0 : index
    %30 = vector.load %arg2[%c0_58, %c0_59] : memref<96x64xbf16, #tpu.memory_space<vmem>>, vector<96x64xbf16>
    %cst_60 = arith.constant dense<0.000000e+00> : vector<256x64xf32>
    %31 = tpu.matmul %29, %30, %cst_60 {dimension_numbers = #tpu.dot_dimension_numbers<[1], [0], [0], [1], [0, 0, 1, 1], [], []>} : vector<256x96xbf16>, vector<96x64xbf16>, vector<256x64xf32> -> vector<256x64xf32>
    %c0_61 = arith.constant 0 : index
    %c0_62 = arith.constant 0 : index
    %32 = vector.load %arg3[%c0_61, %c0_62] : memref<1x64xf32, #tpu.memory_space<vmem>>, vector<1x64xf32>
    %33 = vector.broadcast %32 : vector<1x64xf32> to vector<256x64xf32>
    %34 = arith.mulf %31, %33 : vector<256x64xf32>
    %c0_63 = arith.constant 0 : index
    %c0_64 = arith.constant 0 : index
    %35 = vector.load %arg4[%c0_63, %c0_64] : memref<1x64xf32, #tpu.memory_space<vmem>>, vector<1x64xf32>
    %36 = vector.broadcast %35 : vector<1x64xf32> to vector<256x64xf32>
    %37 = arith.addf %34, %36 : vector<256x64xf32>
    %cst_65 = arith.constant 0.000000e+00 : f32
    %38 = vector.broadcast %cst_65 : f32 to vector<256x64xf32>
    %39 = arith.maximumf %37, %38 : vector<256x64xf32>
    %40 = arith.truncf %39 : vector<256x64xf32> to vector<256x64xbf16>
    %c0_66 = arith.constant 0 : index
    %c0_67 = arith.constant 0 : index
    %41 = vector.load %arg5[%c0_66, %c0_67] : memref<64x32xbf16, #tpu.memory_space<vmem>>, vector<64x32xbf16>
    %cst_68 = arith.constant dense<0.000000e+00> : vector<256x32xf32>
    %42 = tpu.matmul %40, %41, %cst_68 {dimension_numbers = #tpu.dot_dimension_numbers<[1], [0], [0], [1], [0, 0, 1, 1], [], []>} : vector<256x64xbf16>, vector<64x32xbf16>, vector<256x32xf32> -> vector<256x32xf32>
    %43 = vector.shape_cast %1 : vector<16x16x32xf32> to vector<256x32xf32>
    %44 = arith.addf %43, %42 : vector<256x32xf32>
    %45 = vector.shape_cast %44 : vector<256x32xf32> to vector<16x16x32xf32>
    %c0_69 = arith.constant 0 : index
    %c0_70 = arith.constant 0 : index
    %c0_71 = arith.constant 0 : index
    %c0_72 = arith.constant 0 : index
    %46 = vector.load %arg6[%c0_69, %c0_70, %c0_71, %c0_72] : memref<1x16x16x32xf32, #tpu.memory_space<vmem>>, vector<1x16x16x32xf32>
    %47 = vector.shape_cast %46 : vector<1x16x16x32xf32> to vector<16x16x32xf32>
    %48 = vector.shape_cast %45 : vector<16x16x32xf32> to vector<1x16x16x32xf32>
    tpu.vector_store %arg6[%c0_69, %c0_70, %c0_71, %c0_72], %48 {strides = array<i32>} : memref<1x16x16x32xf32, #tpu.memory_space<vmem>>, vector<1x16x16x32xf32>,
    return
  }
  func.func @transform_0(%arg0: i32) -> (i32, i32, i32, i32) {
    %c0_i32 = arith.constant 0 : i32
    %c0_i32_0 = arith.constant 0 : i32
    %c0_i32_1 = arith.constant 0 : i32
    %c0_i32_2 = arith.constant 0 : i32
    return %arg0, %c0_i32, %c0_i32_0, %c0_i32_1 : i32, i32, i32, i32
  }
  func.func @transform_1(%arg0: i32) -> (i32, i32) {
    %c0_i32 = arith.constant 0 : i32
    %c0_i32_0 = arith.constant 0 : i32
    %c0_i32_1 = arith.constant 0 : i32
    return %c0_i32, %c0_i32_0 : i32, i32
  }
  func.func @transform_2(%arg0: i32) -> (i32, i32) {
    %c0_i32 = arith.constant 0 : i32
    %c0_i32_0 = arith.constant 0 : i32
    %c0_i32_1 = arith.constant 0 : i32
    return %c0_i32, %c0_i32_0 : i32, i32
  }
  func.func @transform_3(%arg0: i32) -> (i32, i32) {
    %c0_i32 = arith.constant 0 : i32
    %c0_i32_0 = arith.constant 0 : i32
    %c0_i32_1 = arith.constant 0 : i32
    return %c0_i32, %c0_i32_0 : i32, i32
  }
  func.func @transform_4(%arg0: i32) -> (i32, i32) {
    %c0_i32 = arith.constant 0 : i32
    %c0_i32_0 = arith.constant 0 : i32
    %c0_i32_1 = arith.constant 0 : i32
    return %c0_i32, %c0_i32_0 : i32, i32
  }
  func.func @transform_5(%arg0: i32) -> (i32, i32, i32, i32) {
    %c0_i32 = arith.constant 0 : i32
    %c0_i32_0 = arith.constant 0 : i32
    %c0_i32_1 = arith.constant 0 : i32
    %c0_i32_2 = arith.constant 0 : i32
    return %arg0, %c0_i32, %c0_i32_0, %c0_i32_1 : i32, i32, i32, i32
  }
}

</mosaic_0001>

<llo_original>
// kernel: tpu_custom_call.1
$region0: #{tpu_custom_call.1}
  #allocation0 [shape = 'u32[]', space=smem, size = 0x4, offset = 0x4, fixed_abs, tag = 'smem constant byte address 0x4 - core index']
  #allocation1 [shape = 'u32[144,128]{1,0:T(1,128)}', space=vmem, size = 0x12000, scoped, tag = 'internal scratch']
  #allocation2 [shape = 'bf16[18,18,8]{2,1,0:T(8,128)(2,1)}', space=vmem, size = 0x1b000, scoped, tag = 'scratch operand']
  #allocation3 [shape = 'bf16[16,16,96]{2,1,0:T(16,128)(2,1)}', space=vmem, size = 0x10000, scoped, tag = 'scratch operand']
  %s0 = inlined_call_operand.hbm [shape: f32[2,16,16,32], index: 0, kind: input, shape index: {}]
  %s1 = inlined_call_operand.vmem [shape: bf16[96,64], index: 1, kind: input, shape index: {}]
  %s2 = inlined_call_operand.vmem [shape: f32[1,64], index: 2, kind: input, shape index: {}]
  %s3 = inlined_call_operand.vmem [shape: f32[1,64], index: 3, kind: input, shape index: {}]
  %s4 = inlined_call_operand.vmem [shape: bf16[64,32], index: 4, kind: input, shape index: {}]
  %s5 = inlined_call_operand.hbm [shape: f32[2,16,16,32], index: 5, kind: output, shape index: {}]
  %s6 = sld [smem:[#allocation0]]
  $region57: #{tpu_custom_call.1} parent=0
    _
  %s8 = ssub.s32 1, %s6
  %s9 = scalar_select 0, %s8, %s6
  $region1: #{tpu_custom_call.1} parent=0
    #allocation4 [shape = 'u8[262144]{0}', space=vmem, size = 0x40000, scoped, tag = 'input window, operand 0']
    #allocation5 [shape = 's32[2]{0}', space=sflag, size = 0x8, scoped, tag = 'scoped memory for tpu_custom_call.1']
    #allocation6 [shape = 's32[2]{0}', space=sflag, size = 0x8, scoped, tag = 'scoped memory for tpu_custom_call.1']
    #allocation7 [shape = 'u8[262144]{0}', space=vmem, size = 0x40000, scoped, tag = 'output window, operand 0']
    %10 = vsyncpa [#allocation5], 0
    %s11 = scalar_lea.sflag [#allocation5], 1
    %12 = vsyncpa %s11, 0
    %13 = vsyncpa [#allocation6], 0
    %s14 = scalar_lea.sflag [#allocation6], 1
    %15 = vsyncpa %s14, 0
    loop: start=0, step=1, limit=4
    $region2: #{tpu_custom_call.1} parent=1 // loop_pre_header
      _
    $region3: #{tpu_custom_call.1} parent=1 // loop_header
      %s17 = sphi 0, %s21
      %p18 = scmp.ge.s32.totalorder %s17, 4
      %s27 = sphi 0, %s29
      %s30 = sphi 0, %s27
      %s31 = sphi 0, %s30
      %s47 = sphi 0, %s31
      %s51 = sphi 0, %s51
      %s53 = sphi 0, %s51
      %s54 = sphi 0, %s53
      %s68 = sphi 0, %s54
      %s72 = sphi 0, %s72
      %s74 = sphi 0, %s72
      %s75 = sphi 0, %s74
      %s89 = sphi 0, %s75
      %s93 = sphi 0, %s93
      %s95 = sphi 0, %s93
      %s96 = sphi 0, %s95
      %s110 = sphi 0, %s96
      %s114 = sphi 0, %s114
      %s116 = sphi 0, %s114
      %s117 = sphi 0, %s116
      %s131 = sphi 0, %s117
      %s137 = sphi 0, %s139
      %s140 = sphi 0, %s137
      %s141 = sphi 0, %s140
      %s157 = sphi 0, %s141
    $region4: #{tpu_custom_call.1} parent=1 // loop_header_branch
      %20 = sbr.rel (%p18) target = $region8
    $region5: #{tpu_custom_call.1} parent=1 // loop_body
      %s22 = ssub.s32 %s17, 1
      %s23 = ssub.s32 %s17, 2
      %s24 = sadd.s32 %s17, 1
      %s25 = ssub.s32 %s17, %s24
      %p26 = scmp.eq.s32.totalorder %s25, 0
      %s28 = sadd.s32 %s27, 1
      %s29 = scalar_select %p26, %s27, %s28
      %p32 = pneg %p26
      %p33 = scmp.eq.s32.totalorder %s17, 1
      %p34 = por %p32, %p33
      %p35 = scmp.ne.s32.totalorder %s27, %s30
      %p36 = scmp.eq.s32.totalorder %s17, 0
      %p37 = por %p35, %p36
      %p38 = scmp.ne.s32.totalorder %s27, %s30
      %p39 = scmp.eq.s32.totalorder %s22, 1
      %p40 = por %p38, %p39
      %p41 = scmp.ne.s32.totalorder %s30, %s31
      %p42 = scmp.eq.s32.totalorder %s22, 0
      %p43 = por %p41, %p42
      %p44 = scmp.ne.s32.totalorder %s30, %s31
      %p45 = scmp.eq.s32.totalorder %s23, 1
      %p46 = por %p44, %p45
      %p48 = scmp.ne.s32.totalorder %s31, %s47
      %p49 = scmp.eq.s32.totalorder %s23, 0
      %p50 = por %p48, %p49
      %s52 = sadd.s32 %s51, 1
      %p55 = scmp.eq.s32.totalorder %s17, 1
      %p56 = scmp.ne.s32.totalorder %s51, %s53
      %p57 = scmp.eq.s32.totalorder %s17, 0
      %p58 = por %p56, %p57
      %p59 = scmp.ne.s32.totalorder %s51, %s53
      %p60 = scmp.eq.s32.totalorder %s22, 1
      %p61 = por %p59, %p60
      %p62 = scmp.ne.s32.totalorder %s53, %s54
      %p63 = scmp.eq.s32.totalorder %s22, 0
      %p64 = por %p62, %p63
      %p65 = scmp.ne.s32.totalorder %s53, %s54
      %p66 = scmp.eq.s32.totalorder %s23, 1
      %p67 = por %p65, %p66
      %p69 = scmp.ne.s32.totalorder %s54, %s68
      %p70 = scmp.eq.s32.totalorder %s23, 0
      %p71 = por %p69, %p70
      %s73 = sadd.s32 %s72, 1
      %p76 = scmp.eq.s32.totalorder %s17, 1
      %p77 = scmp.ne.s32.totalorder %s72, %s74
      %p78 = scmp.eq.s32.totalorder %s17, 0
      %p79 = por %p77, %p78
      %p80 = scmp.ne.s32.totalorder %s72, %s74
      %p81 = scmp.eq.s32.totalorder %s22, 1
      %p82 = por %p80, %p81
      %p83 = scmp.ne.s32.totalorder %s74, %s75
      %p84 = scmp.eq.s32.totalorder %s22, 0
      %p85 = por %p83, %p84
      %p86 = scmp.ne.s32.totalorder %s74, %s75
      %p87 = scmp.eq.s32.totalorder %s23, 1
      %p88 = por %p86, %p87
      %p90 = scmp.ne.s32.totalorder %s75, %s89
      %p91 = scmp.eq.s32.totalorder %s23, 0
      %p92 = por %p90, %p91
      %s94 = sadd.s32 %s93, 1
      %p97 = scmp.eq.s32.totalorder %s17, 1
      %p98 = scmp.ne.s32.totalorder %s93, %s95
      %p99 = scmp.eq.s32.totalorder %s17, 0
      %p100 = por %p98, %p99
      %p101 = scmp.ne.s32.totalorder %s93, %s95
      %p102 = scmp.eq.s32.totalorder %s22, 1
      %p103 = por %p101, %p102
      %p104 = scmp.ne.s32.totalorder %s95, %s96
      %p105 = scmp.eq.s32.totalorder %s22, 0
      %p106 = por %p104, %p105
      %p107 = scmp.ne.s32.totalorder %s95, %s96
      %p108 = scmp.eq.s32.totalorder %s23, 1
      %p109 = por %p107, %p108
      %p111 = scmp.ne.s32.totalorder %s96, %s110
      %p112 = scmp.eq.s32.totalorder %s23, 0
      %p113 = por %p111, %p112
      %s115 = sadd.s32 %s114, 1
      %p118 = scmp.eq.s32.totalorder %s17, 1
      %p119 = scmp.ne.s32.totalorder %s114, %s116
      %p120 = scmp.eq.s32.totalorder %s17, 0
      %p121 = por %p119, %p120
      %p122 = scmp.ne.s32.totalorder %s114, %s116
      %p123 = scmp.eq.s32.totalorder %s22, 1
      %p124 = por %p122, %p123
      %p125 = scmp.ne.s32.totalorder %s116, %s117
      %p126 = scmp.eq.s32.totalorder %s22, 0
      %p127 = por %p125, %p126
      %p128 = scmp.ne.s32.totalorder %s116, %s117
      %p129 = scmp.eq.s32.totalorder %s23, 1
      %p130 = por %p128, %p129
      %p132 = scmp.ne.s32.totalorder %s117, %s131
      %p133 = scmp.eq.s32.totalorder %s23, 0
      %p134 = por %p132, %p133
      %s135 = ssub.s32 %s17, %s24
      %p136 = scmp.eq.s32.totalorder %s135, 0
      %s138 = sadd.s32 %s137, 1
      %s139 = scalar_select %p136, %s137, %s138
      %p142 = pneg %p136
      %p143 = scmp.eq.s32.totalorder %s17, 1
      %p144 = por %p142, %p143
      %p145 = scmp.ne.s32.totalorder %s137, %s140
      %p146 = scmp.eq.s32.totalorder %s17, 0
      %p147 = por %p145, %p146
      %p148 = scmp.ne.s32.totalorder %s137, %s140
      %p149 = scmp.eq.s32.totalorder %s22, 1
      %p150 = por %p148, %p149
      %p151 = scmp.ne.s32.totalorder %s140, %s141
      %p152 = scmp.eq.s32.totalorder %s22, 0
      %p153 = por %p151, %p152
      %p154 = scmp.ne.s32.totalorder %s140, %s141
      %p155 = scmp.eq.s32.totalorder %s23, 1
      %p156 = por %p154, %p155
      %p158 = scmp.ne.s32.totalorder %s141, %s157
      %p159 = scmp.eq.s32.totalorder %s23, 0
      %p160 = por %p158, %p159
      %p161 = scmp.le.s32.totalorder 1, %s17
      %p162 = scmp.lt.s32.totalorder %s17, 3
      %p163 = pnand %p161, %p162
      %p164 = pneg %p163
      // Predicated region
      $region9: #{tpu_custom_call.1} parent=5 // pred_check
        _
      $region10: #{tpu_custom_call.1} parent=5 // pred_check_branch
        %166 = sbr.rel (%p163) target = $region12
      $region11: #{tpu_custom_call.1} parent=5 // pred_region
        %s167 = ssub.s32 %s17, 1
        // Predicated region
        $region13: #{tpu_custom_call.1} parent=11 // pred_check
          %p168 = pneg %p64
        $region14: #{tpu_custom_call.1} parent=11 // pred_check_branch
          %170 = sbr.rel (%p168) target = $region16
        $region15: #{tpu_custom_call.1} parent=11 // pred_region
          _
        $region16: #{tpu_custom_call.1} parent=11 // pred_fallthru
          _
        // Predicated region
        $region17: #{tpu_custom_call.1} parent=11 // pred_check
          %p171 = pneg %p85
        $region18: #{tpu_custom_call.1} parent=11 // pred_check_branch
          %173 = sbr.rel (%p171) target = $region20
        $region19: #{tpu_custom_call.1} parent=11 // pred_region
          _
        $region20: #{tpu_custom_call.1} parent=11 // pred_fallthru
          _
        // Predicated region
        $region21: #{tpu_custom_call.1} parent=11 // pred_check
          %p174 = pneg %p106
        $region22: #{tpu_custom_call.1} parent=11 // pred_check_branch
          %176 = sbr.rel (%p174) target = $region24
        $region23: #{tpu_custom_call.1} parent=11 // pred_region
          _
        $region24: #{tpu_custom_call.1} parent=11 // pred_fallthru
          _
        // Predicated region
        $region25: #{tpu_custom_call.1} parent=11 // pred_check
          %p177 = pneg %p127
        $region26: #{tpu_custom_call.1} parent=11 // pred_check_branch
          %179 = sbr.rel (%p177) target = $region28
        $region27: #{tpu_custom_call.1} parent=11 // pred_region
          _
        $region28: #{tpu_custom_call.1} parent=11 // pred_fallthru
          _
      $region12: #{tpu_custom_call.1} parent=5 // pred_fallthru
        _
      %p180 = scmp.lt.s32.totalorder %s17, 2
      // Predicated region
      $region29: #{tpu_custom_call.1} parent=5 // pred_check
        %p181 = pneg %p180
      $region30: #{tpu_custom_call.1} parent=5 // pred_check_branch
        %183 = sbr.rel (%p181) target = $region32
      $region31: #{tpu_custom_call.1} parent=5 // pred_region
        // Predicated region
        $region33: #{tpu_custom_call.1} parent=31 // pred_check
          %p184 = pneg %p37
        $region34: #{tpu_custom_call.1} parent=31 // pred_check_branch
          %186 = sbr.rel (%p184) target = $region36
        $region35: #{tpu_custom_call.1} parent=31 // pred_region
          %s187 = sand.u32 %s27, 1
          %s188 = scalar_lea.sflag [#allocation5], %s187
          %s189 = sand.u32 %s27, 1
          %s190 = smul.addr %s189, 256
          %s191 = scalar_lea.vmem [#allocation4], %s190
          %s193 = ssub.s32 4096, 4096
          %194 = vsyncadd %s188, %s193
          %s195 = smul.addr %s17, 32
          %s196 = smul.addr %s195, 128
          %s197 = scalar_lea.hbm %s0, %s196
          %s198 = sshll.u32 %s191, 4
          %s199 = int_to_ptr.vmem [resolvable:$true] %s198
          %204 = dma.hbm_to_vmem [thread:$0]  %s197, 4096, %s199, %s188, 128, 128, 8
        $region36: #{tpu_custom_call.1} parent=31 // pred_fallthru
          _
      $region32: #{tpu_custom_call.1} parent=5 // pred_fallthru
        _
      %p205 = scmp.le.s32.totalorder 1, %s17
      %p206 = scmp.lt.s32.totalorder %s17, 3
      %p207 = pnand %p205, %p206
      %p208 = pneg %p207
      // Predicated region
      $region37: #{tpu_custom_call.1} parent=5 // pred_check
        _
      $region38: #{tpu_custom_call.1} parent=5 // pred_check_branch
        %210 = sbr.rel (%p207) target = $region40
      $region39: #{tpu_custom_call.1} parent=5 // pred_region
        %s211 = ssub.s32 %s17, 1
        %s212 = sand.u32 %s30, 1
        %s213 = scalar_lea.sflag [#allocation5], %s212
        %s214 = sand.u32 %s30, 1
        %s215 = smul.addr %s214, 256
        %s216 = scalar_lea.vmem [#allocation4], %s215
        // Predicated region
        $region41: #{tpu_custom_call.1} parent=39 // pred_check
          %p217 = pneg %p43
        $region42: #{tpu_custom_call.1} parent=39 // pred_check_branch
          %219 = sbr.rel (%p217) target = $region44
        $region43: #{tpu_custom_call.1} parent=39 // pred_region
          %220 = dma.done %s213, 4096
        $region44: #{tpu_custom_call.1} parent=39 // pred_fallthru
          _
        %s221 = sand.u32 %s30, 1
        %s222 = scalar_lea.sflag [#allocation5], %s221
        %s223 = sand.u32 %s30, 1
        %s224 = smul.addr %s223, 256
        %s225 = scalar_lea.vmem [#allocation4], %s224
        %p226 = pneg %p43
        %p227 = pneg %p40
        %p228 = pneg %p64
        %p229 = pneg %p61
        %p230 = pneg %p85
        %p231 = pneg %p82
        %p232 = pneg %p106
        %p233 = pneg %p103
        %p234 = pneg %p127
        %p235 = pneg %p124
        %p236 = pneg %p153
        %p237 = pneg %p150
        %s238 = sand.u32 %s140, 1
        %s239 = scalar_lea.sflag [#allocation6], %s238
        %s240 = sand.u32 %s140, 1
        %s241 = smul.addr %s240, 256
        %s242 = scalar_lea.vmem [#allocation7], %s241
        %v244 = vld [vmem:[%s216] sm:$0xff]
        %v245 = vld [vmem:[%s216 + $0x8] sm:$0xff]
        %v246 = vld [vmem:[%s216 + $0x10] sm:$0xff]
        %v247 = vld [vmem:[%s216 + $0x18] sm:$0xff]
        %v248 = vld [vmem:[%s216 + $0x20] sm:$0xff]
        %v249 = vld [vmem:[%s216 + $0x28] sm:$0xff]
        %v250 = vld [vmem:[%s216 + $0x30] sm:$0xff]
        %v251 = vld [vmem:[%s216 + $0x38] sm:$0xff]
        %v252 = vld [vmem:[%s216 + $0x40] sm:$0xff]
        %v253 = vld [vmem:[%s216 + $0x48] sm:$0xff]
        %v254 = vld [vmem:[%s216 + $0x50] sm:$0xff]
        %v255 = vld [vmem:[%s216 + $0x58] sm:$0xff]
        %v256 = vld [vmem:[%s216 + $0x60] sm:$0xff]
        %v257 = vld [vmem:[%s216 + $0x68] sm:$0xff]
        %v258 = vld [vmem:[%s216 + $0x70] sm:$0xff]
        %v259 = vld [vmem:[%s216 + $0x78] sm:$0xff]
        %v260 = vld [vmem:[%s216 + $0x80] sm:$0xff]
        %v261 = vld [vmem:[%s216 + $0x88] sm:$0xff]
        %v262 = vld [vmem:[%s216 + $0x90] sm:$0xff]
        %v263 = vld [vmem:[%s216 + $0x98] sm:$0xff]
        %v264 = vld [vmem:[%s216 + $0xa0] sm:$0xff]
        %v265 = vld [vmem:[%s216 + $0xa8] sm:$0xff]
        %v266 = vld [vmem:[%s216 + $0xb0] sm:$0xff]
        %v267 = vld [vmem:[%s216 + $0xb8] sm:$0xff]
        %v268 = vld [vmem:[%s216 + $0xc0] sm:$0xff]
        %v269 = vld [vmem:[%s216 + $0xc8] sm:$0xff]
        %v270 = vld [vmem:[%s216 + $0xd0] sm:$0xff]
        %v271 = vld [vmem:[%s216 + $0xd8] sm:$0xff]
        %v272 = vld [vmem:[%s216 + $0xe0] sm:$0xff]
        %v273 = vld [vmem:[%s216 + $0xe8] sm:$0xff]
        %v274 = vld [vmem:[%s216 + $0xf0] sm:$0xff]
        %v275 = vld [vmem:[%s216 + $0xf8] sm:$0xff]
        %vm276 = vcmask 60416
        %277 = vst.msk [vmem:[#allocation2] sm:$0xf] %vm276, 0
        %278 = vst.msk [vmem:[#allocation2 + $0x4] sm:$0xf] %vm276, 0
        %vm279 = vcmask 57344
        %280 = vst.msk [vmem:[#allocation2 + $0x8] sm:$0x1] %vm279, 0
        %281 = vst.msk [vmem:[#allocation2 + $0xc] sm:$0xf] %vm276, 0
        %282 = vst.msk [vmem:[#allocation2 + $0x10] sm:$0xf] %vm276, 0
        %283 = vst.msk [vmem:[#allocation2 + $0x14] sm:$0x1] %vm279, 0
        %284 = vst.msk [vmem:[#allocation2 + $0x18] sm:$0xf] %vm276, 0
        %285 = vst.msk [vmem:[#allocation2 + $0x1c] sm:$0xf] %vm276, 0
        %286 = vst.msk [vmem:[#allocation2 + $0x20] sm:$0x1] %vm279, 0
        %287 = vst.msk [vmem:[#allocation2 + $0x24] sm:$0xf] %vm276, 0
        %288 = vst.msk [vmem:[#allocation2 + $0x28] sm:$0xf] %vm276, 0
        %289 = vst.msk [vmem:[#allocation2 + $0x2c] sm:$0x1] %vm279, 0
        %290 = vst.msk [vmem:[#allocation2 + $0x30] sm:$0xf] %vm276, 0
        %291 = vst.msk [vmem:[#allocation2 + $0x34] sm:$0xf] %vm276, 0
        %292 = vst.msk [vmem:[#allocation2 + $0x38] sm:$0x1] %vm279, 0
        %293 = vst.msk [vmem:[#allocation2 + $0x3c] sm:$0xf] %vm276, 0
        %294 = vst.msk [vmem:[#allocation2 + $0x40] sm:$0xf] %vm276, 0
        %295 = vst.msk [vmem:[#allocation2 + $0x44] sm:$0x1] %vm279, 0
        %296 = vst.msk [vmem:[#allocation2 + $0x48] sm:$0xf] %vm276, 0
        %297 = vst.msk [vmem:[#allocation2 + $0x4c] sm:$0xf] %vm276, 0
        %298 = vst.msk [vmem:[#allocation2 + $0x50] sm:$0x1] %vm279, 0
        %299 = vst.msk [vmem:[#allocation2 + $0x54] sm:$0xf] %vm276, 0
        %300 = vst.msk [vmem:[#allocation2 + $0x58] sm:$0xf] %vm276, 0
        %301 = vst.msk [vmem:[#allocation2 + $0x5c] sm:$0x1] %vm279, 0
        %302 = vst.msk [vmem:[#allocation2 + $0x60] sm:$0xf] %vm276, 0
        %303 = vst.msk [vmem:[#allocation2 + $0x64] sm:$0xf] %vm276, 0
        %304 = vst.msk [vmem:[#allocation2 + $0x68] sm:$0x1] %vm279, 0
        %305 = vst.msk [vmem:[#allocation2 + $0x6c] sm:$0xf] %vm276, 0
        %306 = vst.msk [vmem:[#allocation2 + $0x70] sm:$0xf] %vm276, 0
        %307 = vst.msk [vmem:[#allocation2 + $0x74] sm:$0x1] %vm279, 0
        %308 = vst.msk [vmem:[#allocation2 + $0x78] sm:$0xf] %vm276, 0
        %309 = vst.msk [vmem:[#allocation2 + $0x7c] sm:$0xf] %vm276, 0
        %310 = vst.msk [vmem:[#allocation2 + $0x80] sm:$0x1] %vm279, 0
        %311 = vst.msk [vmem:[#allocation2 + $0x84] sm:$0xf] %vm276, 0
        %312 = vst.msk [vmem:[#allocation2 + $0x88] sm:$0xf] %vm276, 0
        %313 = vst.msk [vmem:[#allocation2 + $0x8c] sm:$0x1] %vm279, 0
        %314 = vst.msk [vmem:[#allocation2 + $0x90] sm:$0xf] %vm276, 0
        %315 = vst.msk [vmem:[#allocation2 + $0x94] sm:$0xf] %vm276, 0
        %316 = vst.msk [vmem:[#allocation2 + $0x98] sm:$0x1] %vm279, 0
        %317 = vst.msk [vmem:[#allocation2 + $0x9c] sm:$0xf] %vm276, 0
        %318 = vst.msk [vmem:[#allocation2 + $0xa0] sm:$0xf] %vm276, 0
        %319 = vst.msk [vmem:[#allocation2 + $0xa4] sm:$0x1] %vm279, 0
        %320 = vst.msk [vmem:[#allocation2 + $0xa8] sm:$0xf] %vm276, 0
        %321 = vst.msk [vmem:[#allocation2 + $0xac] sm:$0xf] %vm276, 0
        %322 = vst.msk [vmem:[#allocation2 + $0xb0] sm:$0x1] %vm279, 0
        %323 = vst.msk [vmem:[#allocation2 + $0xb4] sm:$0xf] %vm276, 0
        %324 = vst.msk [vmem:[#allocation2 + $0xb8] sm:$0xf] %vm276, 0
        %325 = vst.msk [vmem:[#allocation2 + $0xbc] sm:$0x1] %vm279, 0
        %326 = vst.msk [vmem:[#allocation2 + $0xc0] sm:$0xf] %vm276, 0
        %327 = vst.msk [vmem:[#allocation2 + $0xc4] sm:$0xf] %vm276, 0
        %328 = vst.msk [vmem:[#allocation2 + $0xc8] sm:$0x1] %vm279, 0
        %329 = vst.msk [vmem:[#allocation2 + $0xcc] sm:$0xf] %vm276, 0
        %330 = vst.msk [vmem:[#allocation2 + $0xd0] sm:$0xf] %vm276, 0
        %331 = vst.msk [vmem:[#allocation2 + $0xd4] sm:$0x1] %vm279, 0
        %v332 = vpack.c.bf16 %v245, %v244
        %v333 = vpack.c.bf16 %v247, %v246
        %v334 = vpack.c.bf16 %v249, %v248
        %v335 = vpack.c.bf16 %v251, %v250
        %v336 = vpack.c.bf16 %v253, %v252
        %v337 = vpack.c.bf16 %v255, %v254
        %v338 = vpack.c.bf16 %v257, %v256
        %v339 = vpack.c.bf16 %v259, %v258
        %v340 = vpack.c.bf16 %v261, %v260
        %v341 = vpack.c.bf16 %v263, %v262
        %v342 = vpack.c.bf16 %v265, %v264
        %v343 = vpack.c.bf16 %v267, %v266
        %v344 = vpack.c.bf16 %v269, %v268
        %v345 = vpack.c.bf16 %v271, %v270
        %v346 = vpack.c.bf16 %v273, %v272
        %v347 = vpack.c.bf16 %v275, %v274
        %v364 = vunpack.c.l.b16 %v332
        %v365 = vunpack.c.h.b16 %v332
        %v366 = vunpack.c.l.b16 %v333
        %v367 = vunpack.c.h.b16 %v333
        %v368 = vunpack.c.l.b16 %v334
        %v369 = vunpack.c.h.b16 %v334
        %v370 = vunpack.c.l.b16 %v335
        %v371 = vunpack.c.h.b16 %v335
        %v372 = vunpack.c.l.b16 %v336
        %v373 = vunpack.c.h.b16 %v336
        %v374 = vunpack.c.l.b16 %v337
        %v375 = vunpack.c.h.b16 %v337
        %v376 = vunpack.c.l.b16 %v338
        %v377 = vunpack.c.h.b16 %v338
        %v378 = vunpack.c.l.b16 %v339
        %v379 = vunpack.c.h.b16 %v339
        %v380 = vunpack.c.l.b16 %v340
        %v381 = vunpack.c.h.b16 %v340
        %v382 = vunpack.c.l.b16 %v341
        %v383 = vunpack.c.h.b16 %v341
        %v384 = vunpack.c.l.b16 %v342
        %v385 = vunpack.c.h.b16 %v342
        %v386 = vunpack.c.l.b16 %v343
        %v387 = vunpack.c.h.b16 %v343
        %v388 = vunpack.c.l.b16 %v344
        %v389 = vunpack.c.h.b16 %v344
        %v390 = vunpack.c.l.b16 %v345
        %v391 = vunpack.c.h.b16 %v345
        %v392 = vunpack.c.l.b16 %v346
        %v393 = vunpack.c.h.b16 %v346
        %v394 = vunpack.c.l.b16 %v347
        %v395 = vunpack.c.h.b16 %v347
        %v396 = vpack.c.b16 %v364, %v364
        %v397 = vpack.c.b16 %v365, %v365
        %v398 = vpack.c.b16 %v366, %v366
        %v399 = vpack.c.b16 %v367, %v367
        %v400 = vpack.c.b16 %v368, %v368
        %v401 = vpack.c.b16 %v369, %v369
        %v402 = vpack.c.b16 %v370, %v370
        %v403 = vpack.c.b16 %v371, %v371
        %v404 = vpack.c.b16 %v372, %v372
        %v405 = vpack.c.b16 %v373, %v373
        %v406 = vpack.c.b16 %v374, %v374
        %v407 = vpack.c.b16 %v375, %v375
        %v408 = vpack.c.b16 %v376, %v376
        %v409 = vpack.c.b16 %v377, %v377
        %v410 = vpack.c.b16 %v378, %v378
        %v411 = vpack.c.b16 %v379, %v379
        %v412 = vpack.c.b16 %v380, %v380
        %v413 = vpack.c.b16 %v381, %v381
        %v414 = vpack.c.b16 %v382, %v382
        %v415 = vpack.c.b16 %v383, %v383
        %v416 = vpack.c.b16 %v384, %v384
        %v417 = vpack.c.b16 %v385, %v385
        %v418 = vpack.c.b16 %v386, %v386
        %v419 = vpack.c.b16 %v387, %v387
        %v420 = vpack.c.b16 %v388, %v388
        %v421 = vpack.c.b16 %v389, %v389
        %v422 = vpack.c.b16 %v390, %v390
        %v423 = vpack.c.b16 %v391, %v391
        %v424 = vpack.c.b16 %v392, %v392
        %v425 = vpack.c.b16 %v393, %v393
        %v426 = vpack.c.b16 %v394, %v394
        %v427 = vpack.c.b16 %v395, %v395
        %vm428 = vsmask.f32 256
        %vm429 = vsmask.f32 4368
        %vm430 = vmor %vm428, %vm429
        %v432 = vshrl.u32 %v396, 16
        %v434 = vrot.slane %v432, 7
        %v435 = vshll.u32 %v396, 16
        %v437 = vor.u32 %v434, %v435
        %v438 = vrot.slane %v434, 4
        %v440 = vshrl.u32 %v397, 16
        %v442 = vrot.slane %v440, 7
        %v443 = vshll.u32 %v397, 16
        %v445 = vor.u32 %v442, %v443
        %v446 = vsel %vm430, %v438, %v445
        %v447 = vrot.slane %v442, 4
        %v449 = vshrl.u32 %v398, 16
        %v451 = vrot.slane %v449, 7
        %v452 = vshll.u32 %v398, 16
        %v454 = vor.u32 %v451, %v452
        %v455 = vrot.slane %v451, 4
        %v457 = vshrl.u32 %v399, 16
        %v459 = vrot.slane %v457, 7
        %v460 = vshll.u32 %v399, 16
        %v462 = vor.u32 %v459, %v460
        %v463 = vsel %vm430, %v455, %v462
        %v464 = vrot.slane %v459, 4
        %v466 = vshrl.u32 %v400, 16
        %v468 = vrot.slane %v466, 7
        %v469 = vshll.u32 %v400, 16
        %v471 = vor.u32 %v468, %v469
        %v472 = vrot.slane %v468, 4
        %v474 = vshrl.u32 %v401, 16
        %v476 = vrot.slane %v474, 7
        %v477 = vshll.u32 %v401, 16
        %v479 = vor.u32 %v476, %v477
        %v480 = vsel %vm430, %v472, %v479
        %v481 = vrot.slane %v476, 4
        %v483 = vshrl.u32 %v402, 16
        %v485 = vrot.slane %v483, 7
        %v486 = vshll.u32 %v402, 16
        %v488 = vor.u32 %v485, %v486
        %v489 = vrot.slane %v485, 4
        %v491 = vshrl.u32 %v403, 16
        %v493 = vrot.slane %v491, 7
        %v494 = vshll.u32 %v403, 16
        %v496 = vor.u32 %v493, %v494
        %v497 = vsel %vm430, %v489, %v496
        %v498 = vrot.slane %v493, 4
        %v500 = vshrl.u32 %v404, 16
        %v502 = vrot.slane %v500, 7
        %v503 = vshll.u32 %v404, 16
        %v505 = vor.u32 %v502, %v503
        %v506 = vrot.slane %v502, 4
        %v508 = vshrl.u32 %v405, 16
        %v510 = vrot.slane %v508, 7
        %v511 = vshll.u32 %v405, 16
        %v513 = vor.u32 %v510, %v511
        %v514 = vsel %vm430, %v506, %v513
        %v515 = vrot.slane %v510, 4
        %v517 = vshrl.u32 %v406, 16
        %v519 = vrot.slane %v517, 7
        %v520 = vshll.u32 %v406, 16
        %v522 = vor.u32 %v519, %v520
        %v523 = vrot.slane %v519, 4
        %v525 = vshrl.u32 %v407, 16
        %v527 = vrot.slane %v525, 7
        %v528 = vshll.u32 %v407, 16
        %v530 = vor.u32 %v527, %v528
        %v531 = vsel %vm430, %v523, %v530
        %v532 = vrot.slane %v527, 4
        %v534 = vshrl.u32 %v408, 16
        %v536 = vrot.slane %v534, 7
        %v537 = vshll.u32 %v408, 16
        %v539 = vor.u32 %v536, %v537
        %v540 = vrot.slane %v536, 4
        %v542 = vshrl.u32 %v409, 16
        %v544 = vrot.slane %v542, 7
        %v545 = vshll.u32 %v409, 16
        %v547 = vor.u32 %v544, %v545
        %v548 = vsel %vm430, %v540, %v547
        %v549 = vrot.slane %v544, 4
        %v551 = vshrl.u32 %v410, 16
        %v553 = vrot.slane %v551, 7
        %v554 = vshll.u32 %v410, 16
        %v556 = vor.u32 %v553, %v554
        %v557 = vrot.slane %v553, 4
        %v559 = vshrl.u32 %v411, 16
        %v561 = vrot.slane %v559, 7
        %v562 = vshll.u32 %v411, 16
        %v564 = vor.u32 %v561, %v562
        %v565 = vsel %vm430, %v557, %v564
        %v566 = vrot.slane %v561, 4
        %v568 = vshrl.u32 %v412, 16
        %v570 = vrot.slane %v568, 7
        %v571 = vshll.u32 %v412, 16
        %v573 = vor.u32 %v570, %v571
        %v574 = vrot.slane %v570, 4
        %v576 = vshrl.u32 %v413, 16
        %v578 = vrot.slane %v576, 7
        %v579 = vshll.u32 %v413, 16
        %v581 = vor.u32 %v578, %v579
        %v582 = vsel %vm430, %v574, %v581
        %v583 = vrot.slane %v578, 4
        %v585 = vshrl.u32 %v414, 16
        %v587 = vrot.slane %v585, 7
        %v588 = vshll.u32 %v414, 16
        %v590 = vor.u32 %v587, %v588
        %v591 = vrot.slane %v587, 4
        %v593 = vshrl.u32 %v415, 16
        %v595 = vrot.slane %v593, 7
        %v596 = vshll.u32 %v415, 16
        %v598 = vor.u32 %v595, %v596
        %v599 = vsel %vm430, %v591, %v598
        %v600 = vrot.slane %v595, 4
        %v602 = vshrl.u32 %v416, 16
        %v604 = vrot.slane %v602, 7
        %v605 = vshll.u32 %v416, 16
        %v607 = vor.u32 %v604, %v605
        %v608 = vrot.slane %v604, 4
        %v610 = vshrl.u32 %v417, 16
        %v612 = vrot.slane %v610, 7
        %v613 = vshll.u32 %v417, 16
        %v615 = vor.u32 %v612, %v613
        %v616 = vsel %vm430, %v608, %v615
        %v617 = vrot.slane %v612, 4
        %v619 = vshrl.u32 %v418, 16
        %v621 = vrot.slane %v619, 7
        %v622 = vshll.u32 %v418, 16
        %v624 = vor.u32 %v621, %v622
        %v625 = vrot.slane %v621, 4
        %v627 = vshrl.u32 %v419, 16
        %v629 = vrot.slane %v627, 7
        %v630 = vshll.u32 %v419, 16
        %v632 = vor.u32 %v629, %v630
        %v633 = vsel %vm430, %v625, %v632
        %v634 = vrot.slane %v629, 4
        %v636 = vshrl.u32 %v420, 16
        %v638 = vrot.slane %v636, 7
        %v639 = vshll.u32 %v420, 16
        %v641 = vor.u32 %v638, %v639
        %v642 = vrot.slane %v638, 4
        %v644 = vshrl.u32 %v421, 16
        %v646 = vrot.slane %v644, 7
        %v647 = vshll.u32 %v421, 16
        %v649 = vor.u32 %v646, %v647
        %v650 = vsel %vm430, %v642, %v649
        %v651 = vrot.slane %v646, 4
        %v653 = vshrl.u32 %v422, 16
        %v655 = vrot.slane %v653, 7
        %v656 = vshll.u32 %v422, 16
        %v658 = vor.u32 %v655, %v656
        %v659 = vrot.slane %v655, 4
        %v661 = vshrl.u32 %v423, 16
        %v663 = vrot.slane %v661, 7
        %v664 = vshll.u32 %v423, 16
        %v666 = vor.u32 %v663, %v664
        %v667 = vsel %vm430, %v659, %v666
        %v668 = vrot.slane %v663, 4
        %v670 = vshrl.u32 %v424, 16
        %v672 = vrot.slane %v670, 7
        %v673 = vshll.u32 %v424, 16
        %v675 = vor.u32 %v672, %v673
        %v676 = vrot.slane %v672, 4
        %v678 = vshrl.u32 %v425, 16
        %v680 = vrot.slane %v678, 7
        %v681 = vshll.u32 %v425, 16
        %v683 = vor.u32 %v680, %v681
        %v684 = vsel %vm430, %v676, %v683
        %v685 = vrot.slane %v680, 4
        %v687 = vshrl.u32 %v426, 16
        %v689 = vrot.slane %v687, 7
        %v690 = vshll.u32 %v426, 16
        %v692 = vor.u32 %v689, %v690
        %v693 = vrot.slane %v689, 4
        %v695 = vshrl.u32 %v427, 16
        %v697 = vrot.slane %v695, 7
        %v698 = vshll.u32 %v427, 16
        %v700 = vor.u32 %v697, %v698
        %v701 = vsel %vm430, %v693, %v700
        %v702 = vrot.slane %v697, 4
        %s751 = scalar_lea.vmem [#allocation2], 12
        %vm752 = vcmask 60416
        %vm753 = vsmask.f32 7938
        %vm754 = vmand %vm752, %vm753
        %v755 = vld [vmem:[%s751] sm:$0xf]
        %v756 = vsel %vm754, %v437, %v755
        %757 = vst [vmem:[%s751] sm:$0xf] %v756
        %758 = vst.msk [vmem:[%s751 + $0x4] sm:$0xf] %vm276, %v446
        %vm759 = vcmask 57344
        %vm760 = vmand %vm759, %vm428
        %v761 = vld [vmem:[%s751 + $0x8] sm:$0x1]
        %v762 = vsel %vm760, %v447, %v761
        %763 = vst [vmem:[%s751 + $0x8] sm:$0x1] %v762
        %v764 = vld [vmem:[%s751 + $0xc] sm:$0xf]
        %v765 = vsel %vm754, %v454, %v764
        %766 = vst [vmem:[%s751 + $0xc] sm:$0xf] %v765
        %767 = vst.msk [vmem:[%s751 + $0x10] sm:$0xf] %vm276, %v463
        %v768 = vld [vmem:[%s751 + $0x14] sm:$0x1]
        %v769 = vsel %vm760, %v464, %v768
        %770 = vst [vmem:[%s751 + $0x14] sm:$0x1] %v769
        %v771 = vld [vmem:[%s751 + $0x18] sm:$0xf]
        %v772 = vsel %vm754, %v471, %v771
        %773 = vst [vmem:[%s751 + $0x18] sm:$0xf] %v772
        %774 = vst.msk [vmem:[%s751 + $0x1c] sm:$0xf] %vm276, %v480
        %v775 = vld [vmem:[%s751 + $0x20] sm:$0x1]
        %v776 = vsel %vm760, %v481, %v775
        %777 = vst [vmem:[%s751 + $0x20] sm:$0x1] %v776
        %v778 = vld [vmem:[%s751 + $0x24] sm:$0xf]
        %v779 = vsel %vm754, %v488, %v778
        %780 = vst [vmem:[%s751 + $0x24] sm:$0xf] %v779
        %781 = vst.msk [vmem:[%s751 + $0x28] sm:$0xf] %vm276, %v497
        %v782 = vld [vmem:[%s751 + $0x2c] sm:$0x1]
        %v783 = vsel %vm760, %v498, %v782
        %784 = vst [vmem:[%s751 + $0x2c] sm:$0x1] %v783
        %v785 = vld [vmem:[%s751 + $0x30] sm:$0xf]
        %v786 = vsel %vm754, %v505, %v785
        %787 = vst [vmem:[%s751 + $0x30] sm:$0xf] %v786
        %788 = vst.msk [vmem:[%s751 + $0x34] sm:$0xf] %vm276, %v514
        %v789 = vld [vmem:[%s751 + $0x38] sm:$0x1]
        %v790 = vsel %vm760, %v515, %v789
        %791 = vst [vmem:[%s751 + $0x38] sm:$0x1] %v790
        %v792 = vld [vmem:[%s751 + $0x3c] sm:$0xf]
        %v793 = vsel %vm754, %v522, %v792
        %794 = vst [vmem:[%s751 + $0x3c] sm:$0xf] %v793
        %795 = vst.msk [vmem:[%s751 + $0x40] sm:$0xf] %vm276, %v531
        %v796 = vld [vmem:[%s751 + $0x44] sm:$0x1]
        %v797 = vsel %vm760, %v532, %v796
        %798 = vst [vmem:[%s751 + $0x44] sm:$0x1] %v797
        %v799 = vld [vmem:[%s751 + $0x48] sm:$0xf]
        %v800 = vsel %vm754, %v539, %v799
        %801 = vst [vmem:[%s751 + $0x48] sm:$0xf] %v800
        %802 = vst.msk [vmem:[%s751 + $0x4c] sm:$0xf] %vm276, %v548
        %v803 = vld [vmem:[%s751 + $0x50] sm:$0x1]
        %v804 = vsel %vm760, %v549, %v803
        %805 = vst [vmem:[%s751 + $0x50] sm:$0x1] %v804
        %v806 = vld [vmem:[%s751 + $0x54] sm:$0xf]
        %v807 = vsel %vm754, %v556, %v806
        %808 = vst [vmem:[%s751 + $0x54] sm:$0xf] %v807
        %809 = vst.msk [vmem:[%s751 + $0x58] sm:$0xf] %vm276, %v565
        %v810 = vld [vmem:[%s751 + $0x5c] sm:$0x1]
        %v811 = vsel %vm760, %v566, %v810
        %812 = vst [vmem:[%s751 + $0x5c] sm:$0x1] %v811
        %v813 = vld [vmem:[%s751 + $0x60] sm:$0xf]
        %v814 = vsel %vm754, %v573, %v813
        %815 = vst [vmem:[%s751 + $0x60] sm:$0xf] %v814
        %816 = vst.msk [vmem:[%s751 + $0x64] sm:$0xf] %vm276, %v582
        %v817 = vld [vmem:[%s751 + $0x68] sm:$0x1]
        %v818 = vsel %vm760, %v583, %v817
        %819 = vst [vmem:[%s751 + $0x68] sm:$0x1] %v818
        %v820 = vld [vmem:[%s751 + $0x6c] sm:$0xf]
        %v821 = vsel %vm754, %v590, %v820
        %822 = vst [vmem:[%s751 + $0x6c] sm:$0xf] %v821
        %823 = vst.msk [vmem:[%s751 + $0x70] sm:$0xf] %vm276, %v599
        %v824 = vld [vmem:[%s751 + $0x74] sm:$0x1]
        %v825 = vsel %vm760, %v600, %v824
        %826 = vst [vmem:[%s751 + $0x74] sm:$0x1] %v825
        %v827 = vld [vmem:[%s751 + $0x78] sm:$0xf]
        %v828 = vsel %vm754, %v607, %v827
        %829 = vst [vmem:[%s751 + $0x78] sm:$0xf] %v828
        %830 = vst.msk [vmem:[%s751 + $0x7c] sm:$0xf] %vm276, %v616
        %v831 = vld [vmem:[%s751 + $0x80] sm:$0x1]
        %v832 = vsel %vm760, %v617, %v831
        %833 = vst [vmem:[%s751 + $0x80] sm:$0x1] %v832
        %v834 = vld [vmem:[%s751 + $0x84] sm:$0xf]
        %v835 = vsel %vm754, %v624, %v834
        %836 = vst [vmem:[%s751 + $0x84] sm:$0xf] %v835
        %837 = vst.msk [vmem:[%s751 + $0x88] sm:$0xf] %vm276, %v633
        %v838 = vld [vmem:[%s751 + $0x8c] sm:$0x1]
        %v839 = vsel %vm760, %v634, %v838
        %840 = vst [vmem:[%s751 + $0x8c] sm:$0x1] %v839
        %v841 = vld [vmem:[%s751 + $0x90] sm:$0xf]
        %v842 = vsel %vm754, %v641, %v841
        %843 = vst [vmem:[%s751 + $0x90] sm:$0xf] %v842
        %844 = vst.msk [vmem:[%s751 + $0x94] sm:$0xf] %vm276, %v650
        %v845 = vld [vmem:[%s751 + $0x98] sm:$0x1]
        %v846 = vsel %vm760, %v651, %v845
        %847 = vst [vmem:[%s751 + $0x98] sm:$0x1] %v846
        %v848 = vld [vmem:[%s751 + $0x9c] sm:$0xf]
        %v849 = vsel %vm754, %v658, %v848
        %850 = vst [vmem:[%s751 + $0x9c] sm:$0xf] %v849
        %851 = vst.msk [vmem:[%s751 + $0xa0] sm:$0xf] %vm276, %v667
        %v852 = vld [vmem:[%s751 + $0xa4] sm:$0x1]
        %v853 = vsel %vm760, %v668, %v852
        %854 = vst [vmem:[%s751 + $0xa4] sm:$0x1] %v853
        %v855 = vld [vmem:[%s751 + $0xa8] sm:$0xf]
        %v856 = vsel %vm754, %v675, %v855
        %857 = vst [vmem:[%s751 + $0xa8] sm:$0xf] %v856
        %858 = vst.msk [vmem:[%s751 + $0xac] sm:$0xf] %vm276, %v684
        %v859 = vld [vmem:[%s751 + $0xb0] sm:$0x1]
        %v860 = vsel %vm760, %v685, %v859
        %861 = vst [vmem:[%s751 + $0xb0] sm:$0x1] %v860
        %v862 = vld [vmem:[%s751 + $0xb4] sm:$0xf]
        %v863 = vsel %vm754, %v692, %v862
        %864 = vst [vmem:[%s751 + $0xb4] sm:$0xf] %v863
        %865 = vst.msk [vmem:[%s751 + $0xb8] sm:$0xf] %vm276, %v701
        %v866 = vld [vmem:[%s751 + $0xbc] sm:$0x1]
        %v867 = vsel %vm760, %v702, %v866
        %868 = vst [vmem:[%s751 + $0xbc] sm:$0x1] %v867
        %v869 = vld [vmem:[#allocation2] sm:$0xf]
        %v870 = vld [vmem:[#allocation2 + $0x4] sm:$0xf]
        %v871 = vld [vmem:[#allocation2 + $0xc] sm:$0xf]
        %v872 = vld [vmem:[#allocation2 + $0x10] sm:$0xf]
        %v873 = vld [vmem:[#allocation2 + $0x18] sm:$0xf]
        %v874 = vld [vmem:[#allocation2 + $0x1c] sm:$0xf]
        %v875 = vld [vmem:[#allocation2 + $0x24] sm:$0xf]
        %v876 = vld [vmem:[#allocation2 + $0x28] sm:$0xf]
        %v877 = vld [vmem:[#allocation2 + $0x30] sm:$0xf]
        %v878 = vld [vmem:[#allocation2 + $0x34] sm:$0xf]
        %v879 = vld [vmem:[#allocation2 + $0x3c] sm:$0xf]
        %v880 = vld [vmem:[#allocation2 + $0x40] sm:$0xf]
        %v881 = vld [vmem:[#allocation2 + $0x48] sm:$0xf]
        %v882 = vld [vmem:[#allocation2 + $0x4c] sm:$0xf]
        %v883 = vld [vmem:[#allocation2 + $0x54] sm:$0xf]
        %v884 = vld [vmem:[#allocation2 + $0x58] sm:$0xf]
        %v885 = vld [vmem:[#allocation2 + $0x60] sm:$0xf]
        %v886 = vld [vmem:[#allocation2 + $0x64] sm:$0xf]
        %v887 = vld [vmem:[#allocation2 + $0x6c] sm:$0xf]
        %v888 = vld [vmem:[#allocation2 + $0x70] sm:$0xf]
        %v889 = vld [vmem:[#allocation2 + $0x78] sm:$0xf]
        %v890 = vld [vmem:[#allocation2 + $0x7c] sm:$0xf]
        %v891 = vld [vmem:[#allocation2 + $0x84] sm:$0xf]
        %v892 = vld [vmem:[#allocation2 + $0x88] sm:$0xf]
        %v893 = vld [vmem:[#allocation2 + $0x90] sm:$0xf]
        %v894 = vld [vmem:[#allocation2 + $0x94] sm:$0xf]
        %v895 = vld [vmem:[#allocation2 + $0x9c] sm:$0xf]
        %v896 = vld [vmem:[#allocation2 + $0xa0] sm:$0xf]
        %v897 = vld [vmem:[#allocation2 + $0xa8] sm:$0xf]
        %v898 = vld [vmem:[#allocation2 + $0xac] sm:$0xf]
        %v899 = vld [vmem:[#allocation2 + $0xb4] sm:$0xf]
        %v900 = vld [vmem:[#allocation2 + $0xb8] sm:$0xf]
        %v933 = vunpack.c.l.b16 %v869
        %v934 = vunpack.c.l.b16 %v870
        %v935 = vunpack.c.l.b16 %v871
        %v936 = vunpack.c.l.b16 %v872
        %v937 = vunpack.c.l.b16 %v873
        %v938 = vunpack.c.l.b16 %v874
        %v939 = vunpack.c.l.b16 %v875
        %v940 = vunpack.c.l.b16 %v876
        %v941 = vunpack.c.l.b16 %v877
        %v942 = vunpack.c.l.b16 %v878
        %v943 = vunpack.c.l.b16 %v879
        %v944 = vunpack.c.l.b16 %v880
        %v945 = vunpack.c.l.b16 %v881
        %v946 = vunpack.c.l.b16 %v882
        %v947 = vunpack.c.l.b16 %v883
        %v948 = vunpack.c.l.b16 %v884
        %v949 = vunpack.c.l.b16 %v885
        %v950 = vunpack.c.l.b16 %v886
        %v951 = vunpack.c.l.b16 %v887
        %v952 = vunpack.c.l.b16 %v888
        %v953 = vunpack.c.l.b16 %v889
        %v954 = vunpack.c.l.b16 %v890
        %v955 = vunpack.c.l.b16 %v891
        %v956 = vunpack.c.l.b16 %v892
        %v957 = vunpack.c.l.b16 %v893
        %v958 = vunpack.c.l.b16 %v894
        %v959 = vunpack.c.l.b16 %v895
        %v960 = vunpack.c.l.b16 %v896
        %v961 = vunpack.c.l.b16 %v897
        %v962 = vunpack.c.l.b16 %v898
        %v963 = vunpack.c.l.b16 %v899
        %v964 = vunpack.c.l.b16 %v900
        %v965 = vpack.c.b16 %v934, %v933
        %v966 = vpack.c.b16 %v936, %v935
        %v967 = vpack.c.b16 %v938, %v937
        %v968 = vpack.c.b16 %v940, %v939
        %v969 = vpack.c.b16 %v942, %v941
        %v970 = vpack.c.b16 %v944, %v943
        %v971 = vpack.c.b16 %v946, %v945
        %v972 = vpack.c.b16 %v948, %v947
        %v973 = vpack.c.b16 %v950, %v949
        %v974 = vpack.c.b16 %v952, %v951
        %v975 = vpack.c.b16 %v954, %v953
        %v976 = vpack.c.b16 %v956, %v955
        %v977 = vpack.c.b16 %v958, %v957
        %v978 = vpack.c.b16 %v960, %v959
        %v979 = vpack.c.b16 %v962, %v961
        %v980 = vpack.c.b16 %v964, %v963
        %vm997 = vcmask 64512
        %998 = vst.msk [vmem:[#allocation3] sm:$0xff] %vm997, %v965
        %999 = vst.msk [vmem:[#allocation3 + $0x8] sm:$0xff] %vm997, %v966
        %1000 = vst.msk [vmem:[#allocation3 + $0x10] sm:$0xff] %vm997, %v967
        %1001 = vst.msk [vmem:[#allocation3 + $0x18] sm:$0xff] %vm997, %v968
        %1002 = vst.msk [vmem:[#allocation3 + $0x20] sm:$0xff] %vm997, %v969
        %1003 = vst.msk [vmem:[#allocation3 + $0x28] sm:$0xff] %vm997, %v970
        %1004 = vst.msk [vmem:[#allocation3 + $0x30] sm:$0xff] %vm997, %v971
        %1005 = vst.msk [vmem:[#allocation3 + $0x38] sm:$0xff] %vm997, %v972
        %1006 = vst.msk [vmem:[#allocation3 + $0x40] sm:$0xff] %vm997, %v973
        %1007 = vst.msk [vmem:[#allocation3 + $0x48] sm:$0xff] %vm997, %v974
        %1008 = vst.msk [vmem:[#allocation3 + $0x50] sm:$0xff] %vm997, %v975
        %1009 = vst.msk [vmem:[#allocation3 + $0x58] sm:$0xff] %vm997, %v976
        %1010 = vst.msk [vmem:[#allocation3 + $0x60] sm:$0xff] %vm997, %v977
        %1011 = vst.msk [vmem:[#allocation3 + $0x68] sm:$0xff] %vm997, %v978
        %1012 = vst.msk [vmem:[#allocation3 + $0x70] sm:$0xff] %vm997, %v979
        %1013 = vst.msk [vmem:[#allocation3 + $0x78] sm:$0xff] %vm997, %v980
        %v1014 = vld [vmem:[#allocation2] sm:$0xf]
        %v1015 = vld [vmem:[#allocation2 + $0x4] sm:$0xf]
        %v1016 = vld [vmem:[#allocation2 + $0x8] sm:$0x1]
        %v1017 = vld [vmem:[#allocation2 + $0xc] sm:$0xf]
        %v1018 = vld [vmem:[#allocation2 + $0x10] sm:$0xf]
        %v1019 = vld [vmem:[#allocation2 + $0x14] sm:$0x1]
        %v1020 = vld [vmem:[#allocation2 + $0x18] sm:$0xf]
        %v1021 = vld [vmem:[#allocation2 + $0x1c] sm:$0xf]
        %v1022 = vld [vmem:[#allocation2 + $0x20] sm:$0x1]
        %v1023 = vld [vmem:[#allocation2 + $0x24] sm:$0xf]
        %v1024 = vld [vmem:[#allocation2 + $0x28] sm:$0xf]
        %v1025 = vld [vmem:[#allocation2 + $0x2c] sm:$0x1]
        %v1026 = vld [vmem:[#allocation2 + $0x30] sm:$0xf]
        %v1027 = vld [vmem:[#allocation2 + $0x34] sm:$0xf]
        %v1028 = vld [vmem:[#allocation2 + $0x38] sm:$0x1]
        %v1029 = vld [vmem:[#allocation2 + $0x3c] sm:$0xf]
        %v1030 = vld [vmem:[#allocation2 + $0x40] sm:$0xf]
        %v1031 = vld [vmem:[#allocation2 + $0x44] sm:$0x1]
        %v1032 = vld [vmem:[#allocation2 + $0x48] sm:$0xf]
        %v1033 = vld [vmem:[#allocation2 + $0x4c] sm:$0xf]
        %v1034 = vld [vmem:[#allocation2 + $0x50] sm:$0x1]
        %v1035 = vld [vmem:[#allocation2 + $0x54] sm:$0xf]
        %v1036 = vld [vmem:[#allocation2 + $0x58] sm:$0xf]
        %v1037 = vld [vmem:[#allocation2 + $0x5c] sm:$0x1]
        %v1038 = vld [vmem:[#allocation2 + $0x60] sm:$0xf]
        %v1039 = vld [vmem:[#allocation2 + $0x64] sm:$0xf]
        %v1040 = vld [vmem:[#allocation2 + $0x68] sm:$0x1]
        %v1041 = vld [vmem:[#allocation2 + $0x6c] sm:$0xf]
        %v1042 = vld [vmem:[#allocation2 + $0x70] sm:$0xf]
        %v1043 = vld [vmem:[#allocation2 + $0x74] sm:$0x1]
        %v1044 = vld [vmem:[#allocation2 + $0x78] sm:$0xf]
        %v1045 = vld [vmem:[#allocation2 + $0x7c] sm:$0xf]
        %v1046 = vld [vmem:[#allocation2 + $0x80] sm:$0x1]
        %v1047 = vld [vmem:[#allocation2 + $0x84] sm:$0xf]
        %v1048 = vld [vmem:[#allocation2 + $0x88] sm:$0xf]
        %v1049 = vld [vmem:[#allocation2 + $0x8c] sm:$0x1]
        %v1050 = vld [vmem:[#allocation2 + $0x90] sm:$0xf]
        %v1051 = vld [vmem:[#allocation2 + $0x94] sm:$0xf]
        %v1052 = vld [vmem:[#allocation2 + $0x98] sm:$0x1]
        %v1053 = vld [vmem:[#allocation2 + $0x9c] sm:$0xf]
        %v1054 = vld [vmem:[#allocation2 + $0xa0] sm:$0xf]
        %v1055 = vld [vmem:[#allocation2 + $0xa4] sm:$0x1]
        %v1056 = vld [vmem:[#allocation2 + $0xa8] sm:$0xf]
        %v1057 = vld [vmem:[#allocation2 + $0xac] sm:$0xf]
        %v1058 = vld [vmem:[#allocation2 + $0xb0] sm:$0x1]
        %v1059 = vld [vmem:[#allocation2 + $0xb4] sm:$0xf]
        %v1060 = vld [vmem:[#allocation2 + $0xb8] sm:$0xf]
        %v1061 = vld [vmem:[#allocation2 + $0xbc] sm:$0x1]
        %v1110 = vunpack.c.l.b16 %v1014
        %v1111 = vunpack.c.l.b16 %v1015
        %v1112 = vunpack.c.l.b16 %v1016
        %v1113 = vunpack.c.l.b16 %v1017
        %v1114 = vunpack.c.l.b16 %v1018
        %v1115 = vunpack.c.l.b16 %v1019
        %v1116 = vunpack.c.l.b16 %v1020
        %v1117 = vunpack.c.l.b16 %v1021
        %v1118 = vunpack.c.l.b16 %v1022
        %v1119 = vunpack.c.l.b16 %v1023
        %v1120 = vunpack.c.l.b16 %v1024
        %v1121 = vunpack.c.l.b16 %v1025
        %v1122 = vunpack.c.l.b16 %v1026
        %v1123 = vunpack.c.l.b16 %v1027
        %v1124 = vunpack.c.l.b16 %v1028
        %v1125 = vunpack.c.l.b16 %v1029
        %v1126 = vunpack.c.l.b16 %v1030
        %v1127 = vunpack.c.l.b16 %v1031
        %v1128 = vunpack.c.l.b16 %v1032
        %v1129 = vunpack.c.l.b16 %v1033
        %v1130 = vunpack.c.l.b16 %v1034
        %v1131 = vunpack.c.l.b16 %v1035
        %v1132 = vunpack.c.l.b16 %v1036
        %v1133 = vunpack.c.l.b16 %v1037
        %v1134 = vunpack.c.l.b16 %v1038
        %v1135 = vunpack.c.l.b16 %v1039
        %v1136 = vunpack.c.l.b16 %v1040
        %v1137 = vunpack.c.l.b16 %v1041
        %v1138 = vunpack.c.l.b16 %v1042
        %v1139 = vunpack.c.l.b16 %v1043
        %v1140 = vunpack.c.l.b16 %v1044
        %v1141 = vunpack.c.l.b16 %v1045
        %v1142 = vunpack.c.l.b16 %v1046
        %v1143 = vunpack.c.l.b16 %v1047
        %v1144 = vunpack.c.l.b16 %v1048
        %v1145 = vunpack.c.l.b16 %v1049
        %v1146 = vunpack.c.l.b16 %v1050
        %v1147 = vunpack.c.l.b16 %v1051
        %v1148 = vunpack.c.l.b16 %v1052
        %v1149 = vunpack.c.l.b16 %v1053
        %v1150 = vunpack.c.l.b16 %v1054
        %v1151 = vunpack.c.l.b16 %v1055
        %v1152 = vunpack.c.l.b16 %v1056
        %v1153 = vunpack.c.l.b16 %v1057
        %v1154 = vunpack.c.l.b16 %v1058
        %v1155 = vunpack.c.l.b16 %v1059
        %v1156 = vunpack.c.l.b16 %v1060
        %v1157 = vunpack.c.l.b16 %v1061
        %v1158 = vpack.c.b16 %v1111, %v1110
        %v1159 = vpack.c.b16 %v1112, %v1112
        %v1160 = vpack.c.b16 %v1114, %v1113
        %v1161 = vpack.c.b16 %v1115, %v1115
        %v1162 = vpack.c.b16 %v1117, %v1116
        %v1163 = vpack.c.b16 %v1118, %v1118
        %v1164 = vpack.c.b16 %v1120, %v1119
        %v1165 = vpack.c.b16 %v1121, %v1121
        %v1166 = vpack.c.b16 %v1123, %v1122
        %v1167 = vpack.c.b16 %v1124, %v1124
        %v1168 = vpack.c.b16 %v1126, %v1125
        %v1169 = vpack.c.b16 %v1127, %v1127
        %v1170 = vpack.c.b16 %v1129, %v1128
        %v1171 = vpack.c.b16 %v1130, %v1130
        %v1172 = vpack.c.b16 %v1132, %v1131
        %v1173 = vpack.c.b16 %v1133, %v1133
        %v1174 = vpack.c.b16 %v1135, %v1134
        %v1175 = vpack.c.b16 %v1136, %v1136
        %v1176 = vpack.c.b16 %v1138, %v1137
        %v1177 = vpack.c.b16 %v1139, %v1139
        %v1178 = vpack.c.b16 %v1141, %v1140
        %v1179 = vpack.c.b16 %v1142, %v1142
        %v1180 = vpack.c.b16 %v1144, %v1143
        %v1181 = vpack.c.b16 %v1145, %v1145
        %v1182 = vpack.c.b16 %v1147, %v1146
        %v1183 = vpack.c.b16 %v1148, %v1148
        %v1184 = vpack.c.b16 %v1150, %v1149
        %v1185 = vpack.c.b16 %v1151, %v1151
        %v1186 = vpack.c.b16 %v1153, %v1152
        %v1187 = vpack.c.b16 %v1154, %v1154
        %v1188 = vpack.c.b16 %v1156, %v1155
        %v1189 = vpack.c.b16 %v1157, %v1157
        %vm1190 = vsmask.f32 7424
        %v1192 = vshrl.u32 %v1158, 16
        %v1194 = vshll.u32 %v1158, 16
        %v1196 = vrot.slane %v1194, 1
        %v1197 = vor.u32 %v1192, %v1196
        %v1199 = vshll.u32 %v1159, 16
        %v1201 = vrot.slane %v1199, 1
        %v1202 = vsel %vm1190, %v1197, %v1201
        %v1204 = vshrl.u32 %v1160, 16
        %v1206 = vshll.u32 %v1160, 16
        %v1208 = vrot.slane %v1206, 1
        %v1209 = vor.u32 %v1204, %v1208
        %v1211 = vshll.u32 %v1161, 16
        %v1213 = vrot.slane %v1211, 1
        %v1214 = vsel %vm1190, %v1209, %v1213
        %v1216 = vshrl.u32 %v1162, 16
        %v1218 = vshll.u32 %v1162, 16
        %v1220 = vrot.slane %v1218, 1
        %v1221 = vor.u32 %v1216, %v1220
        %v1223 = vshll.u32 %v1163, 16
        %v1225 = vrot.slane %v1223, 1
        %v1226 = vsel %vm1190, %v1221, %v1225
        %v1228 = vshrl.u32 %v1164, 16
        %v1230 = vshll.u32 %v1164, 16
        %v1232 = vrot.slane %v1230, 1
        %v1233 = vor.u32 %v1228, %v1232
        %v1235 = vshll.u32 %v1165, 16
        %v1237 = vrot.slane %v1235, 1
        %v1238 = vsel %vm1190, %v1233, %v1237
        %v1240 = vshrl.u32 %v1166, 16
        %v1242 = vshll.u32 %v1166, 16
        %v1244 = vrot.slane %v1242, 1
        %v1245 = vor.u32 %v1240, %v1244
        %v1247 = vshll.u32 %v1167, 16
        %v1249 = vrot.slane %v1247, 1
        %v1250 = vsel %vm1190, %v1245, %v1249
        %v1252 = vshrl.u32 %v1168, 16
        %v1254 = vshll.u32 %v1168, 16
        %v1256 = vrot.slane %v1254, 1
        %v1257 = vor.u32 %v1252, %v1256
        %v1259 = vshll.u32 %v1169, 16
        %v1261 = vrot.slane %v1259, 1
        %v1262 = vsel %vm1190, %v1257, %v1261
        %v1264 = vshrl.u32 %v1170, 16
        %v1266 = vshll.u32 %v1170, 16
        %v1268 = vrot.slane %v1266, 1
        %v1269 = vor.u32 %v1264, %v1268
        %v1271 = vshll.u32 %v1171, 16
        %v1273 = vrot.slane %v1271, 1
        %v1274 = vsel %vm1190, %v1269, %v1273
        %v1276 = vshrl.u32 %v1172, 16
        %v1278 = vshll.u32 %v1172, 16
        %v1280 = vrot.slane %v1278, 1
        %v1281 = vor.u32 %v1276, %v1280
        %v1283 = vshll.u32 %v1173, 16
        %v1285 = vrot.slane %v1283, 1
        %v1286 = vsel %vm1190, %v1281, %v1285
        %v1288 = vshrl.u32 %v1174, 16
        %v1290 = vshll.u32 %v1174, 16
        %v1292 = vrot.slane %v1290, 1
        %v1293 = vor.u32 %v1288, %v1292
        %v1295 = vshll.u32 %v1175, 16
        %v1297 = vrot.slane %v1295, 1
        %v1298 = vsel %vm1190, %v1293, %v1297
        %v1300 = vshrl.u32 %v1176, 16
        %v1302 = vshll.u32 %v1176, 16
        %v1304 = vrot.slane %v1302, 1
        %v1305 = vor.u32 %v1300, %v1304
        %v1307 = vshll.u32 %v1177, 16
        %v1309 = vrot.slane %v1307, 1
        %v1310 = vsel %vm1190, %v1305, %v1309
        %v1312 = vshrl.u32 %v1178, 16
        %v1314 = vshll.u32 %v1178, 16
        %v1316 = vrot.slane %v1314, 1
        %v1317 = vor.u32 %v1312, %v1316
        %v1319 = vshll.u32 %v1179, 16
        %v1321 = vrot.slane %v1319, 1
        %v1322 = vsel %vm1190, %v1317, %v1321
        %v1324 = vshrl.u32 %v1180, 16
        %v1326 = vshll.u32 %v1180, 16
        %v1328 = vrot.slane %v1326, 1
        %v1329 = vor.u32 %v1324, %v1328
        %v1331 = vshll.u32 %v1181, 16
        %v1333 = vrot.slane %v1331, 1
        %v1334 = vsel %vm1190, %v1329, %v1333
        %v1336 = vshrl.u32 %v1182, 16
        %v1338 = vshll.u32 %v1182, 16
        %v1340 = vrot.slane %v1338, 1
        %v1341 = vor.u32 %v1336, %v1340
        %v1343 = vshll.u32 %v1183, 16
        %v1345 = vrot.slane %v1343, 1
        %v1346 = vsel %vm1190, %v1341, %v1345
        %v1348 = vshrl.u32 %v1184, 16
        %v1350 = vshll.u32 %v1184, 16
        %v1352 = vrot.slane %v1350, 1
        %v1353 = vor.u32 %v1348, %v1352
        %v1355 = vshll.u32 %v1185, 16
        %v1357 = vrot.slane %v1355, 1
        %v1358 = vsel %vm1190, %v1353, %v1357
        %v1360 = vshrl.u32 %v1186, 16
        %v1362 = vshll.u32 %v1186, 16
        %v1364 = vrot.slane %v1362, 1
        %v1365 = vor.u32 %v1360, %v1364
        %v1367 = vshll.u32 %v1187, 16
        %v1369 = vrot.slane %v1367, 1
        %v1370 = vsel %vm1190, %v1365, %v1369
        %v1372 = vshrl.u32 %v1188, 16
        %v1374 = vshll.u32 %v1188, 16
        %v1376 = vrot.slane %v1374, 1
        %v1377 = vor.u32 %v1372, %v1376
        %v1379 = vshll.u32 %v1189, 16
        %v1381 = vrot.slane %v1379, 1
        %v1382 = vsel %vm1190, %v1377, %v1381
        %1383 = vrot.lane.b32.xlu0 %v1202, 8
        %v1384 = vpop.permute.xlu0 %1383
        %1385 = vrot.lane.b32.xlu0 %v1214, 8
        %v1386 = vpop.permute.xlu0 %1385
        %1387 = vrot.lane.b32.xlu0 %v1226, 8
        %v1388 = vpop.permute.xlu0 %1387
        %1389 = vrot.lane.b32.xlu0 %v1238, 8
        %v1390 = vpop.permute.xlu0 %1389
        %1391 = vrot.lane.b32.xlu0 %v1250, 8
        %v1392 = vpop.permute.xlu0 %1391
        %1393 = vrot.lane.b32.xlu0 %v1262, 8
        %v1394 = vpop.permute.xlu0 %1393
        %1395 = vrot.lane.b32.xlu0 %v1274, 8
        %v1396 = vpop.permute.xlu0 %1395
        %1397 = vrot.lane.b32.xlu0 %v1286, 8
        %v1398 = vpop.permute.xlu0 %1397
        %1399 = vrot.lane.b32.xlu0 %v1298, 8
        %v1400 = vpop.permute.xlu0 %1399
        %1401 = vrot.lane.b32.xlu0 %v1310, 8
        %v1402 = vpop.permute.xlu0 %1401
        %1403 = vrot.lane.b32.xlu0 %v1322, 8
        %v1404 = vpop.permute.xlu0 %1403
        %1405 = vrot.lane.b32.xlu0 %v1334, 8
        %v1406 = vpop.permute.xlu0 %1405
        %1407 = vrot.lane.b32.xlu0 %v1346, 8
        %v1408 = vpop.permute.xlu0 %1407
        %1409 = vrot.lane.b32.xlu0 %v1358, 8
        %v1410 = vpop.permute.xlu0 %1409
        %1411 = vrot.lane.b32.xlu0 %v1370, 8
        %v1412 = vpop.permute.xlu0 %1411
        %1413 = vrot.lane.b32.xlu0 %v1382, 8
        %v1414 = vpop.permute.xlu0 %1413
        %vm1431 = vcmask 130112
        %1432 = vst.msk [vmem:[#allocation3] sm:$0xff] %vm1431, %v1384
        %1433 = vst.msk [vmem:[#allocation3 + $0x8] sm:$0xff] %vm1431, %v1386
        %1434 = vst.msk [vmem:[#allocation3 + $0x10] sm:$0xff] %vm1431, %v1388
        %1435 = vst.msk [vmem:[#allocation3 + $0x18] sm:$0xff] %vm1431, %v1390
        %1436 = vst.msk [vmem:[#allocation3 + $0x20] sm:$0xff] %vm1431, %v1392
        %1437 = vst.msk [vmem:[#allocation3 + $0x28] sm:$0xff] %vm1431, %v1394
        %1438 = vst.msk [vmem:[#allocation3 + $0x30] sm:$0xff] %vm1431, %v1396
        %1439 = vst.msk [vmem:[#allocation3 + $0x38] sm:$0xff] %vm1431, %v1398
        %1440 = vst.msk [vmem:[#allocation3 + $0x40] sm:$0xff] %vm1431, %v1400
        %1441 = vst.msk [vmem:[#allocation3 + $0x48] sm:$0xff] %vm1431, %v1402
        %1442 = vst.msk [vmem:[#allocation3 + $0x50] sm:$0xff] %vm1431, %v1404
        %1443 = vst.msk [vmem:[#allocation3 + $0x58] sm:$0xff] %vm1431, %v1406
        %1444 = vst.msk [vmem:[#allocation3 + $0x60] sm:$0xff] %vm1431, %v1408
        %1445 = vst.msk [vmem:[#allocation3 + $0x68] sm:$0xff] %vm1431, %v1410
        %1446 = vst.msk [vmem:[#allocation3 + $0x70] sm:$0xff] %vm1431, %v1412
        %1447 = vst.msk [vmem:[#allocation3 + $0x78] sm:$0xff] %vm1431, %v1414
        %v1448 = vld [vmem:[#allocation2] sm:$0xe]
        %v1449 = vld [vmem:[#allocation2 + $0x4] sm:$0xf]
        %v1450 = vld [vmem:[#allocation2 + $0x8] sm:$0x1]
        %v1451 = vld [vmem:[#allocation2 + $0xc] sm:$0xe]
        %v1452 = vld [vmem:[#allocation2 + $0x10] sm:$0xf]
        %v1453 = vld [vmem:[#allocation2 + $0x14] sm:$0x1]
        %v1454 = vld [vmem:[#allocation2 + $0x18] sm:$0xe]
        %v1455 = vld [vmem:[#allocation2 + $0x1c] sm:$0xf]
        %v1456 = vld [vmem:[#allocation2 + $0x20] sm:$0x1]
        %v1457 = vld [vmem:[#allocation2 + $0x24] sm:$0xe]
        %v1458 = vld [vmem:[#allocation2 + $0x28] sm:$0xf]
        %v1459 = vld [vmem:[#allocation2 + $0x2c] sm:$0x1]
        %v1460 = vld [vmem:[#allocation2 + $0x30] sm:$0xe]
        %v1461 = vld [vmem:[#allocation2 + $0x34] sm:$0xf]
        %v1462 = vld [vmem:[#allocation2 + $0x38] sm:$0x1]
        %v1463 = vld [vmem:[#allocation2 + $0x3c] sm:$0xe]
        %v1464 = vld [vmem:[#allocation2 + $0x40] sm:$0xf]
        %v1465 = vld [vmem:[#allocation2 + $0x44] sm:$0x1]
        %v1466 = vld [vmem:[#allocation2 + $0x48] sm:$0xe]
        %v1467 = vld [vmem:[#allocation2 + $0x4c] sm:$0xf]
        %v1468 = vld [vmem:[#allocation2 + $0x50] sm:$0x1]
        %v1469 = vld [vmem:[#allocation2 + $0x54] sm:$0xe]
        %v1470 = vld [vmem:[#allocation2 + $0x58] sm:$0xf]
        %v1471 = vld [vmem:[#allocation2 + $0x5c] sm:$0x1]
        %v1472 = vld [vmem:[#allocation2 + $0x60] sm:$0xe]
        %v1473 = vld [vmem:[#allocation2 + $0x64] sm:$0xf]
        %v1474 = vld [vmem:[#allocation2 + $0x68] sm:$0x1]
        %v1475 = vld [vmem:[#allocation2 + $0x6c] sm:$0xe]
        %v1476 = vld [vmem:[#allocation2 + $0x70] sm:$0xf]
        %v1477 = vld [vmem:[#allocation2 + $0x74] sm:$0x1]
        %v1478 = vld [vmem:[#allocation2 + $0x78] sm:$0xe]
        %v1479 = vld [vmem:[#allocation2 + $0x7c] sm:$0xf]
        %v1480 = vld [vmem:[#allocation2 + $0x80] sm:$0x1]
        %v1481 = vld [vmem:[#allocation2 + $0x84] sm:$0xe]
        %v1482 = vld [vmem:[#allocation2 + $0x88] sm:$0xf]
        %v1483 = vld [vmem:[#allocation2 + $0x8c] sm:$0x1]
        %v1484 = vld [vmem:[#allocation2 + $0x90] sm:$0xe]
        %v1485 = vld [vmem:[#allocation2 + $0x94] sm:$0xf]
        %v1486 = vld [vmem:[#allocation2 + $0x98] sm:$0x1]
        %v1487 = vld [vmem:[#allocation2 + $0x9c] sm:$0xe]
        %v1488 = vld [vmem:[#allocation2 + $0xa0] sm:$0xf]
        %v1489 = vld [vmem:[#allocation2 + $0xa4] sm:$0x1]
        %v1490 = vld [vmem:[#allocation2 + $0xa8] sm:$0xe]
        %v1491 = vld [vmem:[#allocation2 + $0xac] sm:$0xf]
        %v1492 = vld [vmem:[#allocation2 + $0xb0] sm:$0x1]
        %v1493 = vld [vmem:[#allocation2 + $0xb4] sm:$0xe]
        %v1494 = vld [vmem:[#allocation2 + $0xb8] sm:$0xf]
        %v1495 = vld [vmem:[#allocation2 + $0xbc] sm:$0x1]
        %v1544 = vunpack.c.l.b16 %v1448
        %v1545 = vunpack.c.l.b16 %v1449
        %v1546 = vunpack.c.l.b16 %v1450
        %v1547 = vunpack.c.l.b16 %v1451
        %v1548 = vunpack.c.l.b16 %v1452
        %v1549 = vunpack.c.l.b16 %v1453
        %v1550 = vunpack.c.l.b16 %v1454
        %v1551 = vunpack.c.l.b16 %v1455
        %v1552 = vunpack.c.l.b16 %v1456
        %v1553 = vunpack.c.l.b16 %v1457
        %v1554 = vunpack.c.l.b16 %v1458
        %v1555 = vunpack.c.l.b16 %v1459
        %v1556 = vunpack.c.l.b16 %v1460
        %v1557 = vunpack.c.l.b16 %v1461
        %v1558 = vunpack.c.l.b16 %v1462
        %v1559 = vunpack.c.l.b16 %v1463
        %v1560 = vunpack.c.l.b16 %v1464
        %v1561 = vunpack.c.l.b16 %v1465
        %v1562 = vunpack.c.l.b16 %v1466
        %v1563 = vunpack.c.l.b16 %v1467
        %v1564 = vunpack.c.l.b16 %v1468
        %v1565 = vunpack.c.l.b16 %v1469
        %v1566 = vunpack.c.l.b16 %v1470
        %v1567 = vunpack.c.l.b16 %v1471
        %v1568 = vunpack.c.l.b16 %v1472
        %v1569 = vunpack.c.l.b16 %v1473
        %v1570 = vunpack.c.l.b16 %v1474
        %v1571 = vunpack.c.l.b16 %v1475
        %v1572 = vunpack.c.l.b16 %v1476
        %v1573 = vunpack.c.l.b16 %v1477
        %v1574 = vunpack.c.l.b16 %v1478
        %v1575 = vunpack.c.l.b16 %v1479
        %v1576 = vunpack.c.l.b16 %v1480
        %v1577 = vunpack.c.l.b16 %v1481
        %v1578 = vunpack.c.l.b16 %v1482
        %v1579 = vunpack.c.l.b16 %v1483
        %v1580 = vunpack.c.l.b16 %v1484
        %v1581 = vunpack.c.l.b16 %v1485
        %v1582 = vunpack.c.l.b16 %v1486
        %v1583 = vunpack.c.l.b16 %v1487
        %v1584 = vunpack.c.l.b16 %v1488
        %v1585 = vunpack.c.l.b16 %v1489
        %v1586 = vunpack.c.l.b16 %v1490
        %v1587 = vunpack.c.l.b16 %v1491
        %v1588 = vunpack.c.l.b16 %v1492
        %v1589 = vunpack.c.l.b16 %v1493
        %v1590 = vunpack.c.l.b16 %v1494
        %v1591 = vunpack.c.l.b16 %v1495
        %v1592 = vpack.c.b16 %v1545, %v1544
        %v1593 = vpack.c.b16 %v1546, %v1546
        %v1594 = vpack.c.b16 %v1548, %v1547
        %v1595 = vpack.c.b16 %v1549, %v1549
        %v1596 = vpack.c.b16 %v1551, %v1550
        %v1597 = vpack.c.b16 %v1552, %v1552
        %v1598 = vpack.c.b16 %v1554, %v1553
        %v1599 = vpack.c.b16 %v1555, %v1555
        %v1600 = vpack.c.b16 %v1557, %v1556
        %v1601 = vpack.c.b16 %v1558, %v1558
        %v1602 = vpack.c.b16 %v1560, %v1559
        %v1603 = vpack.c.b16 %v1561, %v1561
        %v1604 = vpack.c.b16 %v1563, %v1562
        %v1605 = vpack.c.b16 %v1564, %v1564
        %v1606 = vpack.c.b16 %v1566, %v1565
        %v1607 = vpack.c.b16 %v1567, %v1567
        %v1608 = vpack.c.b16 %v1569, %v1568
        %v1609 = vpack.c.b16 %v1570, %v1570
        %v1610 = vpack.c.b16 %v1572, %v1571
        %v1611 = vpack.c.b16 %v1573, %v1573
        %v1612 = vpack.c.b16 %v1575, %v1574
        %v1613 = vpack.c.b16 %v1576, %v1576
        %v1614 = vpack.c.b16 %v1578, %v1577
        %v1615 = vpack.c.b16 %v1579, %v1579
        %v1616 = vpack.c.b16 %v1581, %v1580
        %v1617 = vpack.c.b16 %v1582, %v1582
        %v1618 = vpack.c.b16 %v1584, %v1583
        %v1619 = vpack.c.b16 %v1585, %v1585
        %v1620 = vpack.c.b16 %v1587, %v1586
        %v1621 = vpack.c.b16 %v1588, %v1588
        %v1622 = vpack.c.b16 %v1590, %v1589
        %v1623 = vpack.c.b16 %v1591, %v1591
        %vm1624 = vcmask 1046528
        %v1625 = vrot.slane %v1592, 1
        %v1626 = vrot.slane %v1593, 1
        %v1627 = vsel %vm1624, %v1625, %v1626
        %v1628 = vrot.slane %v1594, 1
        %v1629 = vrot.slane %v1595, 1
        %v1630 = vsel %vm1624, %v1628, %v1629
        %v1631 = vrot.slane %v1596, 1
        %v1632 = vrot.slane %v1597, 1
        %v1633 = vsel %vm1624, %v1631, %v1632
        %v1634 = vrot.slane %v1598, 1
        %v1635 = vrot.slane %v1599, 1
        %v1636 = vsel %vm1624, %v1634, %v1635
        %v1637 = vrot.slane %v1600, 1
        %v1638 = vrot.slane %v1601, 1
        %v1639 = vsel %vm1624, %v1637, %v1638
        %v1640 = vrot.slane %v1602, 1
        %v1641 = vrot.slane %v1603, 1
        %v1642 = vsel %vm1624, %v1640, %v1641
        %v1643 = vrot.slane %v1604, 1
        %v1644 = vrot.slane %v1605, 1
        %v1645 = vsel %vm1624, %v1643, %v1644
        %v1646 = vrot.slane %v1606, 1
        %v1647 = vrot.slane %v1607, 1
        %v1648 = vsel %vm1624, %v1646, %v1647
        %v1649 = vrot.slane %v1608, 1
        %v1650 = vrot.slane %v1609, 1
        %v1651 = vsel %vm1624, %v1649, %v1650
        %v1652 = vrot.slane %v1610, 1
        %v1653 = vrot.slane %v1611, 1
        %v1654 = vsel %vm1624, %v1652, %v1653
        %v1655 = vrot.slane %v1612, 1
        %v1656 = vrot.slane %v1613, 1
        %v1657 = vsel %vm1624, %v1655, %v1656
        %v1658 = vrot.slane %v1614, 1
        %v1659 = vrot.slane %v1615, 1
        %v1660 = vsel %vm1624, %v1658, %v1659
        %v1661 = vrot.slane %v1616, 1
        %v1662 = vrot.slane %v1617, 1
        %v1663 = vsel %vm1624, %v1661, %v1662
        %v1664 = vrot.slane %v1618, 1
        %v1665 = vrot.slane %v1619, 1
        %v1666 = vsel %vm1624, %v1664, %v1665
        %v1667 = vrot.slane %v1620, 1
        %v1668 = vrot.slane %v1621, 1
        %v1669 = vsel %vm1624, %v1667, %v1668
        %v1670 = vrot.slane %v1622, 1
        %v1671 = vrot.slane %v1623, 1
        %v1672 = vsel %vm1624, %v1670, %v1671
        %1673 = vrot.lane.b32.xlu0 %v1627, 16
        %v1674 = vpop.permute.xlu0 %1673
        %1675 = vrot.lane.b32.xlu0 %v1630, 16
        %v1676 = vpop.permute.xlu0 %1675
        %1677 = vrot.lane.b32.xlu0 %v1633, 16
        %v1678 = vpop.permute.xlu0 %1677
        %1679 = vrot.lane.b32.xlu0 %v1636, 16
        %v1680 = vpop.permute.xlu0 %1679
        %1681 = vrot.lane.b32.xlu0 %v1639, 16
        %v1682 = vpop.permute.xlu0 %1681
        %1683 = vrot.lane.b32.xlu0 %v1642, 16
        %v1684 = vpop.permute.xlu0 %1683
        %1685 = vrot.lane.b32.xlu0 %v1645, 16
        %v1686 = vpop.permute.xlu0 %1685
        %1687 = vrot.lane.b32.xlu0 %v1648, 16
        %v1688 = vpop.permute.xlu0 %1687
        %1689 = vrot.lane.b32.xlu0 %v1651, 16
        %v1690 = vpop.permute.xlu0 %1689
        %1691 = vrot.lane.b32.xlu0 %v1654, 16
        %v1692 = vpop.permute.xlu0 %1691
        %1693 = vrot.lane.b32.xlu0 %v1657, 16
        %v1694 = vpop.permute.xlu0 %1693
        %1695 = vrot.lane.b32.xlu0 %v1660, 16
        %v1696 = vpop.permute.xlu0 %1695
        %1697 = vrot.lane.b32.xlu0 %v1663, 16
        %v1698 = vpop.permute.xlu0 %1697
        %1699 = vrot.lane.b32.xlu0 %v1666, 16
        %v1700 = vpop.permute.xlu0 %1699
        %1701 = vrot.lane.b32.xlu0 %v1669, 16
        %v1702 = vpop.permute.xlu0 %1701
        %1703 = vrot.lane.b32.xlu0 %v1672, 16
        %v1704 = vpop.permute.xlu0 %1703
        %vm1721 = vcmask 195712
        %1722 = vst.msk [vmem:[#allocation3] sm:$0xff] %vm1721, %v1674
        %1723 = vst.msk [vmem:[#allocation3 + $0x8] sm:$0xff] %vm1721, %v1676
        %1724 = vst.msk [vmem:[#allocation3 + $0x10] sm:$0xff] %vm1721, %v1678
        %1725 = vst.msk [vmem:[#allocation3 + $0x18] sm:$0xff] %vm1721, %v1680
        %1726 = vst.msk [vmem:[#allocation3 + $0x20] sm:$0xff] %vm1721, %v1682
        %1727 = vst.msk [vmem:[#allocation3 + $0x28] sm:$0xff] %vm1721, %v1684
        %1728 = vst.msk [vmem:[#allocation3 + $0x30] sm:$0xff] %vm1721, %v1686
        %1729 = vst.msk [vmem:[#allocation3 + $0x38] sm:$0xff] %vm1721, %v1688
        %1730 = vst.msk [vmem:[#allocation3 + $0x40] sm:$0xff] %vm1721, %v1690
        %1731 = vst.msk [vmem:[#allocation3 + $0x48] sm:$0xff] %vm1721, %v1692
        %1732 = vst.msk [vmem:[#allocation3 + $0x50] sm:$0xff] %vm1721, %v1694
        %1733 = vst.msk [vmem:[#allocation3 + $0x58] sm:$0xff] %vm1721, %v1696
        %1734 = vst.msk [vmem:[#allocation3 + $0x60] sm:$0xff] %vm1721, %v1698
        %1735 = vst.msk [vmem:[#allocation3 + $0x68] sm:$0xff] %vm1721, %v1700
        %1736 = vst.msk [vmem:[#allocation3 + $0x70] sm:$0xff] %vm1721, %v1702
        %1737 = vst.msk [vmem:[#allocation3 + $0x78] sm:$0xff] %vm1721, %v1704
        %v1738 = vld [vmem:[%s751] sm:$0xf]
        %v1739 = vld [vmem:[%s751 + $0x4] sm:$0xf]
        %v1740 = vld [vmem:[%s751 + $0xc] sm:$0xf]
        %v1741 = vld [vmem:[%s751 + $0x10] sm:$0xf]
        %v1742 = vld [vmem:[%s751 + $0x18] sm:$0xf]
        %v1743 = vld [vmem:[%s751 + $0x1c] sm:$0xf]
        %v1744 = vld [vmem:[%s751 + $0x24] sm:$0xf]
        %v1745 = vld [vmem:[%s751 + $0x28] sm:$0xf]
        %v1746 = vld [vmem:[%s751 + $0x30] sm:$0xf]
        %v1747 = vld [vmem:[%s751 + $0x34] sm:$0xf]
        %v1748 = vld [vmem:[%s751 + $0x3c] sm:$0xf]
        %v1749 = vld [vmem:[%s751 + $0x40] sm:$0xf]
        %v1750 = vld [vmem:[%s751 + $0x48] sm:$0xf]
        %v1751 = vld [vmem:[%s751 + $0x4c] sm:$0xf]
        %v1752 = vld [vmem:[%s751 + $0x54] sm:$0xf]
        %v1753 = vld [vmem:[%s751 + $0x58] sm:$0xf]
        %v1754 = vld [vmem:[%s751 + $0x60] sm:$0xf]
        %v1755 = vld [vmem:[%s751 + $0x64] sm:$0xf]
        %v1756 = vld [vmem:[%s751 + $0x6c] sm:$0xf]
        %v1757 = vld [vmem:[%s751 + $0x70] sm:$0xf]
        %v1758 = vld [vmem:[%s751 + $0x78] sm:$0xf]
        %v1759 = vld [vmem:[%s751 + $0x7c] sm:$0xf]
        %v1760 = vld [vmem:[%s751 + $0x84] sm:$0xf]
        %v1761 = vld [vmem:[%s751 + $0x88] sm:$0xf]
        %v1762 = vld [vmem:[%s751 + $0x90] sm:$0xf]
        %v1763 = vld [vmem:[%s751 + $0x94] sm:$0xf]
        %v1764 = vld [vmem:[%s751 + $0x9c] sm:$0xf]
        %v1765 = vld [vmem:[%s751 + $0xa0] sm:$0xf]
        %v1766 = vld [vmem:[%s751 + $0xa8] sm:$0xf]
        %v1767 = vld [vmem:[%s751 + $0xac] sm:$0xf]
        %v1768 = vld [vmem:[%s751 + $0xb4] sm:$0xf]
        %v1769 = vld [vmem:[%s751 + $0xb8] sm:$0xf]
        %v1802 = vunpack.c.l.b16 %v1738
        %v1803 = vunpack.c.l.b16 %v1739
        %v1804 = vunpack.c.l.b16 %v1740
        %v1805 = vunpack.c.l.b16 %v1741
        %v1806 = vunpack.c.l.b16 %v1742
        %v1807 = vunpack.c.l.b16 %v1743
        %v1808 = vunpack.c.l.b16 %v1744
        %v1809 = vunpack.c.l.b16 %v1745
        %v1810 = vunpack.c.l.b16 %v1746
        %v1811 = vunpack.c.l.b16 %v1747
        %v1812 = vunpack.c.l.b16 %v1748
        %v1813 = vunpack.c.l.b16 %v1749
        %v1814 = vunpack.c.l.b16 %v1750
        %v1815 = vunpack.c.l.b16 %v1751
        %v1816 = vunpack.c.l.b16 %v1752
        %v1817 = vunpack.c.l.b16 %v1753
        %v1818 = vunpack.c.l.b16 %v1754
        %v1819 = vunpack.c.l.b16 %v1755
        %v1820 = vunpack.c.l.b16 %v1756
        %v1821 = vunpack.c.l.b16 %v1757
        %v1822 = vunpack.c.l.b16 %v1758
        %v1823 = vunpack.c.l.b16 %v1759
        %v1824 = vunpack.c.l.b16 %v1760
        %v1825 = vunpack.c.l.b16 %v1761
        %v1826 = vunpack.c.l.b16 %v1762
        %v1827 = vunpack.c.l.b16 %v1763
        %v1828 = vunpack.c.l.b16 %v1764
        %v1829 = vunpack.c.l.b16 %v1765
        %v1830 = vunpack.c.l.b16 %v1766
        %v1831 = vunpack.c.l.b16 %v1767
        %v1832 = vunpack.c.l.b16 %v1768
        %v1833 = vunpack.c.l.b16 %v1769
        %v1834 = vpack.c.b16 %v1803, %v1802
        %v1835 = vpack.c.b16 %v1805, %v1804
        %v1836 = vpack.c.b16 %v1807, %v1806
        %v1837 = vpack.c.b16 %v1809, %v1808
        %v1838 = vpack.c.b16 %v1811, %v1810
        %v1839 = vpack.c.b16 %v1813, %v1812
        %v1840 = vpack.c.b16 %v1815, %v1814
        %v1841 = vpack.c.b16 %v1817, %v1816
        %v1842 = vpack.c.b16 %v1819, %v1818
        %v1843 = vpack.c.b16 %v1821, %v1820
        %v1844 = vpack.c.b16 %v1823, %v1822
        %v1845 = vpack.c.b16 %v1825, %v1824
        %v1846 = vpack.c.b16 %v1827, %v1826
        %v1847 = vpack.c.b16 %v1829, %v1828
        %v1848 = vpack.c.b16 %v1831, %v1830
        %v1849 = vpack.c.b16 %v1833, %v1832
        %1850 = vrot.lane.b32.xlu0 %v1834, 24
        %v1851 = vpop.permute.xlu0 %1850
        %1852 = vrot.lane.b32.xlu0 %v1835, 24
        %v1853 = vpop.permute.xlu0 %1852
        %1854 = vrot.lane.b32.xlu0 %v1836, 24
        %v1855 = vpop.permute.xlu0 %1854
        %1856 = vrot.lane.b32.xlu0 %v1837, 24
        %v1857 = vpop.permute.xlu0 %1856
        %1858 = vrot.lane.b32.xlu0 %v1838, 24
        %v1859 = vpop.permute.xlu0 %1858
        %1860 = vrot.lane.b32.xlu0 %v1839, 24
        %v1861 = vpop.permute.xlu0 %1860
        %1862 = vrot.lane.b32.xlu0 %v1840, 24
        %v1863 = vpop.permute.xlu0 %1862
        %1864 = vrot.lane.b32.xlu0 %v1841, 24
        %v1865 = vpop.permute.xlu0 %1864
        %1866 = vrot.lane.b32.xlu0 %v1842, 24
        %v1867 = vpop.permute.xlu0 %1866
        %1868 = vrot.lane.b32.xlu0 %v1843, 24
        %v1869 = vpop.permute.xlu0 %1868
        %1870 = vrot.lane.b32.xlu0 %v1844, 24
        %v1871 = vpop.permute.xlu0 %1870
        %1872 = vrot.lane.b32.xlu0 %v1845, 24
        %v1873 = vpop.permute.xlu0 %1872
        %1874 = vrot.lane.b32.xlu0 %v1846, 24
        %v1875 = vpop.permute.xlu0 %1874
        %1876 = vrot.lane.b32.xlu0 %v1847, 24
        %v1877 = vpop.permute.xlu0 %1876
        %1878 = vrot.lane.b32.xlu0 %v1848, 24
        %v1879 = vpop.permute.xlu0 %1878
        %1880 = vrot.lane.b32.xlu0 %v1849, 24
        %v1881 = vpop.permute.xlu0 %1880
        %vm1898 = vcmask 261312
        %1899 = vst.msk [vmem:[#allocation3] sm:$0xff] %vm1898, %v1851
        %1900 = vst.msk [vmem:[#allocation3 + $0x8] sm:$0xff] %vm1898, %v1853
        %1901 = vst.msk [vmem:[#allocation3 + $0x10] sm:$0xff] %vm1898, %v1855
        %1902 = vst.msk [vmem:[#allocation3 + $0x18] sm:$0xff] %vm1898, %v1857
        %1903 = vst.msk [vmem:[#allocation3 + $0x20] sm:$0xff] %vm1898, %v1859
        %1904 = vst.msk [vmem:[#allocation3 + $0x28] sm:$0xff] %vm1898, %v1861
        %1905 = vst.msk [vmem:[#allocation3 + $0x30] sm:$0xff] %vm1898, %v1863
        %1906 = vst.msk [vmem:[#allocation3 + $0x38] sm:$0xff] %vm1898, %v1865
        %1907 = vst.msk [vmem:[#allocation3 + $0x40] sm:$0xff] %vm1898, %v1867
        %1908 = vst.msk [vmem:[#allocation3 + $0x48] sm:$0xff] %vm1898, %v1869
        %1909 = vst.msk [vmem:[#allocation3 + $0x50] sm:$0xff] %vm1898, %v1871
        %1910 = vst.msk [vmem:[#allocation3 + $0x58] sm:$0xff] %vm1898, %v1873
        %1911 = vst.msk [vmem:[#allocation3 + $0x60] sm:$0xff] %vm1898, %v1875
        %1912 = vst.msk [vmem:[#allocation3 + $0x68] sm:$0xff] %vm1898, %v1877
        %1913 = vst.msk [vmem:[#allocation3 + $0x70] sm:$0xff] %vm1898, %v1879
        %1914 = vst.msk [vmem:[#allocation3 + $0x78] sm:$0xff] %vm1898, %v1881
        %v1915 = vld [vmem:[%s751] sm:$0xf]
        %v1916 = vld [vmem:[%s751 + $0x4] sm:$0xf]
        %v1917 = vld [vmem:[%s751 + $0x8] sm:$0x1]
        %v1918 = vld [vmem:[%s751 + $0xc] sm:$0xf]
        %v1919 = vld [vmem:[%s751 + $0x10] sm:$0xf]
        %v1920 = vld [vmem:[%s751 + $0x14] sm:$0x1]
        %v1921 = vld [vmem:[%s751 + $0x18] sm:$0xf]
        %v1922 = vld [vmem:[%s751 + $0x1c] sm:$0xf]
        %v1923 = vld [vmem:[%s751 + $0x20] sm:$0x1]
        %v1924 = vld [vmem:[%s751 + $0x24] sm:$0xf]
        %v1925 = vld [vmem:[%s751 + $0x28] sm:$0xf]
        %v1926 = vld [vmem:[%s751 + $0x2c] sm:$0x1]
        %v1927 = vld [vmem:[%s751 + $0x30] sm:$0xf]
        %v1928 = vld [vmem:[%s751 + $0x34] sm:$0xf]
        %v1929 = vld [vmem:[%s751 + $0x38] sm:$0x1]
        %v1930 = vld [vmem:[%s751 + $0x3c] sm:$0xf]
        %v1931 = vld [vmem:[%s751 + $0x40] sm:$0xf]
        %v1932 = vld [vmem:[%s751 + $0x44] sm:$0x1]
        %v1933 = vld [vmem:[%s751 + $0x48] sm:$0xf]
        %v1934 = vld [vmem:[%s751 + $0x4c] sm:$0xf]
        %v1935 = vld [vmem:[%s751 + $0x50] sm:$0x1]
        %v1936 = vld [vmem:[%s751 + $0x54] sm:$0xf]
        %v1937 = vld [vmem:[%s751 + $0x58] sm:$0xf]
        %v1938 = vld [vmem:[%s751 + $0x5c] sm:$0x1]
        %v1939 = vld [vmem:[%s751 + $0x60] sm:$0xf]
        %v1940 = vld [vmem:[%s751 + $0x64] sm:$0xf]
        %v1941 = vld [vmem:[%s751 + $0x68] sm:$0x1]
        %v1942 = vld [vmem:[%s751 + $0x6c] sm:$0xf]
        %v1943 = vld [vmem:[%s751 + $0x70] sm:$0xf]
        %v1944 = vld [vmem:[%s751 + $0x74] sm:$0x1]
        %v1945 = vld [vmem:[%s751 + $0x78] sm:$0xf]
        %v1946 = vld [vmem:[%s751 + $0x7c] sm:$0xf]
        %v1947 = vld [vmem:[%s751 + $0x80] sm:$0x1]
        %v1948 = vld [vmem:[%s751 + $0x84] sm:$0xf]
        %v1949 = vld [vmem:[%s751 + $0x88] sm:$0xf]
        %v1950 = vld [vmem:[%s751 + $0x8c] sm:$0x1]
        %v1951 = vld [vmem:[%s751 + $0x90] sm:$0xf]
        %v1952 = vld [vmem:[%s751 + $0x94] sm:$0xf]
        %v1953 = vld [vmem:[%s751 + $0x98] sm:$0x1]
        %v1954 = vld [vmem:[%s751 + $0x9c] sm:$0xf]
        %v1955 = vld [vmem:[%s751 + $0xa0] sm:$0xf]
        %v1956 = vld [vmem:[%s751 + $0xa4] sm:$0x1]
        %v1957 = vld [vmem:[%s751 + $0xa8] sm:$0xf]
        %v1958 = vld [vmem:[%s751 + $0xac] sm:$0xf]
        %v1959 = vld [vmem:[%s751 + $0xb0] sm:$0x1]
        %v1960 = vld [vmem:[%s751 + $0xb4] sm:$0xf]
        %v1961 = vld [vmem:[%s751 + $0xb8] sm:$0xf]
        %v1962 = vld [vmem:[%s751 + $0xbc] sm:$0x1]
        %v2011 = vunpack.c.l.b16 %v1915
        %v2012 = vunpack.c.l.b16 %v1916
        %v2013 = vunpack.c.l.b16 %v1917
        %v2014 = vunpack.c.l.b16 %v1918
        %v2015 = vunpack.c.l.b16 %v1919
        %v2016 = vunpack.c.l.b16 %v1920
        %v2017 = vunpack.c.l.b16 %v1921
        %v2018 = vunpack.c.l.b16 %v1922
        %v2019 = vunpack.c.l.b16 %v1923
        %v2020 = vunpack.c.l.b16 %v1924
        %v2021 = vunpack.c.l.b16 %v1925
        %v2022 = vunpack.c.l.b16 %v1926
        %v2023 = vunpack.c.l.b16 %v1927
        %v2024 = vunpack.c.l.b16 %v1928
        %v2025 = vunpack.c.l.b16 %v1929
        %v2026 = vunpack.c.l.b16 %v1930
        %v2027 = vunpack.c.l.b16 %v1931
        %v2028 = vunpack.c.l.b16 %v1932
        %v2029 = vunpack.c.l.b16 %v1933
        %v2030 = vunpack.c.l.b16 %v1934
        %v2031 = vunpack.c.l.b16 %v1935
        %v2032 = vunpack.c.l.b16 %v1936
        %v2033 = vunpack.c.l.b16 %v1937
        %v2034 = vunpack.c.l.b16 %v1938
        %v2035 = vunpack.c.l.b16 %v1939
        %v2036 = vunpack.c.l.b16 %v1940
        %v2037 = vunpack.c.l.b16 %v1941
        %v2038 = vunpack.c.l.b16 %v1942
        %v2039 = vunpack.c.l.b16 %v1943
        %v2040 = vunpack.c.l.b16 %v1944
        %v2041 = vunpack.c.l.b16 %v1945
        %v2042 = vunpack.c.l.b16 %v1946
        %v2043 = vunpack.c.l.b16 %v1947
        %v2044 = vunpack.c.l.b16 %v1948
        %v2045 = vunpack.c.l.b16 %v1949
        %v2046 = vunpack.c.l.b16 %v1950
        %v2047 = vunpack.c.l.b16 %v1951
        %v2048 = vunpack.c.l.b16 %v1952
        %v2049 = vunpack.c.l.b16 %v1953
        %v2050 = vunpack.c.l.b16 %v1954
        %v2051 = vunpack.c.l.b16 %v1955
        %v2052 = vunpack.c.l.b16 %v1956
        %v2053 = vunpack.c.l.b16 %v1957
        %v2054 = vunpack.c.l.b16 %v1958
        %v2055 = vunpack.c.l.b16 %v1959
        %v2056 = vunpack.c.l.b16 %v1960
        %v2057 = vunpack.c.l.b16 %v1961
        %v2058 = vunpack.c.l.b16 %v1962
        %v2059 = vpack.c.b16 %v2012, %v2011
        %v2060 = vpack.c.b16 %v2013, %v2013
        %v2061 = vpack.c.b16 %v2015, %v2014
        %v2062 = vpack.c.b16 %v2016, %v2016
        %v2063 = vpack.c.b16 %v2018, %v2017
        %v2064 = vpack.c.b16 %v2019, %v2019
        %v2065 = vpack.c.b16 %v2021, %v2020
        %v2066 = vpack.c.b16 %v2022, %v2022
        %v2067 = vpack.c.b16 %v2024, %v2023
        %v2068 = vpack.c.b16 %v2025, %v2025
        %v2069 = vpack.c.b16 %v2027, %v2026
        %v2070 = vpack.c.b16 %v2028, %v2028
        %v2071 = vpack.c.b16 %v2030, %v2029
        %v2072 = vpack.c.b16 %v2031, %v2031
        %v2073 = vpack.c.b16 %v2033, %v2032
        %v2074 = vpack.c.b16 %v2034, %v2034
        %v2075 = vpack.c.b16 %v2036, %v2035
        %v2076 = vpack.c.b16 %v2037, %v2037
        %v2077 = vpack.c.b16 %v2039, %v2038
        %v2078 = vpack.c.b16 %v2040, %v2040
        %v2079 = vpack.c.b16 %v2042, %v2041
        %v2080 = vpack.c.b16 %v2043, %v2043
        %v2081 = vpack.c.b16 %v2045, %v2044
        %v2082 = vpack.c.b16 %v2046, %v2046
        %v2083 = vpack.c.b16 %v2048, %v2047
        %v2084 = vpack.c.b16 %v2049, %v2049
        %v2085 = vpack.c.b16 %v2051, %v2050
        %v2086 = vpack.c.b16 %v2052, %v2052
        %v2087 = vpack.c.b16 %v2054, %v2053
        %v2088 = vpack.c.b16 %v2055, %v2055
        %v2089 = vpack.c.b16 %v2057, %v2056
        %v2090 = vpack.c.b16 %v2058, %v2058
        %v2092 = vshrl.u32 %v2059, 16
        %v2094 = vshll.u32 %v2059, 16
        %v2096 = vrot.slane %v2094, 1
        %v2097 = vor.u32 %v2092, %v2096
        %v2099 = vshll.u32 %v2060, 16
        %v2101 = vrot.slane %v2099, 1
        %v2102 = vsel %vm1190, %v2097, %v2101
        %v2104 = vshrl.u32 %v2061, 16
        %v2106 = vshll.u32 %v2061, 16
        %v2108 = vrot.slane %v2106, 1
        %v2109 = vor.u32 %v2104, %v2108
        %v2111 = vshll.u32 %v2062, 16
        %v2113 = vrot.slane %v2111, 1
        %v2114 = vsel %vm1190, %v2109, %v2113
        %v2116 = vshrl.u32 %v2063, 16
        %v2118 = vshll.u32 %v2063, 16
        %v2120 = vrot.slane %v2118, 1
        %v2121 = vor.u32 %v2116, %v2120
        %v2123 = vshll.u32 %v2064, 16
        %v2125 = vrot.slane %v2123, 1
        %v2126 = vsel %vm1190, %v2121, %v2125
        %v2128 = vshrl.u32 %v2065, 16
        %v2130 = vshll.u32 %v2065, 16
        %v2132 = vrot.slane %v2130, 1
        %v2133 = vor.u32 %v2128, %v2132
        %v2135 = vshll.u32 %v2066, 16
        %v2137 = vrot.slane %v2135, 1
        %v2138 = vsel %vm1190, %v2133, %v2137
        %v2140 = vshrl.u32 %v2067, 16
        %v2142 = vshll.u32 %v2067, 16
        %v2144 = vrot.slane %v2142, 1
        %v2145 = vor.u32 %v2140, %v2144
        %v2147 = vshll.u32 %v2068, 16
        %v2149 = vrot.slane %v2147, 1
        %v2150 = vsel %vm1190, %v2145, %v2149
        %v2152 = vshrl.u32 %v2069, 16
        %v2154 = vshll.u32 %v2069, 16
        %v2156 = vrot.slane %v2154, 1
        %v2157 = vor.u32 %v2152, %v2156
        %v2159 = vshll.u32 %v2070, 16
        %v2161 = vrot.slane %v2159, 1
        %v2162 = vsel %vm1190, %v2157, %v2161
        %v2164 = vshrl.u32 %v2071, 16
        %v2166 = vshll.u32 %v2071, 16
        %v2168 = vrot.slane %v2166, 1
        %v2169 = vor.u32 %v2164, %v2168
        %v2171 = vshll.u32 %v2072, 16
        %v2173 = vrot.slane %v2171, 1
        %v2174 = vsel %vm1190, %v2169, %v2173
        %v2176 = vshrl.u32 %v2073, 16
        %v2178 = vshll.u32 %v2073, 16
        %v2180 = vrot.slane %v2178, 1
        %v2181 = vor.u32 %v2176, %v2180
        %v2183 = vshll.u32 %v2074, 16
        %v2185 = vrot.slane %v2183, 1
        %v2186 = vsel %vm1190, %v2181, %v2185
        %v2188 = vshrl.u32 %v2075, 16
        %v2190 = vshll.u32 %v2075, 16
        %v2192 = vrot.slane %v2190, 1
        %v2193 = vor.u32 %v2188, %v2192
        %v2195 = vshll.u32 %v2076, 16
        %v2197 = vrot.slane %v2195, 1
        %v2198 = vsel %vm1190, %v2193, %v2197
        %v2200 = vshrl.u32 %v2077, 16
        %v2202 = vshll.u32 %v2077, 16
        %v2204 = vrot.slane %v2202, 1
        %v2205 = vor.u32 %v2200, %v2204
        %v2207 = vshll.u32 %v2078, 16
        %v2209 = vrot.slane %v2207, 1
        %v2210 = vsel %vm1190, %v2205, %v2209
        %v2212 = vshrl.u32 %v2079, 16
        %v2214 = vshll.u32 %v2079, 16
        %v2216 = vrot.slane %v2214, 1
        %v2217 = vor.u32 %v2212, %v2216
        %v2219 = vshll.u32 %v2080, 16
        %v2221 = vrot.slane %v2219, 1
        %v2222 = vsel %vm1190, %v2217, %v2221
        %v2224 = vshrl.u32 %v2081, 16
        %v2226 = vshll.u32 %v2081, 16
        %v2228 = vrot.slane %v2226, 1
        %v2229 = vor.u32 %v2224, %v2228
        %v2231 = vshll.u32 %v2082, 16
        %v2233 = vrot.slane %v2231, 1
        %v2234 = vsel %vm1190, %v2229, %v2233
        %v2236 = vshrl.u32 %v2083, 16
        %v2238 = vshll.u32 %v2083, 16
        %v2240 = vrot.slane %v2238, 1
        %v2241 = vor.u32 %v2236, %v2240
        %v2243 = vshll.u32 %v2084, 16
        %v2245 = vrot.slane %v2243, 1
        %v2246 = vsel %vm1190, %v2241, %v2245
        %v2248 = vshrl.u32 %v2085, 16
        %v2250 = vshll.u32 %v2085, 16
        %v2252 = vrot.slane %v2250, 1
        %v2253 = vor.u32 %v2248, %v2252
        %v2255 = vshll.u32 %v2086, 16
        %v2257 = vrot.slane %v2255, 1
        %v2258 = vsel %vm1190, %v2253, %v2257
        %v2260 = vshrl.u32 %v2087, 16
        %v2262 = vshll.u32 %v2087, 16
        %v2264 = vrot.slane %v2262, 1
        %v2265 = vor.u32 %v2260, %v2264
        %v2267 = vshll.u32 %v2088, 16
        %v2269 = vrot.slane %v2267, 1
        %v2270 = vsel %vm1190, %v2265, %v2269
        %v2272 = vshrl.u32 %v2089, 16
        %v2274 = vshll.u32 %v2089, 16
        %v2276 = vrot.slane %v2274, 1
        %v2277 = vor.u32 %v2272, %v2276
        %v2279 = vshll.u32 %v2090, 16
        %v2281 = vrot.slane %v2279, 1
        %v2282 = vsel %vm1190, %v2277, %v2281
        %2283 = vrot.lane.b32.xlu0 %v2102, 32
        %v2284 = vpop.permute.xlu0 %2283
        %2285 = vrot.lane.b32.xlu0 %v2114, 32
        %v2286 = vpop.permute.xlu0 %2285
        %2287 = vrot.lane.b32.xlu0 %v2126, 32
        %v2288 = vpop.permute.xlu0 %2287
        %2289 = vrot.lane.b32.xlu0 %v2138, 32
        %v2290 = vpop.permute.xlu0 %2289
        %2291 = vrot.lane.b32.xlu0 %v2150, 32
        %v2292 = vpop.permute.xlu0 %2291
        %2293 = vrot.lane.b32.xlu0 %v2162, 32
        %v2294 = vpop.permute.xlu0 %2293
        %2295 = vrot.lane.b32.xlu0 %v2174, 32
        %v2296 = vpop.permute.xlu0 %2295
        %2297 = vrot.lane.b32.xlu0 %v2186, 32
        %v2298 = vpop.permute.xlu0 %2297
        %2299 = vrot.lane.b32.xlu0 %v2198, 32
        %v2300 = vpop.permute.xlu0 %2299
        %2301 = vrot.lane.b32.xlu0 %v2210, 32
        %v2302 = vpop.permute.xlu0 %2301
        %2303 = vrot.lane.b32.xlu0 %v2222, 32
        %v2304 = vpop.permute.xlu0 %2303
        %2305 = vrot.lane.b32.xlu0 %v2234, 32
        %v2306 = vpop.permute.xlu0 %2305
        %2307 = vrot.lane.b32.xlu0 %v2246, 32
        %v2308 = vpop.permute.xlu0 %2307
        %2309 = vrot.lane.b32.xlu0 %v2258, 32
        %v2310 = vpop.permute.xlu0 %2309
        %2311 = vrot.lane.b32.xlu0 %v2270, 32
        %v2312 = vpop.permute.xlu0 %2311
        %2313 = vrot.lane.b32.xlu0 %v2282, 32
        %v2314 = vpop.permute.xlu0 %2313
        %vm2331 = vcmask 326912
        %2332 = vst.msk [vmem:[#allocation3] sm:$0xff] %vm2331, %v2284
        %2333 = vst.msk [vmem:[#allocation3 + $0x8] sm:$0xff] %vm2331, %v2286
        %2334 = vst.msk [vmem:[#allocation3 + $0x10] sm:$0xff] %vm2331, %v2288
        %2335 = vst.msk [vmem:[#allocation3 + $0x18] sm:$0xff] %vm2331, %v2290
        %2336 = vst.msk [vmem:[#allocation3 + $0x20] sm:$0xff] %vm2331, %v2292
        %2337 = vst.msk [vmem:[#allocation3 + $0x28] sm:$0xff] %vm2331, %v2294
        %2338 = vst.msk [vmem:[#allocation3 + $0x30] sm:$0xff] %vm2331, %v2296
        %2339 = vst.msk [vmem:[#allocation3 + $0x38] sm:$0xff] %vm2331, %v2298
        %2340 = vst.msk [vmem:[#allocation3 + $0x40] sm:$0xff] %vm2331, %v2300
        %2341 = vst.msk [vmem:[#allocation3 + $0x48] sm:$0xff] %vm2331, %v2302
        %2342 = vst.msk [vmem:[#allocation3 + $0x50] sm:$0xff] %vm2331, %v2304
        %2343 = vst.msk [vmem:[#allocation3 + $0x58] sm:$0xff] %vm2331, %v2306
        %2344 = vst.msk [vmem:[#allocation3 + $0x60] sm:$0xff] %vm2331, %v2308
        %2345 = vst.msk [vmem:[#allocation3 + $0x68] sm:$0xff] %vm2331, %v2310
        %2346 = vst.msk [vmem:[#allocation3 + $0x70] sm:$0xff] %vm2331, %v2312
        %2347 = vst.msk [vmem:[#allocation3 + $0x78] sm:$0xff] %vm2331, %v2314
        %v2348 = vld [vmem:[%s751] sm:$0xe]
        %v2349 = vld [vmem:[%s751 + $0x4] sm:$0xf]
        %v2350 = vld [vmem:[%s751 + $0x8] sm:$0x1]
        %v2351 = vld [vmem:[%s751 + $0xc] sm:$0xe]
        %v2352 = vld [vmem:[%s751 + $0x10] sm:$0xf]
        %v2353 = vld [vmem:[%s751 + $0x14] sm:$0x1]
        %v2354 = vld [vmem:[%s751 + $0x18] sm:$0xe]
        %v2355 = vld [vmem:[%s751 + $0x1c] sm:$0xf]
        %v2356 = vld [vmem:[%s751 + $0x20] sm:$0x1]
        %v2357 = vld [vmem:[%s751 + $0x24] sm:$0xe]
        %v2358 = vld [vmem:[%s751 + $0x28] sm:$0xf]
        %v2359 = vld [vmem:[%s751 + $0x2c] sm:$0x1]
        %v2360 = vld [vmem:[%s751 + $0x30] sm:$0xe]
        %v2361 = vld [vmem:[%s751 + $0x34] sm:$0xf]
        %v2362 = vld [vmem:[%s751 + $0x38] sm:$0x1]
        %v2363 = vld [vmem:[%s751 + $0x3c] sm:$0xe]
        %v2364 = vld [vmem:[%s751 + $0x40] sm:$0xf]
        %v2365 = vld [vmem:[%s751 + $0x44] sm:$0x1]
        %v2366 = vld [vmem:[%s751 + $0x48] sm:$0xe]
        %v2367 = vld [vmem:[%s751 + $0x4c] sm:$0xf]
        %v2368 = vld [vmem:[%s751 + $0x50] sm:$0x1]
        %v2369 = vld [vmem:[%s751 + $0x54] sm:$0xe]
        %v2370 = vld [vmem:[%s751 + $0x58] sm:$0xf]
        %v2371 = vld [vmem:[%s751 + $0x5c] sm:$0x1]
        %v2372 = vld [vmem:[%s751 + $0x60] sm:$0xe]
        %v2373 = vld [vmem:[%s751 + $0x64] sm:$0xf]
        %v2374 = vld [vmem:[%s751 + $0x68] sm:$0x1]
        %v2375 = vld [vmem:[%s751 + $0x6c] sm:$0xe]
        %v2376 = vld [vmem:[%s751 + $0x70] sm:$0xf]
        %v2377 = vld [vmem:[%s751 + $0x74] sm:$0x1]
        %v2378 = vld [vmem:[%s751 + $0x78] sm:$0xe]
        %v2379 = vld [vmem:[%s751 + $0x7c] sm:$0xf]
        %v2380 = vld [vmem:[%s751 + $0x80] sm:$0x1]
        %v2381 = vld [vmem:[%s751 + $0x84] sm:$0xe]
        %v2382 = vld [vmem:[%s751 + $0x88] sm:$0xf]
        %v2383 = vld [vmem:[%s751 + $0x8c] sm:$0x1]
        %v2384 = vld [vmem:[%s751 + $0x90] sm:$0xe]
        %v2385 = vld [vmem:[%s751 + $0x94] sm:$0xf]
        %v2386 = vld [vmem:[%s751 + $0x98] sm:$0x1]
        %v2387 = vld [vmem:[%s751 + $0x9c] sm:$0xe]
        %v2388 = vld [vmem:[%s751 + $0xa0] sm:$0xf]
        %v2389 = vld [vmem:[%s751 + $0xa4] sm:$0x1]
        %v2390 = vld [vmem:[%s751 + $0xa8] sm:$0xe]
        %v2391 = vld [vmem:[%s751 + $0xac] sm:$0xf]
        %v2392 = vld [vmem:[%s751 + $0xb0] sm:$0x1]
        %v2393 = vld [vmem:[%s751 + $0xb4] sm:$0xe]
        %v2394 = vld [vmem:[%s751 + $0xb8] sm:$0xf]
        %v2395 = vld [vmem:[%s751 + $0xbc] sm:$0x1]
        %v2444 = vunpack.c.l.b16 %v2348
        %v2445 = vunpack.c.l.b16 %v2349
        %v2446 = vunpack.c.l.b16 %v2350
        %v2447 = vunpack.c.l.b16 %v2351
        %v2448 = vunpack.c.l.b16 %v2352
        %v2449 = vunpack.c.l.b16 %v2353
        %v2450 = vunpack.c.l.b16 %v2354
        %v2451 = vunpack.c.l.b16 %v2355
        %v2452 = vunpack.c.l.b16 %v2356
        %v2453 = vunpack.c.l.b16 %v2357
        %v2454 = vunpack.c.l.b16 %v2358
        %v2455 = vunpack.c.l.b16 %v2359
        %v2456 = vunpack.c.l.b16 %v2360
        %v2457 = vunpack.c.l.b16 %v2361
        %v2458 = vunpack.c.l.b16 %v2362
        %v2459 = vunpack.c.l.b16 %v2363
        %v2460 = vunpack.c.l.b16 %v2364
        %v2461 = vunpack.c.l.b16 %v2365
        %v2462 = vunpack.c.l.b16 %v2366
        %v2463 = vunpack.c.l.b16 %v2367
        %v2464 = vunpack.c.l.b16 %v2368
        %v2465 = vunpack.c.l.b16 %v2369
        %v2466 = vunpack.c.l.b16 %v2370
        %v2467 = vunpack.c.l.b16 %v2371
        %v2468 = vunpack.c.l.b16 %v2372
        %v2469 = vunpack.c.l.b16 %v2373
        %v2470 = vunpack.c.l.b16 %v2374
        %v2471 = vunpack.c.l.b16 %v2375
        %v2472 = vunpack.c.l.b16 %v2376
        %v2473 = vunpack.c.l.b16 %v2377
        %v2474 = vunpack.c.l.b16 %v2378
        %v2475 = vunpack.c.l.b16 %v2379
        %v2476 = vunpack.c.l.b16 %v2380
        %v2477 = vunpack.c.l.b16 %v2381
        %v2478 = vunpack.c.l.b16 %v2382
        %v2479 = vunpack.c.l.b16 %v2383
        %v2480 = vunpack.c.l.b16 %v2384
        %v2481 = vunpack.c.l.b16 %v2385
        %v2482 = vunpack.c.l.b16 %v2386
        %v2483 = vunpack.c.l.b16 %v2387
        %v2484 = vunpack.c.l.b16 %v2388
        %v2485 = vunpack.c.l.b16 %v2389
        %v2486 = vunpack.c.l.b16 %v2390
        %v2487 = vunpack.c.l.b16 %v2391
        %v2488 = vunpack.c.l.b16 %v2392
        %v2489 = vunpack.c.l.b16 %v2393
        %v2490 = vunpack.c.l.b16 %v2394
        %v2491 = vunpack.c.l.b16 %v2395
        %v2492 = vpack.c.b16 %v2445, %v2444
        %v2493 = vpack.c.b16 %v2446, %v2446
        %v2494 = vpack.c.b16 %v2448, %v2447
        %v2495 = vpack.c.b16 %v2449, %v2449
        %v2496 = vpack.c.b16 %v2451, %v2450
        %v2497 = vpack.c.b16 %v2452, %v2452
        %v2498 = vpack.c.b16 %v2454, %v2453
        %v2499 = vpack.c.b16 %v2455, %v2455
        %v2500 = vpack.c.b16 %v2457, %v2456
        %v2501 = vpack.c.b16 %v2458, %v2458
        %v2502 = vpack.c.b16 %v2460, %v2459
        %v2503 = vpack.c.b16 %v2461, %v2461
        %v2504 = vpack.c.b16 %v2463, %v2462
        %v2505 = vpack.c.b16 %v2464, %v2464
        %v2506 = vpack.c.b16 %v2466, %v2465
        %v2507 = vpack.c.b16 %v2467, %v2467
        %v2508 = vpack.c.b16 %v2469, %v2468
        %v2509 = vpack.c.b16 %v2470, %v2470
        %v2510 = vpack.c.b16 %v2472, %v2471
        %v2511 = vpack.c.b16 %v2473, %v2473
        %v2512 = vpack.c.b16 %v2475, %v2474
        %v2513 = vpack.c.b16 %v2476, %v2476
        %v2514 = vpack.c.b16 %v2478, %v2477
        %v2515 = vpack.c.b16 %v2479, %v2479
        %v2516 = vpack.c.b16 %v2481, %v2480
        %v2517 = vpack.c.b16 %v2482, %v2482
        %v2518 = vpack.c.b16 %v2484, %v2483
        %v2519 = vpack.c.b16 %v2485, %v2485
        %v2520 = vpack.c.b16 %v2487, %v2486
        %v2521 = vpack.c.b16 %v2488, %v2488
        %v2522 = vpack.c.b16 %v2490, %v2489
        %v2523 = vpack.c.b16 %v2491, %v2491
        %v2524 = vrot.slane %v2492, 1
        %v2525 = vrot.slane %v2493, 1
        %v2526 = vsel %vm1624, %v2524, %v2525
        %v2527 = vrot.slane %v2494, 1
        %v2528 = vrot.slane %v2495, 1
        %v2529 = vsel %vm1624, %v2527, %v2528
        %v2530 = vrot.slane %v2496, 1
        %v2531 = vrot.slane %v2497, 1
        %v2532 = vsel %vm1624, %v2530, %v2531
        %v2533 = vrot.slane %v2498, 1
        %v2534 = vrot.slane %v2499, 1
        %v2535 = vsel %vm1624, %v2533, %v2534
        %v2536 = vrot.slane %v2500, 1
        %v2537 = vrot.slane %v2501, 1
        %v2538 = vsel %vm1624, %v2536, %v2537
        %v2539 = vrot.slane %v2502, 1
        %v2540 = vrot.slane %v2503, 1
        %v2541 = vsel %vm1624, %v2539, %v2540
        %v2542 = vrot.slane %v2504, 1
        %v2543 = vrot.slane %v2505, 1
        %v2544 = vsel %vm1624, %v2542, %v2543
        %v2545 = vrot.slane %v2506, 1
        %v2546 = vrot.slane %v2507, 1
        %v2547 = vsel %vm1624, %v2545, %v2546
        %v2548 = vrot.slane %v2508, 1
        %v2549 = vrot.slane %v2509, 1
        %v2550 = vsel %vm1624, %v2548, %v2549
        %v2551 = vrot.slane %v2510, 1
        %v2552 = vrot.slane %v2511, 1
        %v2553 = vsel %vm1624, %v2551, %v2552
        %v2554 = vrot.slane %v2512, 1
        %v2555 = vrot.slane %v2513, 1
        %v2556 = vsel %vm1624, %v2554, %v2555
        %v2557 = vrot.slane %v2514, 1
        %v2558 = vrot.slane %v2515, 1
        %v2559 = vsel %vm1624, %v2557, %v2558
        %v2560 = vrot.slane %v2516, 1
        %v2561 = vrot.slane %v2517, 1
        %v2562 = vsel %vm1624, %v2560, %v2561
        %v2563 = vrot.slane %v2518, 1
        %v2564 = vrot.slane %v2519, 1
        %v2565 = vsel %vm1624, %v2563, %v2564
        %v2566 = vrot.slane %v2520, 1
        %v2567 = vrot.slane %v2521, 1
        %v2568 = vsel %vm1624, %v2566, %v2567
        %v2569 = vrot.slane %v2522, 1
        %v2570 = vrot.slane %v2523, 1
        %v2571 = vsel %vm1624, %v2569, %v2570
        %2572 = vrot.lane.b32.xlu0 %v2526, 40
        %v2573 = vpop.permute.xlu0 %2572
        %2574 = vrot.lane.b32.xlu0 %v2529, 40
        %v2575 = vpop.permute.xlu0 %2574
        %2576 = vrot.lane.b32.xlu0 %v2532, 40
        %v2577 = vpop.permute.xlu0 %2576
        %2578 = vrot.lane.b32.xlu0 %v2535, 40
        %v2579 = vpop.permute.xlu0 %2578
        %2580 = vrot.lane.b32.xlu0 %v2538, 40
        %v2581 = vpop.permute.xlu0 %2580
        %2582 = vrot.lane.b32.xlu0 %v2541, 40
        %v2583 = vpop.permute.xlu0 %2582
        %2584 = vrot.lane.b32.xlu0 %v2544, 40
        %v2585 = vpop.permute.xlu0 %2584
        %2586 = vrot.lane.b32.xlu0 %v2547, 40
        %v2587 = vpop.permute.xlu0 %2586
        %2588 = vrot.lane.b32.xlu0 %v2550, 40
        %v2589 = vpop.permute.xlu0 %2588
        %2590 = vrot.lane.b32.xlu0 %v2553, 40
        %v2591 = vpop.permute.xlu0 %2590
        %2592 = vrot.lane.b32.xlu0 %v2556, 40
        %v2593 = vpop.permute.xlu0 %2592
        %2594 = vrot.lane.b32.xlu0 %v2559, 40
        %v2595 = vpop.permute.xlu0 %2594
        %2596 = vrot.lane.b32.xlu0 %v2562, 40
        %v2597 = vpop.permute.xlu0 %2596
        %2598 = vrot.lane.b32.xlu0 %v2565, 40
        %v2599 = vpop.permute.xlu0 %2598
        %2600 = vrot.lane.b32.xlu0 %v2568, 40
        %v2601 = vpop.permute.xlu0 %2600
        %2602 = vrot.lane.b32.xlu0 %v2571, 40
        %v2603 = vpop.permute.xlu0 %2602
        %vm2620 = vcmask 392512
        %2621 = vst.msk [vmem:[#allocation3] sm:$0xff] %vm2620, %v2573
        %2622 = vst.msk [vmem:[#allocation3 + $0x8] sm:$0xff] %vm2620, %v2575
        %2623 = vst.msk [vmem:[#allocation3 + $0x10] sm:$0xff] %vm2620, %v2577
        %2624 = vst.msk [vmem:[#allocation3 + $0x18] sm:$0xff] %vm2620, %v2579
        %2625 = vst.msk [vmem:[#allocation3 + $0x20] sm:$0xff] %vm2620, %v2581
        %2626 = vst.msk [vmem:[#allocation3 + $0x28] sm:$0xff] %vm2620, %v2583
        %2627 = vst.msk [vmem:[#allocation3 + $0x30] sm:$0xff] %vm2620, %v2585
        %2628 = vst.msk [vmem:[#allocation3 + $0x38] sm:$0xff] %vm2620, %v2587
        %2629 = vst.msk [vmem:[#allocation3 + $0x40] sm:$0xff] %vm2620, %v2589
        %2630 = vst.msk [vmem:[#allocation3 + $0x48] sm:$0xff] %vm2620, %v2591
        %2631 = vst.msk [vmem:[#allocation3 + $0x50] sm:$0xff] %vm2620, %v2593
        %2632 = vst.msk [vmem:[#allocation3 + $0x58] sm:$0xff] %vm2620, %v2595
        %2633 = vst.msk [vmem:[#allocation3 + $0x60] sm:$0xff] %vm2620, %v2597
        %2634 = vst.msk [vmem:[#allocation3 + $0x68] sm:$0xff] %vm2620, %v2599
        %2635 = vst.msk [vmem:[#allocation3 + $0x70] sm:$0xff] %vm2620, %v2601
        %2636 = vst.msk [vmem:[#allocation3 + $0x78] sm:$0xff] %vm2620, %v2603
        %s2637 = scalar_lea.vmem [#allocation2], 24
        %v2638 = vld [vmem:[%s2637] sm:$0xf]
        %v2639 = vld [vmem:[%s2637 + $0x4] sm:$0xf]
        %v2640 = vld [vmem:[%s2637 + $0xc] sm:$0xf]
        %v2641 = vld [vmem:[%s2637 + $0x10] sm:$0xf]
        %v2642 = vld [vmem:[%s2637 + $0x18] sm:$0xf]
        %v2643 = vld [vmem:[%s2637 + $0x1c] sm:$0xf]
        %v2644 = vld [vmem:[%s2637 + $0x24] sm:$0xf]
        %v2645 = vld [vmem:[%s2637 + $0x28] sm:$0xf]
        %v2646 = vld [vmem:[%s2637 + $0x30] sm:$0xf]
        %v2647 = vld [vmem:[%s2637 + $0x34] sm:$0xf]
        %v2648 = vld [vmem:[%s2637 + $0x3c] sm:$0xf]
        %v2649 = vld [vmem:[%s2637 + $0x40] sm:$0xf]
        %v2650 = vld [vmem:[%s2637 + $0x48] sm:$0xf]
        %v2651 = vld [vmem:[%s2637 + $0x4c] sm:$0xf]
        %v2652 = vld [vmem:[%s2637 + $0x54] sm:$0xf]
        %v2653 = vld [vmem:[%s2637 + $0x58] sm:$0xf]
        %v2654 = vld [vmem:[%s2637 + $0x60] sm:$0xf]
        %v2655 = vld [vmem:[%s2637 + $0x64] sm:$0xf]
        %v2656 = vld [vmem:[%s2637 + $0x6c] sm:$0xf]
        %v2657 = vld [vmem:[%s2637 + $0x70] sm:$0xf]
        %v2658 = vld [vmem:[%s2637 + $0x78] sm:$0xf]
        %v2659 = vld [vmem:[%s2637 + $0x7c] sm:$0xf]
        %v2660 = vld [vmem:[%s2637 + $0x84] sm:$0xf]
        %v2661 = vld [vmem:[%s2637 + $0x88] sm:$0xf]
        %v2662 = vld [vmem:[%s2637 + $0x90] sm:$0xf]
        %v2663 = vld [vmem:[%s2637 + $0x94] sm:$0xf]
        %v2664 = vld [vmem:[%s2637 + $0x9c] sm:$0xf]
        %v2665 = vld [vmem:[%s2637 + $0xa0] sm:$0xf]
        %v2666 = vld [vmem:[%s2637 + $0xa8] sm:$0xf]
        %v2667 = vld [vmem:[%s2637 + $0xac] sm:$0xf]
        %v2668 = vld [vmem:[%s2637 + $0xb4] sm:$0xf]
        %v2669 = vld [vmem:[%s2637 + $0xb8] sm:$0xf]
        %v2702 = vunpack.c.l.b16 %v2638
        %v2703 = vunpack.c.l.b16 %v2639
        %v2704 = vunpack.c.l.b16 %v2640
        %v2705 = vunpack.c.l.b16 %v2641
        %v2706 = vunpack.c.l.b16 %v2642
        %v2707 = vunpack.c.l.b16 %v2643
        %v2708 = vunpack.c.l.b16 %v2644
        %v2709 = vunpack.c.l.b16 %v2645
        %v2710 = vunpack.c.l.b16 %v2646
        %v2711 = vunpack.c.l.b16 %v2647
        %v2712 = vunpack.c.l.b16 %v2648
        %v2713 = vunpack.c.l.b16 %v2649
        %v2714 = vunpack.c.l.b16 %v2650
        %v2715 = vunpack.c.l.b16 %v2651
        %v2716 = vunpack.c.l.b16 %v2652
        %v2717 = vunpack.c.l.b16 %v2653
        %v2718 = vunpack.c.l.b16 %v2654
        %v2719 = vunpack.c.l.b16 %v2655
        %v2720 = vunpack.c.l.b16 %v2656
        %v2721 = vunpack.c.l.b16 %v2657
        %v2722 = vunpack.c.l.b16 %v2658
        %v2723 = vunpack.c.l.b16 %v2659
        %v2724 = vunpack.c.l.b16 %v2660
        %v2725 = vunpack.c.l.b16 %v2661
        %v2726 = vunpack.c.l.b16 %v2662
        %v2727 = vunpack.c.l.b16 %v2663
        %v2728 = vunpack.c.l.b16 %v2664
        %v2729 = vunpack.c.l.b16 %v2665
        %v2730 = vunpack.c.l.b16 %v2666
        %v2731 = vunpack.c.l.b16 %v2667
        %v2732 = vunpack.c.l.b16 %v2668
        %v2733 = vunpack.c.l.b16 %v2669
        %v2734 = vpack.c.b16 %v2703, %v2702
        %v2735 = vpack.c.b16 %v2705, %v2704
        %v2736 = vpack.c.b16 %v2707, %v2706
        %v2737 = vpack.c.b16 %v2709, %v2708
        %v2738 = vpack.c.b16 %v2711, %v2710
        %v2739 = vpack.c.b16 %v2713, %v2712
        %v2740 = vpack.c.b16 %v2715, %v2714
        %v2741 = vpack.c.b16 %v2717, %v2716
        %v2742 = vpack.c.b16 %v2719, %v2718
        %v2743 = vpack.c.b16 %v2721, %v2720
        %v2744 = vpack.c.b16 %v2723, %v2722
        %v2745 = vpack.c.b16 %v2725, %v2724
        %v2746 = vpack.c.b16 %v2727, %v2726
        %v2747 = vpack.c.b16 %v2729, %v2728
        %v2748 = vpack.c.b16 %v2731, %v2730
        %v2749 = vpack.c.b16 %v2733, %v2732
        %2750 = vrot.lane.b32.xlu0 %v2734, 48
        %v2751 = vpop.permute.xlu0 %2750
        %2752 = vrot.lane.b32.xlu0 %v2735, 48
        %v2753 = vpop.permute.xlu0 %2752
        %2754 = vrot.lane.b32.xlu0 %v2736, 48
        %v2755 = vpop.permute.xlu0 %2754
        %2756 = vrot.lane.b32.xlu0 %v2737, 48
        %v2757 = vpop.permute.xlu0 %2756
        %2758 = vrot.lane.b32.xlu0 %v2738, 48
        %v2759 = vpop.permute.xlu0 %2758
        %2760 = vrot.lane.b32.xlu0 %v2739, 48
        %v2761 = vpop.permute.xlu0 %2760
        %2762 = vrot.lane.b32.xlu0 %v2740, 48
        %v2763 = vpop.permute.xlu0 %2762
        %2764 = vrot.lane.b32.xlu0 %v2741, 48
        %v2765 = vpop.permute.xlu0 %2764
        %2766 = vrot.lane.b32.xlu0 %v2742, 48
        %v2767 = vpop.permute.xlu0 %2766
        %2768 = vrot.lane.b32.xlu0 %v2743, 48
        %v2769 = vpop.permute.xlu0 %2768
        %2770 = vrot.lane.b32.xlu0 %v2744, 48
        %v2771 = vpop.permute.xlu0 %2770
        %2772 = vrot.lane.b32.xlu0 %v2745, 48
        %v2773 = vpop.permute.xlu0 %2772
        %2774 = vrot.lane.b32.xlu0 %v2746, 48
        %v2775 = vpop.permute.xlu0 %2774
        %2776 = vrot.lane.b32.xlu0 %v2747, 48
        %v2777 = vpop.permute.xlu0 %2776
        %2778 = vrot.lane.b32.xlu0 %v2748, 48
        %v2779 = vpop.permute.xlu0 %2778
        %2780 = vrot.lane.b32.xlu0 %v2749, 48
        %v2781 = vpop.permute.xlu0 %2780
        %vm2798 = vcmask 458112
        %2799 = vst.msk [vmem:[#allocation3] sm:$0xff] %vm2798, %v2751
        %2800 = vst.msk [vmem:[#allocation3 + $0x8] sm:$0xff] %vm2798, %v2753
        %2801 = vst.msk [vmem:[#allocation3 + $0x10] sm:$0xff] %vm2798, %v2755
        %2802 = vst.msk [vmem:[#allocation3 + $0x18] sm:$0xff] %vm2798, %v2757
        %2803 = vst.msk [vmem:[#allocation3 + $0x20] sm:$0xff] %vm2798, %v2759
        %2804 = vst.msk [vmem:[#allocation3 + $0x28] sm:$0xff] %vm2798, %v2761
        %2805 = vst.msk [vmem:[#allocation3 + $0x30] sm:$0xff] %vm2798, %v2763
        %2806 = vst.msk [vmem:[#allocation3 + $0x38] sm:$0xff] %vm2798, %v2765
        %2807 = vst.msk [vmem:[#allocation3 + $0x40] sm:$0xff] %vm2798, %v2767
        %2808 = vst.msk [vmem:[#allocation3 + $0x48] sm:$0xff] %vm2798, %v2769
        %2809 = vst.msk [vmem:[#allocation3 + $0x50] sm:$0xff] %vm2798, %v2771
        %2810 = vst.msk [vmem:[#allocation3 + $0x58] sm:$0xff] %vm2798, %v2773
        %2811 = vst.msk [vmem:[#allocation3 + $0x60] sm:$0xff] %vm2798, %v2775
        %2812 = vst.msk [vmem:[#allocation3 + $0x68] sm:$0xff] %vm2798, %v2777
        %2813 = vst.msk [vmem:[#allocation3 + $0x70] sm:$0xff] %vm2798, %v2779
        %2814 = vst.msk [vmem:[#allocation3 + $0x78] sm:$0xff] %vm2798, %v2781
        %v2815 = vld [vmem:[%s2637] sm:$0xf]
        %v2816 = vld [vmem:[%s2637 + $0x4] sm:$0xf]
        %v2817 = vld [vmem:[%s2637 + $0x8] sm:$0x1]
        %v2818 = vld [vmem:[%s2637 + $0xc] sm:$0xf]
        %v2819 = vld [vmem:[%s2637 + $0x10] sm:$0xf]
        %v2820 = vld [vmem:[%s2637 + $0x14] sm:$0x1]
        %v2821 = vld [vmem:[%s2637 + $0x18] sm:$0xf]
        %v2822 = vld [vmem:[%s2637 + $0x1c] sm:$0xf]
        %v2823 = vld [vmem:[%s2637 + $0x20] sm:$0x1]
        %v2824 = vld [vmem:[%s2637 + $0x24] sm:$0xf]
        %v2825 = vld [vmem:[%s2637 + $0x28] sm:$0xf]
        %v2826 = vld [vmem:[%s2637 + $0x2c] sm:$0x1]
        %v2827 = vld [vmem:[%s2637 + $0x30] sm:$0xf]
        %v2828 = vld [vmem:[%s2637 + $0x34] sm:$0xf]
        %v2829 = vld [vmem:[%s2637 + $0x38] sm:$0x1]
        %v2830 = vld [vmem:[%s2637 + $0x3c] sm:$0xf]
        %v2831 = vld [vmem:[%s2637 + $0x40] sm:$0xf]
        %v2832 = vld [vmem:[%s2637 + $0x44] sm:$0x1]
        %v2833 = vld [vmem:[%s2637 + $0x48] sm:$0xf]
        %v2834 = vld [vmem:[%s2637 + $0x4c] sm:$0xf]
        %v2835 = vld [vmem:[%s2637 + $0x50] sm:$0x1]
        %v2836 = vld [vmem:[%s2637 + $0x54] sm:$0xf]
        %v2837 = vld [vmem:[%s2637 + $0x58] sm:$0xf]
        %v2838 = vld [vmem:[%s2637 + $0x5c] sm:$0x1]
        %v2839 = vld [vmem:[%s2637 + $0x60] sm:$0xf]
        %v2840 = vld [vmem:[%s2637 + $0x64] sm:$0xf]
        %v2841 = vld [vmem:[%s2637 + $0x68] sm:$0x1]
        %v2842 = vld [vmem:[%s2637 + $0x6c] sm:$0xf]
        %v2843 = vld [vmem:[%s2637 + $0x70] sm:$0xf]
        %v2844 = vld [vmem:[%s2637 + $0x74] sm:$0x1]
        %v2845 = vld [vmem:[%s2637 + $0x78] sm:$0xf]
        %v2846 = vld [vmem:[%s2637 + $0x7c] sm:$0xf]
        %v2847 = vld [vmem:[%s2637 + $0x80] sm:$0x1]
        %v2848 = vld [vmem:[%s2637 + $0x84] sm:$0xf]
        %v2849 = vld [vmem:[%s2637 + $0x88] sm:$0xf]
        %v2850 = vld [vmem:[%s2637 + $0x8c] sm:$0x1]
        %v2851 = vld [vmem:[%s2637 + $0x90] sm:$0xf]
        %v2852 = vld [vmem:[%s2637 + $0x94] sm:$0xf]
        %v2853 = vld [vmem:[%s2637 + $0x98] sm:$0x1]
        %v2854 = vld [vmem:[%s2637 + $0x9c] sm:$0xf]
        %v2855 = vld [vmem:[%s2637 + $0xa0] sm:$0xf]
        %v2856 = vld [vmem:[%s2637 + $0xa4] sm:$0x1]
        %v2857 = vld [vmem:[%s2637 + $0xa8] sm:$0xf]
        %v2858 = vld [vmem:[%s2637 + $0xac] sm:$0xf]
        %v2859 = vld [vmem:[%s2637 + $0xb0] sm:$0x1]
        %v2860 = vld [vmem:[%s2637 + $0xb4] sm:$0xf]
        %v2861 = vld [vmem:[%s2637 + $0xb8] sm:$0xf]
        %v2862 = vld [vmem:[%s2637 + $0xbc] sm:$0x1]
        %v2911 = vunpack.c.l.b16 %v2815
        %v2912 = vunpack.c.l.b16 %v2816
        %v2913 = vunpack.c.l.b16 %v2817
        %v2914 = vunpack.c.l.b16 %v2818
        %v2915 = vunpack.c.l.b16 %v2819
        %v2916 = vunpack.c.l.b16 %v2820
        %v2917 = vunpack.c.l.b16 %v2821
        %v2918 = vunpack.c.l.b16 %v2822
        %v2919 = vunpack.c.l.b16 %v2823
        %v2920 = vunpack.c.l.b16 %v2824
        %v2921 = vunpack.c.l.b16 %v2825
        %v2922 = vunpack.c.l.b16 %v2826
        %v2923 = vunpack.c.l.b16 %v2827
        %v2924 = vunpack.c.l.b16 %v2828
        %v2925 = vunpack.c.l.b16 %v2829
        %v2926 = vunpack.c.l.b16 %v2830
        %v2927 = vunpack.c.l.b16 %v2831
        %v2928 = vunpack.c.l.b16 %v2832
        %v2929 = vunpack.c.l.b16 %v2833
        %v2930 = vunpack.c.l.b16 %v2834
        %v2931 = vunpack.c.l.b16 %v2835
        %v2932 = vunpack.c.l.b16 %v2836
        %v2933 = vunpack.c.l.b16 %v2837
        %v2934 = vunpack.c.l.b16 %v2838
        %v2935 = vunpack.c.l.b16 %v2839
        %v2936 = vunpack.c.l.b16 %v2840
        %v2937 = vunpack.c.l.b16 %v2841
        %v2938 = vunpack.c.l.b16 %v2842
        %v2939 = vunpack.c.l.b16 %v2843
        %v2940 = vunpack.c.l.b16 %v2844
        %v2941 = vunpack.c.l.b16 %v2845
        %v2942 = vunpack.c.l.b16 %v2846
        %v2943 = vunpack.c.l.b16 %v2847
        %v2944 = vunpack.c.l.b16 %v2848
        %v2945 = vunpack.c.l.b16 %v2849
        %v2946 = vunpack.c.l.b16 %v2850
        %v2947 = vunpack.c.l.b16 %v2851
        %v2948 = vunpack.c.l.b16 %v2852
        %v2949 = vunpack.c.l.b16 %v2853
        %v2950 = vunpack.c.l.b16 %v2854
        %v2951 = vunpack.c.l.b16 %v2855
        %v2952 = vunpack.c.l.b16 %v2856
        %v2953 = vunpack.c.l.b16 %v2857
        %v2954 = vunpack.c.l.b16 %v2858
        %v2955 = vunpack.c.l.b16 %v2859
        %v2956 = vunpack.c.l.b16 %v2860
        %v2957 = vunpack.c.l.b16 %v2861
        %v2958 = vunpack.c.l.b16 %v2862
        %v2959 = vpack.c.b16 %v2912, %v2911
        %v2960 = vpack.c.b16 %v2913, %v2913
        %v2961 = vpack.c.b16 %v2915, %v2914
        %v2962 = vpack.c.b16 %v2916, %v2916
        %v2963 = vpack.c.b16 %v2918, %v2917
        %v2964 = vpack.c.b16 %v2919, %v2919
        %v2965 = vpack.c.b16 %v2921, %v2920
        %v2966 = vpack.c.b16 %v2922, %v2922
        %v2967 = vpack.c.b16 %v2924, %v2923
        %v2968 = vpack.c.b16 %v2925, %v2925
        %v2969 = vpack.c.b16 %v2927, %v2926
        %v2970 = vpack.c.b16 %v2928, %v2928
        %v2971 = vpack.c.b16 %v2930, %v2929
        %v2972 = vpack.c.b16 %v2931, %v2931
        %v2973 = vpack.c.b16 %v2933, %v2932
        %v2974 = vpack.c.b16 %v2934, %v2934
        %v2975 = vpack.c.b16 %v2936, %v2935
        %v2976 = vpack.c.b16 %v2937, %v2937
        %v2977 = vpack.c.b16 %v2939, %v2938
        %v2978 = vpack.c.b16 %v2940, %v2940
        %v2979 = vpack.c.b16 %v2942, %v2941
        %v2980 = vpack.c.b16 %v2943, %v2943
        %v2981 = vpack.c.b16 %v2945, %v2944
        %v2982 = vpack.c.b16 %v2946, %v2946
        %v2983 = vpack.c.b16 %v2948, %v2947
        %v2984 = vpack.c.b16 %v2949, %v2949
        %v2985 = vpack.c.b16 %v2951, %v2950
        %v2986 = vpack.c.b16 %v2952, %v2952
        %v2987 = vpack.c.b16 %v2954, %v2953
        %v2988 = vpack.c.b16 %v2955, %v2955
        %v2989 = vpack.c.b16 %v2957, %v2956
        %v2990 = vpack.c.b16 %v2958, %v2958
        %v2992 = vshrl.u32 %v2959, 16
        %v2994 = vshll.u32 %v2959, 16
        %v2996 = vrot.slane %v2994, 1
        %v2997 = vor.u32 %v2992, %v2996
        %v2999 = vshll.u32 %v2960, 16
        %v3001 = vrot.slane %v2999, 1
        %v3002 = vsel %vm1190, %v2997, %v3001
        %v3004 = vshrl.u32 %v2961, 16
        %v3006 = vshll.u32 %v2961, 16
        %v3008 = vrot.slane %v3006, 1
        %v3009 = vor.u32 %v3004, %v3008
        %v3011 = vshll.u32 %v2962, 16
        %v3013 = vrot.slane %v3011, 1
        %v3014 = vsel %vm1190, %v3009, %v3013
        %v3016 = vshrl.u32 %v2963, 16
        %v3018 = vshll.u32 %v2963, 16
        %v3020 = vrot.slane %v3018, 1
        %v3021 = vor.u32 %v3016, %v3020
        %v3023 = vshll.u32 %v2964, 16
        %v3025 = vrot.slane %v3023, 1
        %v3026 = vsel %vm1190, %v3021, %v3025
        %v3028 = vshrl.u32 %v2965, 16
        %v3030 = vshll.u32 %v2965, 16
        %v3032 = vrot.slane %v3030, 1
        %v3033 = vor.u32 %v3028, %v3032
        %v3035 = vshll.u32 %v2966, 16
        %v3037 = vrot.slane %v3035, 1
        %v3038 = vsel %vm1190, %v3033, %v3037
        %v3040 = vshrl.u32 %v2967, 16
        %v3042 = vshll.u32 %v2967, 16
        %v3044 = vrot.slane %v3042, 1
        %v3045 = vor.u32 %v3040, %v3044
        %v3047 = vshll.u32 %v2968, 16
        %v3049 = vrot.slane %v3047, 1
        %v3050 = vsel %vm1190, %v3045, %v3049
        %v3052 = vshrl.u32 %v2969, 16
        %v3054 = vshll.u32 %v2969, 16
        %v3056 = vrot.slane %v3054, 1
        %v3057 = vor.u32 %v3052, %v3056
        %v3059 = vshll.u32 %v2970, 16
        %v3061 = vrot.slane %v3059, 1
        %v3062 = vsel %vm1190, %v3057, %v3061
        %v3064 = vshrl.u32 %v2971, 16
        %v3066 = vshll.u32 %v2971, 16
        %v3068 = vrot.slane %v3066, 1
        %v3069 = vor.u32 %v3064, %v3068
        %v3071 = vshll.u32 %v2972, 16
        %v3073 = vrot.slane %v3071, 1
        %v3074 = vsel %vm1190, %v3069, %v3073
        %v3076 = vshrl.u32 %v2973, 16
        %v3078 = vshll.u32 %v2973, 16
        %v3080 = vrot.slane %v3078, 1
        %v3081 = vor.u32 %v3076, %v3080
        %v3083 = vshll.u32 %v2974, 16
        %v3085 = vrot.slane %v3083, 1
        %v3086 = vsel %vm1190, %v3081, %v3085
        %v3088 = vshrl.u32 %v2975, 16
        %v3090 = vshll.u32 %v2975, 16
        %v3092 = vrot.slane %v3090, 1
        %v3093 = vor.u32 %v3088, %v3092
        %v3095 = vshll.u32 %v2976, 16
        %v3097 = vrot.slane %v3095, 1
        %v3098 = vsel %vm1190, %v3093, %v3097
        %v3100 = vshrl.u32 %v2977, 16
        %v3102 = vshll.u32 %v2977, 16
        %v3104 = vrot.slane %v3102, 1
        %v3105 = vor.u32 %v3100, %v3104
        %v3107 = vshll.u32 %v2978, 16
        %v3109 = vrot.slane %v3107, 1
        %v3110 = vsel %vm1190, %v3105, %v3109
        %v3112 = vshrl.u32 %v2979, 16
        %v3114 = vshll.u32 %v2979, 16
        %v3116 = vrot.slane %v3114, 1
        %v3117 = vor.u32 %v3112, %v3116
        %v3119 = vshll.u32 %v2980, 16
        %v3121 = vrot.slane %v3119, 1
        %v3122 = vsel %vm1190, %v3117, %v3121
        %v3124 = vshrl.u32 %v2981, 16
        %v3126 = vshll.u32 %v2981, 16
        %v3128 = vrot.slane %v3126, 1
        %v3129 = vor.u32 %v3124, %v3128
        %v3131 = vshll.u32 %v2982, 16
        %v3133 = vrot.slane %v3131, 1
        %v3134 = vsel %vm1190, %v3129, %v3133
        %v3136 = vshrl.u32 %v2983, 16
        %v3138 = vshll.u32 %v2983, 16
        %v3140 = vrot.slane %v3138, 1
        %v3141 = vor.u32 %v3136, %v3140
        %v3143 = vshll.u32 %v2984, 16
        %v3145 = vrot.slane %v3143, 1
        %v3146 = vsel %vm1190, %v3141, %v3145
        %v3148 = vshrl.u32 %v2985, 16
        %v3150 = vshll.u32 %v2985, 16
        %v3152 = vrot.slane %v3150, 1
        %v3153 = vor.u32 %v3148, %v3152
        %v3155 = vshll.u32 %v2986, 16
        %v3157 = vrot.slane %v3155, 1
        %v3158 = vsel %vm1190, %v3153, %v3157
        %v3160 = vshrl.u32 %v2987, 16
        %v3162 = vshll.u32 %v2987, 16
        %v3164 = vrot.slane %v3162, 1
        %v3165 = vor.u32 %v3160, %v3164
        %v3167 = vshll.u32 %v2988, 16
        %v3169 = vrot.slane %v3167, 1
        %v3170 = vsel %vm1190, %v3165, %v3169
        %v3172 = vshrl.u32 %v2989, 16
        %v3174 = vshll.u32 %v2989, 16
        %v3176 = vrot.slane %v3174, 1
        %v3177 = vor.u32 %v3172, %v3176
        %v3179 = vshll.u32 %v2990, 16
        %v3181 = vrot.slane %v3179, 1
        %v3182 = vsel %vm1190, %v3177, %v3181
        %3183 = vrot.lane.b32.xlu0 %v3002, 56
        %v3184 = vpop.permute.xlu0 %3183
        %3185 = vrot.lane.b32.xlu0 %v3014, 56
        %v3186 = vpop.permute.xlu0 %3185
        %3187 = vrot.lane.b32.xlu0 %v3026, 56
        %v3188 = vpop.permute.xlu0 %3187
        %3189 = vrot.lane.b32.xlu0 %v3038, 56
        %v3190 = vpop.permute.xlu0 %3189
        %3191 = vrot.lane.b32.xlu0 %v3050, 56
        %v3192 = vpop.permute.xlu0 %3191
        %3193 = vrot.lane.b32.xlu0 %v3062, 56
        %v3194 = vpop.permute.xlu0 %3193
        %3195 = vrot.lane.b32.xlu0 %v3074, 56
        %v3196 = vpop.permute.xlu0 %3195
        %3197 = vrot.lane.b32.xlu0 %v3086, 56
        %v3198 = vpop.permute.xlu0 %3197
        %3199 = vrot.lane.b32.xlu0 %v3098, 56
        %v3200 = vpop.permute.xlu0 %3199
        %3201 = vrot.lane.b32.xlu0 %v3110, 56
        %v3202 = vpop.permute.xlu0 %3201
        %3203 = vrot.lane.b32.xlu0 %v3122, 56
        %v3204 = vpop.permute.xlu0 %3203
        %3205 = vrot.lane.b32.xlu0 %v3134, 56
        %v3206 = vpop.permute.xlu0 %3205
        %3207 = vrot.lane.b32.xlu0 %v3146, 56
        %v3208 = vpop.permute.xlu0 %3207
        %3209 = vrot.lane.b32.xlu0 %v3158, 56
        %v3210 = vpop.permute.xlu0 %3209
        %3211 = vrot.lane.b32.xlu0 %v3170, 56
        %v3212 = vpop.permute.xlu0 %3211
        %3213 = vrot.lane.b32.xlu0 %v3182, 56
        %v3214 = vpop.permute.xlu0 %3213
        %vm3231 = vcmask 523712
        %3232 = vst.msk [vmem:[#allocation3] sm:$0xff] %vm3231, %v3184
        %3233 = vst.msk [vmem:[#allocation3 + $0x8] sm:$0xff] %vm3231, %v3186
        %3234 = vst.msk [vmem:[#allocation3 + $0x10] sm:$0xff] %vm3231, %v3188
        %3235 = vst.msk [vmem:[#allocation3 + $0x18] sm:$0xff] %vm3231, %v3190
        %3236 = vst.msk [vmem:[#allocation3 + $0x20] sm:$0xff] %vm3231, %v3192
        %3237 = vst.msk [vmem:[#allocation3 + $0x28] sm:$0xff] %vm3231, %v3194
        %3238 = vst.msk [vmem:[#allocation3 + $0x30] sm:$0xff] %vm3231, %v3196
        %3239 = vst.msk [vmem:[#allocation3 + $0x38] sm:$0xff] %vm3231, %v3198
        %3240 = vst.msk [vmem:[#allocation3 + $0x40] sm:$0xff] %vm3231, %v3200
        %3241 = vst.msk [vmem:[#allocation3 + $0x48] sm:$0xff] %vm3231, %v3202
        %3242 = vst.msk [vmem:[#allocation3 + $0x50] sm:$0xff] %vm3231, %v3204
        %3243 = vst.msk [vmem:[#allocation3 + $0x58] sm:$0xff] %vm3231, %v3206
        %3244 = vst.msk [vmem:[#allocation3 + $0x60] sm:$0xff] %vm3231, %v3208
        %3245 = vst.msk [vmem:[#allocation3 + $0x68] sm:$0xff] %vm3231, %v3210
        %3246 = vst.msk [vmem:[#allocation3 + $0x70] sm:$0xff] %vm3231, %v3212
        %3247 = vst.msk [vmem:[#allocation3 + $0x78] sm:$0xff] %vm3231, %v3214
        %v3248 = vld [vmem:[%s2637] sm:$0xe]
        %v3249 = vld [vmem:[%s2637 + $0x4] sm:$0xf]
        %v3250 = vld [vmem:[%s2637 + $0x8] sm:$0x1]
        %v3251 = vld [vmem:[%s2637 + $0xc] sm:$0xe]
        %v3252 = vld [vmem:[%s2637 + $0x10] sm:$0xf]
        %v3253 = vld [vmem:[%s2637 + $0x14] sm:$0x1]
        %v3254 = vld [vmem:[%s2637 + $0x18] sm:$0xe]
        %v3255 = vld [vmem:[%s2637 + $0x1c] sm:$0xf]
        %v3256 = vld [vmem:[%s2637 + $0x20] sm:$0x1]
        %v3257 = vld [vmem:[%s2637 + $0x24] sm:$0xe]
        %v3258 = vld [vmem:[%s2637 + $0x28] sm:$0xf]
        %v3259 = vld [vmem:[%s2637 + $0x2c] sm:$0x1]
        %v3260 = vld [vmem:[%s2637 + $0x30] sm:$0xe]
        %v3261 = vld [vmem:[%s2637 + $0x34] sm:$0xf]
        %v3262 = vld [vmem:[%s2637 + $0x38] sm:$0x1]
        %v3263 = vld [vmem:[%s2637 + $0x3c] sm:$0xe]
        %v3264 = vld [vmem:[%s2637 + $0x40] sm:$0xf]
        %v3265 = vld [vmem:[%s2637 + $0x44] sm:$0x1]
        %v3266 = vld [vmem:[%s2637 + $0x48] sm:$0xe]
        %v3267 = vld [vmem:[%s2637 + $0x4c] sm:$0xf]
        %v3268 = vld [vmem:[%s2637 + $0x50] sm:$0x1]
        %v3269 = vld [vmem:[%s2637 + $0x54] sm:$0xe]
        %v3270 = vld [vmem:[%s2637 + $0x58] sm:$0xf]
        %v3271 = vld [vmem:[%s2637 + $0x5c] sm:$0x1]
        %v3272 = vld [vmem:[%s2637 + $0x60] sm:$0xe]
        %v3273 = vld [vmem:[%s2637 + $0x64] sm:$0xf]
        %v3274 = vld [vmem:[%s2637 + $0x68] sm:$0x1]
        %v3275 = vld [vmem:[%s2637 + $0x6c] sm:$0xe]
        %v3276 = vld [vmem:[%s2637 + $0x70] sm:$0xf]
        %v3277 = vld [vmem:[%s2637 + $0x74] sm:$0x1]
        %v3278 = vld [vmem:[%s2637 + $0x78] sm:$0xe]
        %v3279 = vld [vmem:[%s2637 + $0x7c] sm:$0xf]
        %v3280 = vld [vmem:[%s2637 + $0x80] sm:$0x1]
        %v3281 = vld [vmem:[%s2637 + $0x84] sm:$0xe]
        %v3282 = vld [vmem:[%s2637 + $0x88] sm:$0xf]
        %v3283 = vld [vmem:[%s2637 + $0x8c] sm:$0x1]
        %v3284 = vld [vmem:[%s2637 + $0x90] sm:$0xe]
        %v3285 = vld [vmem:[%s2637 + $0x94] sm:$0xf]
        %v3286 = vld [vmem:[%s2637 + $0x98] sm:$0x1]
        %v3287 = vld [vmem:[%s2637 + $0x9c] sm:$0xe]
        %v3288 = vld [vmem:[%s2637 + $0xa0] sm:$0xf]
        %v3289 = vld [vmem:[%s2637 + $0xa4] sm:$0x1]
        %v3290 = vld [vmem:[%s2637 + $0xa8] sm:$0xe]
        %v3291 = vld [vmem:[%s2637 + $0xac] sm:$0xf]
        %v3292 = vld [vmem:[%s2637 + $0xb0] sm:$0x1]
        %v3293 = vld [vmem:[%s2637 + $0xb4] sm:$0xe]
        %v3294 = vld [vmem:[%s2637 + $0xb8] sm:$0xf]
        %v3295 = vld [vmem:[%s2637 + $0xbc] sm:$0x1]
        %v3344 = vunpack.c.l.b16 %v3248
        %v3345 = vunpack.c.l.b16 %v3249
        %v3346 = vunpack.c.l.b16 %v3250
        %v3347 = vunpack.c.l.b16 %v3251
        %v3348 = vunpack.c.l.b16 %v3252
        %v3349 = vunpack.c.l.b16 %v3253
        %v3350 = vunpack.c.l.b16 %v3254
        %v3351 = vunpack.c.l.b16 %v3255
        %v3352 = vunpack.c.l.b16 %v3256
        %v3353 = vunpack.c.l.b16 %v3257
        %v3354 = vunpack.c.l.b16 %v3258
        %v3355 = vunpack.c.l.b16 %v3259
        %v3356 = vunpack.c.l.b16 %v3260
        %v3357 = vunpack.c.l.b16 %v3261
        %v3358 = vunpack.c.l.b16 %v3262
        %v3359 = vunpack.c.l.b16 %v3263
        %v3360 = vunpack.c.l.b16 %v3264
        %v3361 = vunpack.c.l.b16 %v3265
        %v3362 = vunpack.c.l.b16 %v3266
        %v3363 = vunpack.c.l.b16 %v3267
        %v3364 = vunpack.c.l.b16 %v3268
        %v3365 = vunpack.c.l.b16 %v3269
        %v3366 = vunpack.c.l.b16 %v3270
        %v3367 = vunpack.c.l.b16 %v3271
        %v3368 = vunpack.c.l.b16 %v3272
        %v3369 = vunpack.c.l.b16 %v3273
        %v3370 = vunpack.c.l.b16 %v3274
        %v3371 = vunpack.c.l.b16 %v3275
        %v3372 = vunpack.c.l.b16 %v3276
        %v3373 = vunpack.c.l.b16 %v3277
        %v3374 = vunpack.c.l.b16 %v3278
        %v3375 = vunpack.c.l.b16 %v3279
        %v3376 = vunpack.c.l.b16 %v3280
        %v3377 = vunpack.c.l.b16 %v3281
        %v3378 = vunpack.c.l.b16 %v3282
        %v3379 = vunpack.c.l.b16 %v3283
        %v3380 = vunpack.c.l.b16 %v3284
        %v3381 = vunpack.c.l.b16 %v3285
        %v3382 = vunpack.c.l.b16 %v3286
        %v3383 = vunpack.c.l.b16 %v3287
        %v3384 = vunpack.c.l.b16 %v3288
        %v3385 = vunpack.c.l.b16 %v3289
        %v3386 = vunpack.c.l.b16 %v3290
        %v3387 = vunpack.c.l.b16 %v3291
        %v3388 = vunpack.c.l.b16 %v3292
        %v3389 = vunpack.c.l.b16 %v3293
        %v3390 = vunpack.c.l.b16 %v3294
        %v3391 = vunpack.c.l.b16 %v3295
        %v3392 = vpack.c.b16 %v3345, %v3344
        %v3393 = vpack.c.b16 %v3346, %v3346
        %v3394 = vpack.c.b16 %v3348, %v3347
        %v3395 = vpack.c.b16 %v3349, %v3349
        %v3396 = vpack.c.b16 %v3351, %v3350
        %v3397 = vpack.c.b16 %v3352, %v3352
        %v3398 = vpack.c.b16 %v3354, %v3353
        %v3399 = vpack.c.b16 %v3355, %v3355
        %v3400 = vpack.c.b16 %v3357, %v3356
        %v3401 = vpack.c.b16 %v3358, %v3358
        %v3402 = vpack.c.b16 %v3360, %v3359
        %v3403 = vpack.c.b16 %v3361, %v3361
        %v3404 = vpack.c.b16 %v3363, %v3362
        %v3405 = vpack.c.b16 %v3364, %v3364
        %v3406 = vpack.c.b16 %v3366, %v3365
        %v3407 = vpack.c.b16 %v3367, %v3367
        %v3408 = vpack.c.b16 %v3369, %v3368
        %v3409 = vpack.c.b16 %v3370, %v3370
        %v3410 = vpack.c.b16 %v3372, %v3371
        %v3411 = vpack.c.b16 %v3373, %v3373
        %v3412 = vpack.c.b16 %v3375, %v3374
        %v3413 = vpack.c.b16 %v3376, %v3376
        %v3414 = vpack.c.b16 %v3378, %v3377
        %v3415 = vpack.c.b16 %v3379, %v3379
        %v3416 = vpack.c.b16 %v3381, %v3380
        %v3417 = vpack.c.b16 %v3382, %v3382
        %v3418 = vpack.c.b16 %v3384, %v3383
        %v3419 = vpack.c.b16 %v3385, %v3385
        %v3420 = vpack.c.b16 %v3387, %v3386
        %v3421 = vpack.c.b16 %v3388, %v3388
        %v3422 = vpack.c.b16 %v3390, %v3389
        %v3423 = vpack.c.b16 %v3391, %v3391
        %v3424 = vrot.slane %v3392, 1
        %v3425 = vrot.slane %v3393, 1
        %v3426 = vsel %vm1624, %v3424, %v3425
        %v3427 = vrot.slane %v3394, 1
        %v3428 = vrot.slane %v3395, 1
        %v3429 = vsel %vm1624, %v3427, %v3428
        %v3430 = vrot.slane %v3396, 1
        %v3431 = vrot.slane %v3397, 1
        %v3432 = vsel %vm1624, %v3430, %v3431
        %v3433 = vrot.slane %v3398, 1
        %v3434 = vrot.slane %v3399, 1
        %v3435 = vsel %vm1624, %v3433, %v3434
        %v3436 = vrot.slane %v3400, 1
        %v3437 = vrot.slane %v3401, 1
        %v3438 = vsel %vm1624, %v3436, %v3437
        %v3439 = vrot.slane %v3402, 1
        %v3440 = vrot.slane %v3403, 1
        %v3441 = vsel %vm1624, %v3439, %v3440
        %v3442 = vrot.slane %v3404, 1
        %v3443 = vrot.slane %v3405, 1
        %v3444 = vsel %vm1624, %v3442, %v3443
        %v3445 = vrot.slane %v3406, 1
        %v3446 = vrot.slane %v3407, 1
        %v3447 = vsel %vm1624, %v3445, %v3446
        %v3448 = vrot.slane %v3408, 1
        %v3449 = vrot.slane %v3409, 1
        %v3450 = vsel %vm1624, %v3448, %v3449
        %v3451 = vrot.slane %v3410, 1
        %v3452 = vrot.slane %v3411, 1
        %v3453 = vsel %vm1624, %v3451, %v3452
        %v3454 = vrot.slane %v3412, 1
        %v3455 = vrot.slane %v3413, 1
        %v3456 = vsel %vm1624, %v3454, %v3455
        %v3457 = vrot.slane %v3414, 1
        %v3458 = vrot.slane %v3415, 1
        %v3459 = vsel %vm1624, %v3457, %v3458
        %v3460 = vrot.slane %v3416, 1
        %v3461 = vrot.slane %v3417, 1
        %v3462 = vsel %vm1624, %v3460, %v3461
        %v3463 = vrot.slane %v3418, 1
        %v3464 = vrot.slane %v3419, 1
        %v3465 = vsel %vm1624, %v3463, %v3464
        %v3466 = vrot.slane %v3420, 1
        %v3467 = vrot.slane %v3421, 1
        %v3468 = vsel %vm1624, %v3466, %v3467
        %v3469 = vrot.slane %v3422, 1
        %v3470 = vrot.slane %v3423, 1
        %v3471 = vsel %vm1624, %v3469, %v3470
        %3472 = vrot.lane.b32.xlu0 %v3426, 64
        %v3473 = vpop.permute.xlu0 %3472
        %3474 = vrot.lane.b32.xlu0 %v3429, 64
        %v3475 = vpop.permute.xlu0 %3474
        %3476 = vrot.lane.b32.xlu0 %v3432, 64
        %v3477 = vpop.permute.xlu0 %3476
        %3478 = vrot.lane.b32.xlu0 %v3435, 64
        %v3479 = vpop.permute.xlu0 %3478
        %3480 = vrot.lane.b32.xlu0 %v3438, 64
        %v3481 = vpop.permute.xlu0 %3480
        %3482 = vrot.lane.b32.xlu0 %v3441, 64
        %v3483 = vpop.permute.xlu0 %3482
        %3484 = vrot.lane.b32.xlu0 %v3444, 64
        %v3485 = vpop.permute.xlu0 %3484
        %3486 = vrot.lane.b32.xlu0 %v3447, 64
        %v3487 = vpop.permute.xlu0 %3486
        %3488 = vrot.lane.b32.xlu0 %v3450, 64
        %v3489 = vpop.permute.xlu0 %3488
        %3490 = vrot.lane.b32.xlu0 %v3453, 64
        %v3491 = vpop.permute.xlu0 %3490
        %3492 = vrot.lane.b32.xlu0 %v3456, 64
        %v3493 = vpop.permute.xlu0 %3492
        %3494 = vrot.lane.b32.xlu0 %v3459, 64
        %v3495 = vpop.permute.xlu0 %3494
        %3496 = vrot.lane.b32.xlu0 %v3462, 64
        %v3497 = vpop.permute.xlu0 %3496
        %3498 = vrot.lane.b32.xlu0 %v3465, 64
        %v3499 = vpop.permute.xlu0 %3498
        %3500 = vrot.lane.b32.xlu0 %v3468, 64
        %v3501 = vpop.permute.xlu0 %3500
        %3502 = vrot.lane.b32.xlu0 %v3471, 64
        %v3503 = vpop.permute.xlu0 %3502
        %vm3520 = vcmask 589312
        %3521 = vst.msk [vmem:[#allocation3] sm:$0xff] %vm3520, %v3473
        %3522 = vst.msk [vmem:[#allocation3 + $0x8] sm:$0xff] %vm3520, %v3475
        %3523 = vst.msk [vmem:[#allocation3 + $0x10] sm:$0xff] %vm3520, %v3477
        %3524 = vst.msk [vmem:[#allocation3 + $0x18] sm:$0xff] %vm3520, %v3479
        %3525 = vst.msk [vmem:[#allocation3 + $0x20] sm:$0xff] %vm3520, %v3481
        %3526 = vst.msk [vmem:[#allocation3 + $0x28] sm:$0xff] %vm3520, %v3483
        %3527 = vst.msk [vmem:[#allocation3 + $0x30] sm:$0xff] %vm3520, %v3485
        %3528 = vst.msk [vmem:[#allocation3 + $0x38] sm:$0xff] %vm3520, %v3487
        %3529 = vst.msk [vmem:[#allocation3 + $0x40] sm:$0xff] %vm3520, %v3489
        %3530 = vst.msk [vmem:[#allocation3 + $0x48] sm:$0xff] %vm3520, %v3491
        %3531 = vst.msk [vmem:[#allocation3 + $0x50] sm:$0xff] %vm3520, %v3493
        %3532 = vst.msk [vmem:[#allocation3 + $0x58] sm:$0xff] %vm3520, %v3495
        %3533 = vst.msk [vmem:[#allocation3 + $0x60] sm:$0xff] %vm3520, %v3497
        %3534 = vst.msk [vmem:[#allocation3 + $0x68] sm:$0xff] %vm3520, %v3499
        %3535 = vst.msk [vmem:[#allocation3 + $0x70] sm:$0xff] %vm3520, %v3501
        %3536 = vst.msk [vmem:[#allocation3 + $0x78] sm:$0xff] %vm3520, %v3503
        %3537 = vrot.lane.b32.xlu0 %v332, 64
        %v3538 = vpop.permute.xlu0 %3537
        %3539 = vrot.lane.b32.xlu0 %v333, 64
        %v3540 = vpop.permute.xlu0 %3539
        %3541 = vrot.lane.b32.xlu0 %v334, 64
        %v3542 = vpop.permute.xlu0 %3541
        %3543 = vrot.lane.b32.xlu0 %v335, 64
        %v3544 = vpop.permute.xlu0 %3543
        %3545 = vrot.lane.b32.xlu0 %v336, 64
        %v3546 = vpop.permute.xlu0 %3545
        %3547 = vrot.lane.b32.xlu0 %v337, 64
        %v3548 = vpop.permute.xlu0 %3547
        %3549 = vrot.lane.b32.xlu0 %v338, 64
        %v3550 = vpop.permute.xlu0 %3549
        %3551 = vrot.lane.b32.xlu0 %v339, 64
        %v3552 = vpop.permute.xlu0 %3551
        %3553 = vrot.lane.b32.xlu0 %v340, 64
        %v3554 = vpop.permute.xlu0 %3553
        %3555 = vrot.lane.b32.xlu0 %v341, 64
        %v3556 = vpop.permute.xlu0 %3555
        %3557 = vrot.lane.b32.xlu0 %v342, 64
        %v3558 = vpop.permute.xlu0 %3557
        %3559 = vrot.lane.b32.xlu0 %v343, 64
        %v3560 = vpop.permute.xlu0 %3559
        %3561 = vrot.lane.b32.xlu0 %v344, 64
        %v3562 = vpop.permute.xlu0 %3561
        %3563 = vrot.lane.b32.xlu0 %v345, 64
        %v3564 = vpop.permute.xlu0 %3563
        %3565 = vrot.lane.b32.xlu0 %v346, 64
        %v3566 = vpop.permute.xlu0 %3565
        %3567 = vrot.lane.b32.xlu0 %v347, 64
        %v3568 = vpop.permute.xlu0 %3567
        %vm3585 = vcmask 785984
        %3586 = vst.msk [vmem:[#allocation3] sm:$0xff] %vm3585, %v3538
        %3587 = vst.msk [vmem:[#allocation3 + $0x8] sm:$0xff] %vm3585, %v3540
        %3588 = vst.msk [vmem:[#allocation3 + $0x10] sm:$0xff] %vm3585, %v3542
        %3589 = vst.msk [vmem:[#allocation3 + $0x18] sm:$0xff] %vm3585, %v3544
        %3590 = vst.msk [vmem:[#allocation3 + $0x20] sm:$0xff] %vm3585, %v3546
        %3591 = vst.msk [vmem:[#allocation3 + $0x28] sm:$0xff] %vm3585, %v3548
        %3592 = vst.msk [vmem:[#allocation3 + $0x30] sm:$0xff] %vm3585, %v3550
        %3593 = vst.msk [vmem:[#allocation3 + $0x38] sm:$0xff] %vm3585, %v3552
        %3594 = vst.msk [vmem:[#allocation3 + $0x40] sm:$0xff] %vm3585, %v3554
        %3595 = vst.msk [vmem:[#allocation3 + $0x48] sm:$0xff] %vm3585, %v3556
        %3596 = vst.msk [vmem:[#allocation3 + $0x50] sm:$0xff] %vm3585, %v3558
        %3597 = vst.msk [vmem:[#allocation3 + $0x58] sm:$0xff] %vm3585, %v3560
        %3598 = vst.msk [vmem:[#allocation3 + $0x60] sm:$0xff] %vm3585, %v3562
        %3599 = vst.msk [vmem:[#allocation3 + $0x68] sm:$0xff] %vm3585, %v3564
        %3600 = vst.msk [vmem:[#allocation3 + $0x70] sm:$0xff] %vm3585, %v3566
        %3601 = vst.msk [vmem:[#allocation3 + $0x78] sm:$0xff] %vm3585, %v3568
        %v3602 = vld [vmem:[#allocation3] sm:$0xff]
        %v3603 = vld [vmem:[#allocation3 + $0x8] sm:$0xff]
        %v3604 = vld [vmem:[#allocation3 + $0x10] sm:$0xff]
        %v3605 = vld [vmem:[#allocation3 + $0x18] sm:$0xff]
        %v3606 = vld [vmem:[#allocation3 + $0x20] sm:$0xff]
        %v3607 = vld [vmem:[#allocation3 + $0x28] sm:$0xff]
        %v3608 = vld [vmem:[#allocation3 + $0x30] sm:$0xff]
        %v3609 = vld [vmem:[#allocation3 + $0x38] sm:$0xff]
        %v3610 = vld [vmem:[#allocation3 + $0x40] sm:$0xff]
        %v3611 = vld [vmem:[#allocation3 + $0x48] sm:$0xff]
        %v3612 = vld [vmem:[#allocation3 + $0x50] sm:$0xff]
        %v3613 = vld [vmem:[#allocation3 + $0x58] sm:$0xff]
        %v3614 = vld [vmem:[#allocation3 + $0x60] sm:$0xff]
        %v3615 = vld [vmem:[#allocation3 + $0x68] sm:$0xff]
        %v3616 = vld [vmem:[#allocation3 + $0x70] sm:$0xff]
        %v3617 = vld [vmem:[#allocation3 + $0x78] sm:$0xff]
        %v3618 = vld [vmem:[%s1] sm:$0xf]
        %v3619 = vld [vmem:[%s1 + $0x4] sm:$0xf]
        %v3620 = vld [vmem:[%s1 + $0x8] sm:$0xf]
        %v3621 = vld [vmem:[%s1 + $0xc] sm:$0xf]
        %v3622 = vld [vmem:[%s1 + $0x10] sm:$0xf]
        %v3623 = vld [vmem:[%s1 + $0x14] sm:$0xf]
        %v3624 = vld [vmem:[%s1 + $0x18] sm:$0xf]
        %v3625 = vld [vmem:[%s1 + $0x1c] sm:$0xf]
        %v3626 = vld [vmem:[%s1 + $0x20] sm:$0xf]
        %v3627 = vld [vmem:[%s1 + $0x24] sm:$0xf]
        %v3628 = vld [vmem:[%s1 + $0x28] sm:$0xf]
        %v3629 = vld [vmem:[%s1 + $0x2c] sm:$0xf]
        %v3642 = vunpack.c.l.b16 %v3618
        %v3643 = vunpack.c.l.b16 %v3619
        %v3644 = vunpack.c.l.b16 %v3620
        %v3645 = vunpack.c.l.b16 %v3621
        %v3646 = vunpack.c.l.b16 %v3622
        %v3647 = vunpack.c.l.b16 %v3623
        %v3648 = vunpack.c.l.b16 %v3624
        %v3649 = vunpack.c.l.b16 %v3625
        %v3650 = vunpack.c.l.b16 %v3626
        %v3651 = vunpack.c.l.b16 %v3627
        %v3652 = vunpack.c.l.b16 %v3628
        %v3653 = vunpack.c.l.b16 %v3629
        %v3654 = vpack.c.b16 %v3643, %v3642
        %v3655 = vpack.c.b16 %v3645, %v3644
        %v3656 = vpack.c.b16 %v3647, %v3646
        %v3657 = vpack.c.b16 %v3649, %v3648
        %v3658 = vpack.c.b16 %v3651, %v3650
        %v3659 = vpack.c.b16 %v3653, %v3652
        %vm3666 = vcmask 785408
        %v3668 = vsel %vm3666, %v3602, 0
        %v3671 = vsel %vm3666, %v3603, 0
        %v3674 = vsel %vm3666, %v3604, 0
        %v3677 = vsel %vm3666, %v3605, 0
        %v3680 = vsel %vm3666, %v3606, 0
        %v3683 = vsel %vm3666, %v3607, 0
        %v3686 = vsel %vm3666, %v3608, 0
        %v3689 = vsel %vm3666, %v3609, 0
        %v3692 = vsel %vm3666, %v3610, 0
        %v3695 = vsel %vm3666, %v3611, 0
        %v3698 = vsel %vm3666, %v3612, 0
        %v3701 = vsel %vm3666, %v3613, 0
        %v3704 = vsel %vm3666, %v3614, 0
        %v3707 = vsel %vm3666, %v3615, 0
        %v3710 = vsel %vm3666, %v3616, 0
        %v3713 = vsel %vm3666, %v3617, 0
        %3715 = vmatprep.subr.bf16.mxu0 0
        %3716 = vmatpush1.bf16.msra.mxu0 %v3654
        %3717 = vmatprep.subr.bf16.mxu0 0
        %3718 = vmatpush1.bf16.msra.mxu0 %v3655
        %3719 = vmatprep.subr.bf16.mxu0 0
        %3720 = vmatpush1.bf16.msra.mxu0 %v3656
        %3721 = vmatprep.subr.bf16.mxu0 0
        %3722 = vmatpush1.bf16.msra.mxu0 %v3657
        %3723 = vmatprep.subr.bf16.mxu0 0
        %3724 = vmatpush1.bf16.msra.mxu0 %v3658
        %3725 = vmatprep.subr.bf16.mxu0 0
        %3726 = vmatpush1.bf16.msra.mxu0 %v3659
        %3727 = vmatprep.subr.bf16.mxu0 0
        %3728 = vmatpush1.bf16.msra.mxu0 0
        %3729 = vmatprep.subr.bf16.mxu0 0
        %3730 = vmatpush1.bf16.msra.mxu0 0
        %3731 = vmatprep.subr.bf16.mxu0 0
        %3732 = vmatpush1.bf16.msra.mxu0 0
        %3733 = vmatprep.subr.bf16.mxu0 0
        %3734 = vmatpush1.bf16.msra.mxu0 0
        %3735 = vmatprep.subr.bf16.mxu0 0
        %3736 = vmatpush1.bf16.msra.mxu0 0
        %3737 = vmatprep.subr.bf16.mxu0 0
        %3738 = vmatpush1.bf16.msra.mxu0 0
        %3739 = vmatprep.subr.bf16.mxu0 0
        %3740 = vmatpush1.bf16.msra.mxu0 0
        %3741 = vmatprep.subr.bf16.mxu0 0
        %3742 = vmatpush1.bf16.msra.mxu0 0
        %3743 = vmatprep.subr.bf16.mxu0 0
        %3744 = vmatpush1.bf16.msra.mxu0 0
        %3745 = vmatprep.subr.bf16.mxu0 0
        %3746 = vmatpush1.bf16.msra.mxu0 0
        %3747 = vmatprep.mubr.bf16.mxu0 0
        %3748 = vmatmul.mubr.bf16.gmra.mrb[0].mxu0 %v3668
        %v3749 = vpop.f32.mrb[0].mxu0
        %v3750 = vadd.f32 0.0, %v3749
        %v3751 = vpop.f32.mrb[0].mxu0
        %v3752 = vpop.f32.mrb[0].mxu0
        %v3753 = vadd.f32 0.0, %v3752
        %v3754 = vpop.f32.mrb[0].mxu0
        %3755 = vmatprep.mubr.bf16.mxu0 0
        %3756 = vmatmul.mubr.bf16.gmra.mrb[0].mxu0 %v3671
        %v3757 = vpop.f32.mrb[0].mxu0
        %v3758 = vadd.f32 0.0, %v3757
        %v3759 = vpop.f32.mrb[0].mxu0
        %v3760 = vpop.f32.mrb[0].mxu0
        %v3761 = vadd.f32 0.0, %v3760
        %v3762 = vpop.f32.mrb[0].mxu0
        %3763 = vmatprep.mubr.bf16.mxu0 0
        %3764 = vmatmul.mubr.bf16.gmra.mrb[0].mxu0 %v3674
        %v3765 = vpop.f32.mrb[0].mxu0
        %v3766 = vadd.f32 0.0, %v3765
        %v3767 = vpop.f32.mrb[0].mxu0
        %v3768 = vpop.f32.mrb[0].mxu0
        %v3769 = vadd.f32 0.0, %v3768
        %v3770 = vpop.f32.mrb[0].mxu0
        %3771 = vmatprep.mubr.bf16.mxu0 0
        %3772 = vmatmul.mubr.bf16.gmra.mrb[0].mxu0 %v3677
        %v3773 = vpop.f32.mrb[0].mxu0
        %v3774 = vadd.f32 0.0, %v3773
        %v3775 = vpop.f32.mrb[0].mxu0
        %v3776 = vpop.f32.mrb[0].mxu0
        %v3777 = vadd.f32 0.0, %v3776
        %v3778 = vpop.f32.mrb[0].mxu0
        %3779 = vmatprep.mubr.bf16.mxu0 0
        %3780 = vmatmul.mubr.bf16.gmra.mrb[0].mxu0 %v3680
        %v3781 = vpop.f32.mrb[0].mxu0
        %v3782 = vadd.f32 0.0, %v3781
        %v3783 = vpop.f32.mrb[0].mxu0
        %v3784 = vpop.f32.mrb[0].mxu0
        %v3785 = vadd.f32 0.0, %v3784
        %v3786 = vpop.f32.mrb[0].mxu0
        %3787 = vmatprep.mubr.bf16.mxu0 0
        %3788 = vmatmul.mubr.bf16.gmra.mrb[0].mxu0 %v3683
        %v3789 = vpop.f32.mrb[0].mxu0
        %v3790 = vadd.f32 0.0, %v3789
        %v3791 = vpop.f32.mrb[0].mxu0
        %v3792 = vpop.f32.mrb[0].mxu0
        %v3793 = vadd.f32 0.0, %v3792
        %v3794 = vpop.f32.mrb[0].mxu0
        %3795 = vmatprep.mubr.bf16.mxu0 0
        %3796 = vmatmul.mubr.bf16.gmra.mrb[0].mxu0 %v3686
        %v3797 = vpop.f32.mrb[0].mxu0
        %v3798 = vadd.f32 0.0, %v3797
        %v3799 = vpop.f32.mrb[0].mxu0
        %v3800 = vpop.f32.mrb[0].mxu0
        %v3801 = vadd.f32 0.0, %v3800
        %v3802 = vpop.f32.mrb[0].mxu0
        %3803 = vmatprep.mubr.bf16.mxu0 0
        %3804 = vmatmul.mubr.bf16.gmra.mrb[0].mxu0 %v3689
        %v3805 = vpop.f32.mrb[0].mxu0
        %v3806 = vadd.f32 0.0, %v3805
        %v3807 = vpop.f32.mrb[0].mxu0
        %v3808 = vpop.f32.mrb[0].mxu0
        %v3809 = vadd.f32 0.0, %v3808
        %v3810 = vpop.f32.mrb[0].mxu0
        %3811 = vmatprep.mubr.bf16.mxu0 0
        %3812 = vmatmul.mubr.bf16.gmra.mrb[0].mxu0 %v3692
        %v3813 = vpop.f32.mrb[0].mxu0
        %v3814 = vadd.f32 0.0, %v3813
        %v3815 = vpop.f32.mrb[0].mxu0
        %v3816 = vpop.f32.mrb[0].mxu0
        %v3817 = vadd.f32 0.0, %v3816
        %v3818 = vpop.f32.mrb[0].mxu0
        %3819 = vmatprep.mubr.bf16.mxu0 0
        %3820 = vmatmul.mubr.bf16.gmra.mrb[0].mxu0 %v3695
        %v3821 = vpop.f32.mrb[0].mxu0
        %v3822 = vadd.f32 0.0, %v3821
        %v3823 = vpop.f32.mrb[0].mxu0
        %v3824 = vpop.f32.mrb[0].mxu0
        %v3825 = vadd.f32 0.0, %v3824
        %v3826 = vpop.f32.mrb[0].mxu0
        %3827 = vmatprep.mubr.bf16.mxu0 0
        %3828 = vmatmul.mubr.bf16.gmra.mrb[0].mxu0 %v3698
        %v3829 = vpop.f32.mrb[0].mxu0
        %v3830 = vadd.f32 0.0, %v3829
        %v3831 = vpop.f32.mrb[0].mxu0
        %v3832 = vpop.f32.mrb[0].mxu0
        %v3833 = vadd.f32 0.0, %v3832
        %v3834 = vpop.f32.mrb[0].mxu0
        %3835 = vmatprep.mubr.bf16.mxu0 0
        %3836 = vmatmul.mubr.bf16.gmra.mrb[0].mxu0 %v3701
        %v3837 = vpop.f32.mrb[0].mxu0
        %v3838 = vadd.f32 0.0, %v3837
        %v3839 = vpop.f32.mrb[0].mxu0
        %v3840 = vpop.f32.mrb[0].mxu0
        %v3841 = vadd.f32 0.0, %v3840
        %v3842 = vpop.f32.mrb[0].mxu0
        %3843 = vmatprep.mubr.bf16.mxu0 0
        %3844 = vmatmul.mubr.bf16.gmra.mrb[0].mxu0 %v3704
        %v3845 = vpop.f32.mrb[0].mxu0
        %v3846 = vadd.f32 0.0, %v3845
        %v3847 = vpop.f32.mrb[0].mxu0
        %v3848 = vpop.f32.mrb[0].mxu0
        %v3849 = vadd.f32 0.0, %v3848
        %v3850 = vpop.f32.mrb[0].mxu0
        %3851 = vmatprep.mubr.bf16.mxu0 0
        %3852 = vmatmul.mubr.bf16.gmra.mrb[0].mxu0 %v3707
        %v3853 = vpop.f32.mrb[0].mxu0
        %v3854 = vadd.f32 0.0, %v3853
        %v3855 = vpop.f32.mrb[0].mxu0
        %v3856 = vpop.f32.mrb[0].mxu0
        %v3857 = vadd.f32 0.0, %v3856
        %v3858 = vpop.f32.mrb[0].mxu0
        %3859 = vmatprep.mubr.bf16.mxu0 0
        %3860 = vmatmul.mubr.bf16.gmra.mrb[0].mxu0 %v3710
        %v3861 = vpop.f32.mrb[0].mxu0
        %v3862 = vadd.f32 0.0, %v3861
        %v3863 = vpop.f32.mrb[0].mxu0
        %v3864 = vpop.f32.mrb[0].mxu0
        %v3865 = vadd.f32 0.0, %v3864
        %v3866 = vpop.f32.mrb[0].mxu0
        %3867 = vmatprep.mubr.bf16.mxu0 0
        %3868 = vmatmul.mubr.bf16.gmra.mrb[0].mxu0 %v3713
        %v3869 = vpop.f32.mrb[0].mxu0
        %v3870 = vadd.f32 0.0, %v3869
        %v3871 = vpop.f32.mrb[0].mxu0
        %v3872 = vpop.f32.mrb[0].mxu0
        %v3873 = vadd.f32 0.0, %v3872
        %v3874 = vpop.f32.mrb[0].mxu0
        %3875 = vdwg.mxu0
        %v3876 = vld [vmem:[%s2] sm:$0x1]
        %v3878 = vlaneseq
        %v3879 = vshrl.u32 %v3878, 7
        %v3880 = vsub.s32 0, %v3879
        %v3881 = vrot.slane %v3876, %v3880
        %v3883 = vmul.f32 %v3750, %v3881
        %v3884 = vmul.f32 %v3753, %v3881
        %v3885 = vmul.f32 %v3758, %v3881
        %v3886 = vmul.f32 %v3761, %v3881
        %v3887 = vmul.f32 %v3766, %v3881
        %v3888 = vmul.f32 %v3769, %v3881
        %v3889 = vmul.f32 %v3774, %v3881
        %v3890 = vmul.f32 %v3777, %v3881
        %v3891 = vmul.f32 %v3782, %v3881
        %v3892 = vmul.f32 %v3785, %v3881
        %v3893 = vmul.f32 %v3790, %v3881
        %v3894 = vmul.f32 %v3793, %v3881
        %v3895 = vmul.f32 %v3798, %v3881
        %v3896 = vmul.f32 %v3801, %v3881
        %v3897 = vmul.f32 %v3806, %v3881
        %v3898 = vmul.f32 %v3809, %v3881
        %v3899 = vmul.f32 %v3814, %v3881
        %v3900 = vmul.f32 %v3817, %v3881
        %v3901 = vmul.f32 %v3822, %v3881
        %v3902 = vmul.f32 %v3825, %v3881
        %v3903 = vmul.f32 %v3830, %v3881
        %v3904 = vmul.f32 %v3833, %v3881
        %v3905 = vmul.f32 %v3838, %v3881
        %v3906 = vmul.f32 %v3841, %v3881
        %v3907 = vmul.f32 %v3846, %v3881
        %v3908 = vmul.f32 %v3849, %v3881
        %v3909 = vmul.f32 %v3854, %v3881
        %v3910 = vmul.f32 %v3857, %v3881
        %v3911 = vmul.f32 %v3862, %v3881
        %v3912 = vmul.f32 %v3865, %v3881
        %v3913 = vmul.f32 %v3870, %v3881
        %v3914 = vmul.f32 %v3873, %v3881
        %v3915 = vld [vmem:[%s3] sm:$0x1]
        %v3917 = vlaneseq
        %v3918 = vshrl.u32 %v3917, 7
        %v3919 = vsub.s32 0, %v3918
        %v3920 = vrot.slane %v3915, %v3919
        %v3922 = vadd.f32 %v3883, %v3920
        %v3923 = vadd.f32 %v3884, %v3920
        %v3924 = vadd.f32 %v3885, %v3920
        %v3925 = vadd.f32 %v3886, %v3920
        %v3926 = vadd.f32 %v3887, %v3920
        %v3927 = vadd.f32 %v3888, %v3920
        %v3928 = vadd.f32 %v3889, %v3920
        %v3929 = vadd.f32 %v3890, %v3920
        %v3930 = vadd.f32 %v3891, %v3920
        %v3931 = vadd.f32 %v3892, %v3920
        %v3932 = vadd.f32 %v3893, %v3920
        %v3933 = vadd.f32 %v3894, %v3920
        %v3934 = vadd.f32 %v3895, %v3920
        %v3935 = vadd.f32 %v3896, %v3920
        %v3936 = vadd.f32 %v3897, %v3920
        %v3937 = vadd.f32 %v3898, %v3920
        %v3938 = vadd.f32 %v3899, %v3920
        %v3939 = vadd.f32 %v3900, %v3920
        %v3940 = vadd.f32 %v3901, %v3920
        %v3941 = vadd.f32 %v3902, %v3920
        %v3942 = vadd.f32 %v3903, %v3920
        %v3943 = vadd.f32 %v3904, %v3920
        %v3944 = vadd.f32 %v3905, %v3920
        %v3945 = vadd.f32 %v3906, %v3920
        %v3946 = vadd.f32 %v3907, %v3920
        %v3947 = vadd.f32 %v3908, %v3920
        %v3948 = vadd.f32 %v3909, %v3920
        %v3949 = vadd.f32 %v3910, %v3920
        %v3950 = vadd.f32 %v3911, %v3920
        %v3951 = vadd.f32 %v3912, %v3920
        %v3952 = vadd.f32 %v3913, %v3920
        %v3953 = vadd.f32 %v3914, %v3920
        %v3954 = vmax.f32 %v3922, 0.0
        %v3955 = vmax.f32 %v3923, 0.0
        %v3956 = vmax.f32 %v3924, 0.0
        %v3957 = vmax.f32 %v3925, 0.0
        %v3958 = vmax.f32 %v3926, 0.0
        %v3959 = vmax.f32 %v3927, 0.0
        %v3960 = vmax.f32 %v3928, 0.0
        %v3961 = vmax.f32 %v3929, 0.0
        %v3962 = vmax.f32 %v3930, 0.0
        %v3963 = vmax.f32 %v3931, 0.0
        %v3964 = vmax.f32 %v3932, 0.0
        %v3965 = vmax.f32 %v3933, 0.0
        %v3966 = vmax.f32 %v3934, 0.0
        %v3967 = vmax.f32 %v3935, 0.0
        %v3968 = vmax.f32 %v3936, 0.0
        %v3969 = vmax.f32 %v3937, 0.0
        %v3970 = vmax.f32 %v3938, 0.0
        %v3971 = vmax.f32 %v3939, 0.0
        %v3972 = vmax.f32 %v3940, 0.0
        %v3973 = vmax.f32 %v3941, 0.0
        %v3974 = vmax.f32 %v3942, 0.0
        %v3975 = vmax.f32 %v3943, 0.0
        %v3976 = vmax.f32 %v3944, 0.0
        %v3977 = vmax.f32 %v3945, 0.0
        %v3978 = vmax.f32 %v3946, 0.0
        %v3979 = vmax.f32 %v3947, 0.0
        %v3980 = vmax.f32 %v3948, 0.0
        %v3981 = vmax.f32 %v3949, 0.0
        %v3982 = vmax.f32 %v3950, 0.0
        %v3983 = vmax.f32 %v3951, 0.0
        %v3984 = vmax.f32 %v3952, 0.0
        %v3985 = vmax.f32 %v3953, 0.0
        %v3986 = vpack.c.bf16 %v3955, %v3954
        %v3987 = vpack.c.bf16 %v3957, %v3956
        %v3988 = vpack.c.bf16 %v3959, %v3958
        %v3989 = vpack.c.bf16 %v3961, %v3960
        %v3990 = vpack.c.bf16 %v3963, %v3962
        %v3991 = vpack.c.bf16 %v3965, %v3964
        %v3992 = vpack.c.bf16 %v3967, %v3966
        %v3993 = vpack.c.bf16 %v3969, %v3968
        %v3994 = vpack.c.bf16 %v3971, %v3970
        %v3995 = vpack.c.bf16 %v3973, %v3972
        %v3996 = vpack.c.bf16 %v3975, %v3974
        %v3997 = vpack.c.bf16 %v3977, %v3976
        %v3998 = vpack.c.bf16 %v3979, %v3978
        %v3999 = vpack.c.bf16 %v3981, %v3980
        %v4000 = vpack.c.bf16 %v3983, %v3982
        %v4001 = vpack.c.bf16 %v3985, %v3984
        %v4002 = vld [vmem:[%s4] sm:$0xf]
        %v4003 = vld [vmem:[%s4 + $0x4] sm:$0xf]
        %v4004 = vld [vmem:[%s4 + $0x8] sm:$0xf]
        %v4005 = vld [vmem:[%s4 + $0xc] sm:$0xf]
        %v4006 = vld [vmem:[%s4 + $0x10] sm:$0xf]
        %v4007 = vld [vmem:[%s4 + $0x14] sm:$0xf]
        %v4008 = vld [vmem:[%s4 + $0x18] sm:$0xf]
        %v4009 = vld [vmem:[%s4 + $0x1c] sm:$0xf]
        %v4018 = vunpack.c.l.b16 %v4002
        %v4019 = vunpack.c.l.b16 %v4003
        %v4020 = vunpack.c.l.b16 %v4004
        %v4021 = vunpack.c.l.b16 %v4005
        %v4022 = vunpack.c.l.b16 %v4006
        %v4023 = vunpack.c.l.b16 %v4007
        %v4024 = vunpack.c.l.b16 %v4008
        %v4025 = vunpack.c.l.b16 %v4009
        %v4026 = vpack.c.b16 %v4019, %v4018
        %v4027 = vpack.c.b16 %v4021, %v4020
        %v4028 = vpack.c.b16 %v4023, %v4022
        %v4029 = vpack.c.b16 %v4025, %v4024
        %vm4034 = vcmask 523264
        %v4036 = vsel %vm4034, %v3986, 0
        %v4039 = vsel %vm4034, %v3987, 0
        %v4042 = vsel %vm4034, %v3988, 0
        %v4045 = vsel %vm4034, %v3989, 0
        %v4048 = vsel %vm4034, %v3990, 0
        %v4051 = vsel %vm4034, %v3991, 0
        %v4054 = vsel %vm4034, %v3992, 0
        %v4057 = vsel %vm4034, %v3993, 0
        %v4060 = vsel %vm4034, %v3994, 0
        %v4063 = vsel %vm4034, %v3995, 0
        %v4066 = vsel %vm4034, %v3996, 0
        %v4069 = vsel %vm4034, %v3997, 0
        %v4072 = vsel %vm4034, %v3998, 0
        %v4075 = vsel %vm4034, %v3999, 0
        %v4078 = vsel %vm4034, %v4000, 0
        %v4081 = vsel %vm4034, %v4001, 0
        %4083 = vmatprep.subr.bf16.mxu0 0
        %4084 = vmatpush1.bf16.msra.mxu0 %v4026
        %4085 = vmatprep.subr.bf16.mxu0 0
        %4086 = vmatpush1.bf16.msra.mxu0 %v4027
        %4087 = vmatprep.subr.bf16.mxu0 0
        %4088 = vmatpush1.bf16.msra.mxu0 %v4028
        %4089 = vmatprep.subr.bf16.mxu0 0
        %4090 = vmatpush1.bf16.msra.mxu0 %v4029
        %4091 = vmatprep.subr.bf16.mxu0 0
        %4092 = vmatpush1.bf16.msra.mxu0 0
        %4093 = vmatprep.subr.bf16.mxu0 0
        %4094 = vmatpush1.bf16.msra.mxu0 0
        %4095 = vmatprep.subr.bf16.mxu0 0
        %4096 = vmatpush1.bf16.msra.mxu0 0
        %4097 = vmatprep.subr.bf16.mxu0 0
        %4098 = vmatpush1.bf16.msra.mxu0 0
        %4099 = vmatprep.subr.bf16.mxu0 0
        %4100 = vmatpush1.bf16.msra.mxu0 0
        %4101 = vmatprep.subr.bf16.mxu0 0
        %4102 = vmatpush1.bf16.msra.mxu0 0
        %4103 = vmatprep.subr.bf16.mxu0 0
        %4104 = vmatpush1.bf16.msra.mxu0 0
        %4105 = vmatprep.subr.bf16.mxu0 0
        %4106 = vmatpush1.bf16.msra.mxu0 0
        %4107 = vmatprep.subr.bf16.mxu0 0
        %4108 = vmatpush1.bf16.msra.mxu0 0
        %4109 = vmatprep.subr.bf16.mxu0 0
        %4110 = vmatpush1.bf16.msra.mxu0 0
        %4111 = vmatprep.subr.bf16.mxu0 0
        %4112 = vmatpush1.bf16.msra.mxu0 0
        %4113 = vmatprep.subr.bf16.mxu0 0
        %4114 = vmatpush1.bf16.msra.mxu0 0
        %4115 = vmatprep.mubr.bf16.mxu0 0
        %4116 = vmatmul.mubr.bf16.gmra.mrb[0].mxu0 %v4036
        %v4117 = vpop.f32.mrb[0].mxu0
        %v4118 = vadd.f32 0.0, %v4117
        %v4119 = vpop.f32.mrb[0].mxu0
        %v4120 = vpop.f32.mrb[0].mxu0
        %v4121 = vadd.f32 0.0, %v4120
        %v4122 = vpop.f32.mrb[0].mxu0
        %4123 = vmatprep.mubr.bf16.mxu0 0
        %4124 = vmatmul.mubr.bf16.gmra.mrb[0].mxu0 %v4039
        %v4125 = vpop.f32.mrb[0].mxu0
        %v4126 = vadd.f32 0.0, %v4125
        %v4127 = vpop.f32.mrb[0].mxu0
        %v4128 = vpop.f32.mrb[0].mxu0
        %v4129 = vadd.f32 0.0, %v4128
        %v4130 = vpop.f32.mrb[0].mxu0
        %4131 = vmatprep.mubr.bf16.mxu0 0
        %4132 = vmatmul.mubr.bf16.gmra.mrb[0].mxu0 %v4042
        %v4133 = vpop.f32.mrb[0].mxu0
        %v4134 = vadd.f32 0.0, %v4133
        %v4135 = vpop.f32.mrb[0].mxu0
        %v4136 = vpop.f32.mrb[0].mxu0
        %v4137 = vadd.f32 0.0, %v4136
        %v4138 = vpop.f32.mrb[0].mxu0
        %4139 = vmatprep.mubr.bf16.mxu0 0
        %4140 = vmatmul.mubr.bf16.gmra.mrb[0].mxu0 %v4045
        %v4141 = vpop.f32.mrb[0].mxu0
        %v4142 = vadd.f32 0.0, %v4141
        %v4143 = vpop.f32.mrb[0].mxu0
        %v4144 = vpop.f32.mrb[0].mxu0
        %v4145 = vadd.f32 0.0, %v4144
        %v4146 = vpop.f32.mrb[0].mxu0
        %4147 = vmatprep.mubr.bf16.mxu0 0
        %4148 = vmatmul.mubr.bf16.gmra.mrb[0].mxu0 %v4048
        %v4149 = vpop.f32.mrb[0].mxu0
        %v4150 = vadd.f32 0.0, %v4149
        %v4151 = vpop.f32.mrb[0].mxu0
        %v4152 = vpop.f32.mrb[0].mxu0
        %v4153 = vadd.f32 0.0, %v4152
        %v4154 = vpop.f32.mrb[0].mxu0
        %4155 = vmatprep.mubr.bf16.mxu0 0
        %4156 = vmatmul.mubr.bf16.gmra.mrb[0].mxu0 %v4051
        %v4157 = vpop.f32.mrb[0].mxu0
        %v4158 = vadd.f32 0.0, %v4157
        %v4159 = vpop.f32.mrb[0].mxu0
        %v4160 = vpop.f32.mrb[0].mxu0
        %v4161 = vadd.f32 0.0, %v4160
        %v4162 = vpop.f32.mrb[0].mxu0
        %4163 = vmatprep.mubr.bf16.mxu0 0
        %4164 = vmatmul.mubr.bf16.gmra.mrb[0].mxu0 %v4054
        %v4165 = vpop.f32.mrb[0].mxu0
        %v4166 = vadd.f32 0.0, %v4165
        %v4167 = vpop.f32.mrb[0].mxu0
        %v4168 = vpop.f32.mrb[0].mxu0
        %v4169 = vadd.f32 0.0, %v4168
        %v4170 = vpop.f32.mrb[0].mxu0
        %4171 = vmatprep.mubr.bf16.mxu0 0
        %4172 = vmatmul.mubr.bf16.gmra.mrb[0].mxu0 %v4057
        %v4173 = vpop.f32.mrb[0].mxu0
        %v4174 = vadd.f32 0.0, %v4173
        %v4175 = vpop.f32.mrb[0].mxu0
        %v4176 = vpop.f32.mrb[0].mxu0
        %v4177 = vadd.f32 0.0, %v4176
        %v4178 = vpop.f32.mrb[0].mxu0
        %4179 = vmatprep.mubr.bf16.mxu0 0
        %4180 = vmatmul.mubr.bf16.gmra.mrb[0].mxu0 %v4060
        %v4181 = vpop.f32.mrb[0].mxu0
        %v4182 = vadd.f32 0.0, %v4181
        %v4183 = vpop.f32.mrb[0].mxu0
        %v4184 = vpop.f32.mrb[0].mxu0
        %v4185 = vadd.f32 0.0, %v4184
        %v4186 = vpop.f32.mrb[0].mxu0
        %4187 = vmatprep.mubr.bf16.mxu0 0
        %4188 = vmatmul.mubr.bf16.gmra.mrb[0].mxu0 %v4063
        %v4189 = vpop.f32.mrb[0].mxu0
        %v4190 = vadd.f32 0.0, %v4189
        %v4191 = vpop.f32.mrb[0].mxu0
        %v4192 = vpop.f32.mrb[0].mxu0
        %v4193 = vadd.f32 0.0, %v4192
        %v4194 = vpop.f32.mrb[0].mxu0
        %4195 = vmatprep.mubr.bf16.mxu0 0
        %4196 = vmatmul.mubr.bf16.gmra.mrb[0].mxu0 %v4066
        %v4197 = vpop.f32.mrb[0].mxu0
        %v4198 = vadd.f32 0.0, %v4197
        %v4199 = vpop.f32.mrb[0].mxu0
        %v4200 = vpop.f32.mrb[0].mxu0
        %v4201 = vadd.f32 0.0, %v4200
        %v4202 = vpop.f32.mrb[0].mxu0
        %4203 = vmatprep.mubr.bf16.mxu0 0
        %4204 = vmatmul.mubr.bf16.gmra.mrb[0].mxu0 %v4069
        %v4205 = vpop.f32.mrb[0].mxu0
        %v4206 = vadd.f32 0.0, %v4205
        %v4207 = vpop.f32.mrb[0].mxu0
        %v4208 = vpop.f32.mrb[0].mxu0
        %v4209 = vadd.f32 0.0, %v4208
        %v4210 = vpop.f32.mrb[0].mxu0
        %4211 = vmatprep.mubr.bf16.mxu0 0
        %4212 = vmatmul.mubr.bf16.gmra.mrb[0].mxu0 %v4072
        %v4213 = vpop.f32.mrb[0].mxu0
        %v4214 = vadd.f32 0.0, %v4213
        %v4215 = vpop.f32.mrb[0].mxu0
        %v4216 = vpop.f32.mrb[0].mxu0
        %v4217 = vadd.f32 0.0, %v4216
        %v4218 = vpop.f32.mrb[0].mxu0
        %4219 = vmatprep.mubr.bf16.mxu0 0
        %4220 = vmatmul.mubr.bf16.gmra.mrb[0].mxu0 %v4075
        %v4221 = vpop.f32.mrb[0].mxu0
        %v4222 = vadd.f32 0.0, %v4221
        %v4223 = vpop.f32.mrb[0].mxu0
        %v4224 = vpop.f32.mrb[0].mxu0
        %v4225 = vadd.f32 0.0, %v4224
        %v4226 = vpop.f32.mrb[0].mxu0
        %4227 = vmatprep.mubr.bf16.mxu0 0
        %4228 = vmatmul.mubr.bf16.gmra.mrb[0].mxu0 %v4078
        %v4229 = vpop.f32.mrb[0].mxu0
        %v4230 = vadd.f32 0.0, %v4229
        %v4231 = vpop.f32.mrb[0].mxu0
        %v4232 = vpop.f32.mrb[0].mxu0
        %v4233 = vadd.f32 0.0, %v4232
        %v4234 = vpop.f32.mrb[0].mxu0
        %4235 = vmatprep.mubr.bf16.mxu0 0
        %4236 = vmatmul.mubr.bf16.gmra.mrb[0].mxu0 %v4081
        %v4237 = vpop.f32.mrb[0].mxu0
        %v4238 = vadd.f32 0.0, %v4237
        %v4239 = vpop.f32.mrb[0].mxu0
        %v4240 = vpop.f32.mrb[0].mxu0
        %v4241 = vadd.f32 0.0, %v4240
        %v4242 = vpop.f32.mrb[0].mxu0
        %4243 = vdwg.mxu0
        %v4244 = vadd.f32 %v244, %v4118
        %v4245 = vadd.f32 %v245, %v4121
        %v4246 = vadd.f32 %v246, %v4126
        %v4247 = vadd.f32 %v247, %v4129
        %v4248 = vadd.f32 %v248, %v4134
        %v4249 = vadd.f32 %v249, %v4137
        %v4250 = vadd.f32 %v250, %v4142
        %v4251 = vadd.f32 %v251, %v4145
        %v4252 = vadd.f32 %v252, %v4150
        %v4253 = vadd.f32 %v253, %v4153
        %v4254 = vadd.f32 %v254, %v4158
        %v4255 = vadd.f32 %v255, %v4161
        %v4256 = vadd.f32 %v256, %v4166
        %v4257 = vadd.f32 %v257, %v4169
        %v4258 = vadd.f32 %v258, %v4174
        %v4259 = vadd.f32 %v259, %v4177
        %v4260 = vadd.f32 %v260, %v4182
        %v4261 = vadd.f32 %v261, %v4185
        %v4262 = vadd.f32 %v262, %v4190
        %v4263 = vadd.f32 %v263, %v4193
        %v4264 = vadd.f32 %v264, %v4198
        %v4265 = vadd.f32 %v265, %v4201
        %v4266 = vadd.f32 %v266, %v4206
        %v4267 = vadd.f32 %v267, %v4209
        %v4268 = vadd.f32 %v268, %v4214
        %v4269 = vadd.f32 %v269, %v4217
        %v4270 = vadd.f32 %v270, %v4222
        %v4271 = vadd.f32 %v271, %v4225
        %v4272 = vadd.f32 %v272, %v4230
        %v4273 = vadd.f32 %v273, %v4233
        %v4274 = vadd.f32 %v274, %v4238
        %v4275 = vadd.f32 %v275, %v4241
        %vm4276 = vcmask 261120
        %4277 = vst.msk [vmem:[%s242] sm:$0xff] %vm4276, %v4244
        %4278 = vst.msk [vmem:[%s242 + $0x8] sm:$0xff] %vm4276, %v4245
        %4279 = vst.msk [vmem:[%s242 + $0x10] sm:$0xff] %vm4276, %v4246
        %4280 = vst.msk [vmem:[%s242 + $0x18] sm:$0xff] %vm4276, %v4247
        %4281 = vst.msk [vmem:[%s242 + $0x20] sm:$0xff] %vm4276, %v4248
        %4282 = vst.msk [vmem:[%s242 + $0x28] sm:$0xff] %vm4276, %v4249
        %4283 = vst.msk [vmem:[%s242 + $0x30] sm:$0xff] %vm4276, %v4250
        %4284 = vst.msk [vmem:[%s242 + $0x38] sm:$0xff] %vm4276, %v4251
        %4285 = vst.msk [vmem:[%s242 + $0x40] sm:$0xff] %vm4276, %v4252
        %4286 = vst.msk [vmem:[%s242 + $0x48] sm:$0xff] %vm4276, %v4253
        %4287 = vst.msk [vmem:[%s242 + $0x50] sm:$0xff] %vm4276, %v4254
        %4288 = vst.msk [vmem:[%s242 + $0x58] sm:$0xff] %vm4276, %v4255
        %4289 = vst.msk [vmem:[%s242 + $0x60] sm:$0xff] %vm4276, %v4256
        %4290 = vst.msk [vmem:[%s242 + $0x68] sm:$0xff] %vm4276, %v4257
        %4291 = vst.msk [vmem:[%s242 + $0x70] sm:$0xff] %vm4276, %v4258
        %4292 = vst.msk [vmem:[%s242 + $0x78] sm:$0xff] %vm4276, %v4259
        %4293 = vst.msk [vmem:[%s242 + $0x80] sm:$0xff] %vm4276, %v4260
        %4294 = vst.msk [vmem:[%s242 + $0x88] sm:$0xff] %vm4276, %v4261
        %4295 = vst.msk [vmem:[%s242 + $0x90] sm:$0xff] %vm4276, %v4262
        %4296 = vst.msk [vmem:[%s242 + $0x98] sm:$0xff] %vm4276, %v4263
        %4297 = vst.msk [vmem:[%s242 + $0xa0] sm:$0xff] %vm4276, %v4264
        %4298 = vst.msk [vmem:[%s242 + $0xa8] sm:$0xff] %vm4276, %v4265
        %4299 = vst.msk [vmem:[%s242 + $0xb0] sm:$0xff] %vm4276, %v4266
        %4300 = vst.msk [vmem:[%s242 + $0xb8] sm:$0xff] %vm4276, %v4267
        %4301 = vst.msk [vmem:[%s242 + $0xc0] sm:$0xff] %vm4276, %v4268
        %4302 = vst.msk [vmem:[%s242 + $0xc8] sm:$0xff] %vm4276, %v4269
        %4303 = vst.msk [vmem:[%s242 + $0xd0] sm:$0xff] %vm4276, %v4270
        %4304 = vst.msk [vmem:[%s242 + $0xd8] sm:$0xff] %vm4276, %v4271
        %4305 = vst.msk [vmem:[%s242 + $0xe0] sm:$0xff] %vm4276, %v4272
        %4306 = vst.msk [vmem:[%s242 + $0xe8] sm:$0xff] %vm4276, %v4273
        %4307 = vst.msk [vmem:[%s242 + $0xf0] sm:$0xff] %vm4276, %v4274
        %4308 = vst.msk [vmem:[%s242 + $0xf8] sm:$0xff] %vm4276, %v4275
        %s4309 = sand.u32 %s140, 1
        %s4310 = scalar_lea.sflag [#allocation6], %s4309
        %s4311 = sand.u32 %s140, 1
        %s4312 = smul.addr %s4311, 256
        %s4313 = scalar_lea.vmem [#allocation7], %s4312
        // Predicated region
        $region45: #{tpu_custom_call.1} parent=39 // pred_check
          %p4314 = pneg %p150
        $region46: #{tpu_custom_call.1} parent=39 // pred_check_branch
          %4316 = sbr.rel (%p4314) target = $region48
        $region47: #{tpu_custom_call.1} parent=39 // pred_region
          %s4318 = ssub.s32 4096, 4096
          %4319 = vsyncadd %s4310, %s4318
          %s4320 = smul.addr %s22, 32
          %s4321 = smul.addr %s4320, 128
          %s4322 = scalar_lea.hbm %s5, %s4321
          %s4323 = sshll.u32 %s4313, 4
          %s4324 = int_to_ptr.vmem [resolvable:$true] %s4323
          %4329 = dma.vmem_to_hbm [thread:$0]  %s4324, 4096, %s4322, %s4310, 128, 128, 8
        $region48: #{tpu_custom_call.1} parent=39 // pred_fallthru
          _
      $region40: #{tpu_custom_call.1} parent=5 // pred_fallthru
        _
      %p4330 = scmp.le.s32.totalorder 2, %s17
      // Predicated region
      $region49: #{tpu_custom_call.1} parent=5 // pred_check
        %p4331 = pneg %p4330
      $region50: #{tpu_custom_call.1} parent=5 // pred_check_branch
        %4333 = sbr.rel (%p4331) target = $region52
      $region51: #{tpu_custom_call.1} parent=5 // pred_region
        %s4334 = ssub.s32 %s17, 2
        // Predicated region
        $region53: #{tpu_custom_call.1} parent=51 // pred_check
          %p4335 = pneg %p156
        $region54: #{tpu_custom_call.1} parent=51 // pred_check_branch
          %4337 = sbr.rel (%p4335) target = $region56
        $region55: #{tpu_custom_call.1} parent=51 // pred_region
          %s4338 = sand.u32 %s141, 1
          %s4339 = scalar_lea.sflag [#allocation6], %s4338
          %s4340 = sand.u32 %s141, 1
          %s4341 = smul.addr %s4340, 256
          %s4342 = scalar_lea.vmem [#allocation7], %s4341
          %4343 = dma.done %s4339, 4096
        $region56: #{tpu_custom_call.1} parent=51 // pred_fallthru
          _
      $region52: #{tpu_custom_call.1} parent=5 // pred_fallthru
        _
    $region6: #{tpu_custom_call.1} parent=1 // loop_footer
      %s21 = sadd.s32 1, %s17
    $region7: #{tpu_custom_call.1} parent=1 // loop_footer_branch
      %16 = sbr.rel target = $region3
    $region8: #{tpu_custom_call.1} parent=1 // loop_exit
      _
    %4344 = vsyncpa [#allocation5], 1
    %s4345 = scalar_lea.sflag [#allocation5], 1
    %4346 = vsyncpa %s4345, 1
    %4347 = vsyncpa [#allocation6], 1
    %s4348 = scalar_lea.sflag [#allocation6], 1
    %4349 = vsyncpa %s4348, 1

</llo_original>
